<compile_context>
chip_gen: v7x
topology: tpu7x:2x2x1
jax: 0.10.0
libtpu: 0.0.40
codegen_flags: <defaults>
</compile_context>

<pallas_src>
import numpy as np
import jax
import jax.numpy as jnp
from jax.experimental import pallas as pl
from jax.experimental.pallas import tpu as pltpu

LANE = 128      # TPU lane width  : last dim of every tile
SUBLANE = 8     # sublane width   : second-to-last dim


def _round_up(x, m):
    return ((x + m - 1) // m) * m


# ----------------------------------------------------------------------------
# Fused kernel:  num_hidden x (Linear -> GraphNorm -> ReLU)  +  final Linear
# ----------------------------------------------------------------------------
def make_fused_mlp_kernel(num_hidden, matmul_dtype=jnp.float32):
    """Builds the fused per-block kernel (one block = Gb graphs)."""

    def kernel(counts_ref, x_ref, *refs):
        o_ref = refs[-1]
        p = refs[:-1]                                # flat parameter refs

        Gb, Nmax, Din = x_ref.shape
        counts = counts_ref[...]                     # (Gb, 1) int32
        # Guard empty (padded) graphs so statistics never divide by zero.
        n_f = jnp.maximum(counts, 1).astype(jnp.float32)          # (Gb, 1)
        inv_n = (1.0 / n_f)[:, :, None]                           # (Gb, 1, 1)
        node = jax.lax.broadcasted_iota(jnp.int32, (Gb, Nmax, 1), 1)
        mask = (node < counts[:, :, None]).astype(jnp.float32)    # (Gb,Nmax,1)

        # One lane-dense 2-D activation slab for the MXU (M = Gb * Nmax).
        h = x_ref[...].reshape(Gb * Nmax, Din)

        for l in range(num_hidden):
            base = 5 * l
            W = p[base][...]            # already padded + cast to matmul_dtype
            b = p[base + 1][...]
            gamma = p[base + 2][...]
            beta = p[base + 3][...]
            mscale = p[base + 4][...]
            Hd = W.shape[1]

            z = jnp.dot(h.astype(matmul_dtype), W,
                        preferred_element_type=jnp.float32) + b    # (R, Hd) f32
            z3 = z.reshape(Gb, Nmax, Hd)

            # GraphNorm ('gn'): per-graph masked mean / var over valid nodes.
            mean = jnp.sum(z3 * mask, axis=1, keepdims=True) * inv_n
            sub = z3 - mean * mscale
            var = jnp.sum(sub * sub * mask, axis=1, keepdims=True) * inv_n
            # Fold gamma into the (Gb,1,Hd) scale -> one fewer full-size VPU mul.
            scale = gamma * jax.lax.rsqrt(var + 1e-6)              # EUP rsqrt
            out = jnp.maximum(sub * scale + beta, 0.0)             # ReLU
            # INVARIANT: padding rows (node >= counts[g]) are NOT re-zeroed.
            # Every op is row-independent, padding rows are excluded from all
            # masked statistics, and they are stripped by the caller after the
            # kernel.  Do not add cross-row ops without re-masking.
            h = out.reshape(Gb * Nmax, Hd)

        Wf = p[5 * num_hidden][...]
        bf = p[5 * num_hidden + 1][...]
        y = jnp.dot(h.astype(matmul_dtype), Wf,
                    preferred_element_type=jnp.float32) + bf
        o_ref[...] = y.astype(o_ref.dtype)           # 2-D lane-dense store

    return kernel


# ----------------------------------------------------------------------------
# Wrapper
# ----------------------------------------------------------------------------
def mlp_forward(x_pad, counts, params, num_layers, *, graphs_per_block=None,
                matmul_dtype=jnp.float32, out_dtype=jnp.float32,
                interpret=False):
    """Fused MLP forward over the padded [G, Nmax, D] node tensor.

    matmul_dtype=jnp.bfloat16 is the production setting on v6e/v7x (GraphNorm
    statistics stay in f32); f32 is the default so the tight correctness
    check against the f32 reference passes.
    """
    G, Nmax0, Din0 = x_pad.shape
    num_hidden = num_layers - 1
    Dout0 = params['linears'][-1][0].shape[1]

    # ---- lane/sublane-dense padded dims ------------------------------------
    Din = _round_up(Din0, LANE)
    Dout = _round_up(Dout0, LANE)
    Nmax = _round_up(Nmax0, SUBLANE)
    hidden_dims = [_round_up(params['linears'][i][0].shape[1], LANE)
                   for i in range(num_hidden)]
    all_dims = [Din] + hidden_dims + [Dout]
    maxH = max(all_dims)

    if (Nmax, Din) != (Nmax0, Din0):
        x_pad = jnp.pad(x_pad, ((0, 0), (0, Nmax - Nmax0), (0, Din - Din0)))

    # ---- pad + pre-cast parameters ONCE in the wrapper ----------------------
    def pad_w(W, dip, dop):
        W = jnp.pad(W, ((0, dip - W.shape[0]), (0, dop - W.shape[1])))
        return W.astype(matmul_dtype)

    def pad_row(v, dop, fill=0.0):
        v = v.reshape(1, -1)
        return jnp.pad(v, ((0, 0), (0, dop - v.shape[1])),
                       constant_values=fill).astype(jnp.float32)

    param_arrays = []
    din_cur = Din
    for li in range(num_hidden):
        W, b = params['linears'][li]
        gamma, beta, mscale = params['norms'][li]
        dop = hidden_dims[li]
        param_arrays += [pad_w(W, din_cur, dop), pad_row(b, dop),
                         pad_row(gamma, dop), pad_row(beta, dop),
                         pad_row(mscale, dop, fill=1.0)]
        din_cur = dop
    Wf, bf = params['linears'][-1]
    param_arrays += [pad_w(Wf, din_cur, Dout), pad_row(bf, Dout)]

    x_itemsize = jnp.dtype(x_pad.dtype).itemsize
    out_itemsize = jnp.dtype(out_dtype).itemsize
    param_bytes = int(sum(int(np.prod(a.shape)) * jnp.dtype(a.dtype).itemsize
                          for a in param_arrays))

    # ---- VMEM budget (conservative: v7x has 64 MiB per TensorCore) ----------
    try:
        vmem_cap = int(pltpu.get_tpu_info().vmem_capacity_bytes)
    except Exception:
        vmem_cap = 64 << 20
    per_graph = Nmax * (2 * Din * x_itemsize            # double-buffered input
                        + 2 * Dout * out_itemsize       # double-buffered output
                        + 6 * maxH * 4)                 # live f32 activation slabs

    # ---- choose graphs-per-block Gb -----------------------------------------
    if graphs_per_block is None:
        budget = int(min(vmem_cap, 64 << 20) * 0.5) - 2 * param_bytes
        Gb = max(budget // per_graph, SUBLANE)
        Gb = max(Gb, pl.cdiv(256, Nmax))          # MXU-worthy M = Gb * Nmax
        Gb = min(int(Gb), 512, G)
        if Gb >= G and G >= 2 * SUBLANE:
            # >= 2 grid steps so the 'parallel' axis shards across both
            # TensorCores on v7x (free on v5e/v6e).
            Gb = (pl.cdiv(G, 2) // SUBLANE) * SUBLANE
    else:
        Gb = min(int(graphs_per_block), G)

    if Gb < G:
        Gb = max(SUBLANE, (Gb // SUBLANE) * SUBLANE)   # (8,128) rule for counts
        G_pad = pl.cdiv(G, Gb) * Gb
    else:
        G_pad = G

    if G_pad != G:                       # pad with empty graphs (count == 0)
        x_pad = jnp.pad(x_pad, ((0, G_pad - G), (0, 0), (0, 0)))
        counts = jnp.pad(counts, (0, G_pad - G))
    counts2 = counts.reshape(G_pad, 1).astype(jnp.int32)

    # ---- explicit scoped-VMEM limit from the footprint ----------------------
    block_bytes = (2 * Gb * Nmax * Din * x_itemsize
                   + 2 * Gb * Nmax * Dout * out_itemsize
                   + 2 * Gb * 4
                   + 6 * Gb * Nmax * maxH * 4)
    need = 2 * param_bytes + block_bytes
    vmem_limit = int(max(min(int(need * 1.3), int(vmem_cap * 0.9)), 16 << 20))

    kernel = make_fused_mlp_kernel(num_hidden, matmul_dtype=matmul_dtype)

    def build_specs(single_buffer_params):
        in_specs = [
            pl.BlockSpec((Gb, 1), lambda i: (i, 0)),
            pl.BlockSpec((Gb, Nmax, Din), lambda i: (i, 0, 0)),
        ]

        def const_spec(shape):
            zero_map = lambda i, _n=len(shape): (0,) * _n
            if single_buffer_params:
                # constant index_map -> no need to double-buffer the weights
                return pl.BlockSpec(shape, zero_map,
                                    pipeline_mode=pl.Buffered(1))
            return pl.BlockSpec(shape, zero_map)

        in_specs += [const_spec(a.shape) for a in param_arrays]
        out_spec = pl.BlockSpec((Gb * Nmax, Dout), lambda i: (i, 0))
        return in_specs, out_spec

    def call(single_buffer_params):
        in_specs, out_spec = build_specs(single_buffer_params)
        return pl.pallas_call(
            kernel,
            out_shape=jax.ShapeDtypeStruct((G_pad * Nmax, Dout), out_dtype),
            grid=(G_pad // Gb,),
            in_specs=in_specs,
            out_specs=out_spec,
            compiler_params=pltpu.CompilerParams(
                dimension_semantics=("parallel",),
                vmem_limit_bytes=vmem_limit),
            interpret=interpret,
        )(counts2, x_pad, *param_arrays)

    try:
        out = jax.block_until_ready(call(True))
    except Exception:
        # Older jaxlibs may reject pipeline_mode=pl.Buffered(1); fall back to
        # default double-buffered parameter specs (correctness unaffected).
        out = jax.block_until_ready(call(False))

    out = out.reshape(G_pad, Nmax, Dout)
    return out[:G, :Nmax0, :Dout0]       # strip graph / node / feature padding


# ----------------------------------------------------------------------------
# Parameter init (matches the torch module's shapes / GraphNorm defaults)
# ----------------------------------------------------------------------------
def init_mlp_params(key, num_layers, input_dim, hidden_dim, output_dim):
    if num_layers < 1:
        raise ValueError('number of layers should be postive!')

    def init_linear(k, din, dout):
        k1, k2 = jax.random.split(k)
        bound = 1.0 / np.sqrt(din)
        W = jax.random.uniform(k1, (din, dout), jnp.float32, -bound, bound)
        b = jax.random.uniform(k2, (dout,), jnp.float32, -bound, bound)
        return W, b

    linears, norms = [], []
    if num_layers == 1:
        key, k = jax.random.split(key)
        linears.append(init_linear(k, input_dim, output_dim))
    else:
        dims = [input_dim] + [hidden_dim] * (num_layers - 1) + [output_dim]
        for i in range(num_layers):
            key, k = jax.random.split(key)
            linears.append(init_linear(k, dims[i], dims[i + 1]))
        for _ in range(num_layers - 1):
            # GraphNorm params: weight=1, bias=0, mean_scale=1 (as in __init__)
            norms.append((jnp.ones((hidden_dim,), jnp.float32),
                          jnp.zeros((hidden_dim,), jnp.float32),
                          jnp.ones((hidden_dim,), jnp.float32)))
    return {'linears': linears, 'norms': norms}


# ----------------------------------------------------------------------------
# Pure-JAX reference (flat, scatter-add style, mirrors the torch semantics)
# ----------------------------------------------------------------------------
def ref_mlp(x_flat, counts_list, params, num_layers):
    if num_layers == 1:
        W, b = params['linears'][0]
        return x_flat @ W + b
    G = len(counts_list)
    seg = jnp.asarray(np.repeat(np.arange(G), counts_list), jnp.int32)
    cnt = jnp.asarray(counts_list, jnp.float32)[:, None]
    h = x_flat
    for i in range(num_layers - 1):
        W, b = params['linears'][i]
        gamma, beta, mscale = params['norms'][i]
        h = h @ W + b
        mean = jax.ops.segment_sum(h, seg, G) / cnt
        sub = h - mean[seg] * mscale
        var = jax.ops.segment_sum(sub * sub, seg, G) / cnt
        std = jnp.sqrt(var + 1e-6)
        h = jnp.maximum(gamma * sub / std[seg] + beta, 0.0)
    W, b = params['linears'][-1]
    return h @ W + b


# ----------------------------------------------------------------------------
if __name__ == "__main__":
    num_layers, input_dim, hidden_dim, output_dim = 3, 16, 32, 8
    Nmax = 8
    G = 16

    key = jax.random.PRNGKey(0)
    key, kc, kx, kp = jax.random.split(key, 4)
    counts_list = [int(c) for c in
                   np.asarray(jax.random.randint(kc, (G,), 1, Nmax + 1))]
    N_total = int(sum(counts_list))

    x_flat = jax.random.normal(kx, (N_total, input_dim), jnp.float32)
    params = init_mlp_params(kp, num_layers, input_dim, hidden_dim, output_dim)

    # Pad the flat node tensor into the [G, Nmax, D] kernel layout.
    x_pad_np = np.zeros((G, Nmax, input_dim), np.float32)
    off = 0
    for g, c in enumerate(counts_list):
        x_pad_np[g, :c] = np.asarray(x_flat[off:off + c])
        off += c
    x_pad = jnp.asarray(x_pad_np)
    counts = jnp.asarray(counts_list, jnp.int32)

    def unpad(out3):
        return jnp.concatenate(
            [out3[g, :c] for g, c in enumerate(counts_list)], axis=0)

    ref = ref_mlp(x_flat, counts_list, params, num_layers)

    # 1) f32 path (tight check against the f32 reference).
    out_pad = mlp_forward(x_pad, counts, params, num_layers)
    out_pad = jax.block_until_ready(out_pad)
    out_flat = unpad(out_pad)
    np.testing.assert_allclose(np.asarray(out_flat), np.asarray(ref),
                               rtol=1e-4, atol=1e-5)
    assert out_flat.shape == (N_total, output_dim)

    # 2) bf16-matmul production path (GraphNorm stats stay f32) - loose check.
    out_bf = jax.block_until_ready(
        mlp_forward(x_pad, counts, params, num_layers,
                    matmul_dtype=jnp.bfloat16))
    np.testing.assert_allclose(np.asarray(unpad(out_bf)), np.asarray(ref),
                               rtol=1e-1, atol=1e-1)

    # 3) num_layers == 1 (pure linear) path of the module.
    params1 = init_mlp_params(jax.random.PRNGKey(1), 1, input_dim,
                              hidden_dim, output_dim)
    out1 = jax.block_until_ready(mlp_forward(x_pad, counts, params1, 1))
    ref1 = ref_mlp(x_flat, counts_list, params1, 1)
    np.testing.assert_allclose(np.asarray(unpad(out1)), np.asarray(ref1),
                               rtol=1e-4, atol=1e-5)

    print("KERNEL_OK")
</pallas_src>

<mosaic_0001>
module attributes {stable_mosaic.version = 11 : i64} {
  func.func @kernel(%arg0: i32, %arg1: memref<8x1xi32, #tpu.memory_space<vmem>>, %arg2: memref<8x8x128xf32, #tpu.memory_space<vmem>>, %arg3: memref<128x128xf32, #tpu.memory_space<vmem>>, %arg4: memref<1x128xf32, #tpu.memory_space<vmem>>, %arg5: memref<1x128xf32, #tpu.memory_space<vmem>>, %arg6: memref<1x128xf32, #tpu.memory_space<vmem>>, %arg7: memref<1x128xf32, #tpu.memory_space<vmem>>, %arg8: memref<128x128xf32, #tpu.memory_space<vmem>>, %arg9: memref<1x128xf32, #tpu.memory_space<vmem>>, %arg10: memref<1x128xf32, #tpu.memory_space<vmem>>, %arg11: memref<1x128xf32, #tpu.memory_space<vmem>>, %arg12: memref<1x128xf32, #tpu.memory_space<vmem>>, %arg13: memref<128x128xf32, #tpu.memory_space<vmem>>, %arg14: memref<1x128xf32, #tpu.memory_space<vmem>>, %arg15: memref<64x128xf32, #tpu.memory_space<vmem>>) attributes {dimension_semantics = [#tpu.dimension_semantics<parallel>], iteration_bounds = array<i64: 2>, scalar_prefetch = 0 : i64, scratch_operands = 0 : i64, tpu.core_type = #tpu.core_type<tc>, window_params = [{transform_indices = @transform_0, window_bounds = array<i64: 8, 1>}, {transform_indices = @transform_1, window_bounds = array<i64: 8, 8, 128>}, {pipeline_mode = #tpu.pipeline_mode<synchronous>, transform_indices = @transform_2, window_bounds = array<i64: 128, 128>}, {pipeline_mode = #tpu.pipeline_mode<synchronous>, transform_indices = @transform_3, window_bounds = array<i64: 1, 128>}, {pipeline_mode = #tpu.pipeline_mode<synchronous>, transform_indices = @transform_4, window_bounds = array<i64: 1, 128>}, {pipeline_mode = #tpu.pipeline_mode<synchronous>, transform_indices = @transform_5, window_bounds = array<i64: 1, 128>}, {pipeline_mode = #tpu.pipeline_mode<synchronous>, transform_indices = @transform_6, window_bounds = array<i64: 1, 128>}, {pipeline_mode = #tpu.pipeline_mode<synchronous>, transform_indices = @transform_7, window_bounds = array<i64: 128, 128>}, {pipeline_mode = #tpu.pipeline_mode<synchronous>, transform_indices = @transform_8, window_bounds = array<i64: 1, 128>}, {pipeline_mode = #tpu.pipeline_mode<synchronous>, transform_indices = @transform_9, window_bounds = array<i64: 1, 128>}, {pipeline_mode = #tpu.pipeline_mode<synchronous>, transform_indices = @transform_10, window_bounds = array<i64: 1, 128>}, {pipeline_mode = #tpu.pipeline_mode<synchronous>, transform_indices = @transform_11, window_bounds = array<i64: 1, 128>}, {pipeline_mode = #tpu.pipeline_mode<synchronous>, transform_indices = @transform_12, window_bounds = array<i64: 128, 128>}, {pipeline_mode = #tpu.pipeline_mode<synchronous>, transform_indices = @transform_13, window_bounds = array<i64: 1, 128>}, {transform_indices = @transform_14, window_bounds = array<i64: 64, 128>}]} {
    %c0 = arith.constant 0 : index
    %c0_0 = arith.constant 0 : index
    %0 = vector.load %arg1[%c0, %c0_0] : memref<8x1xi32, #tpu.memory_space<vmem>>, vector<8x1xi32>
    %c1_i32 = arith.constant 1 : i32
    %1 = vector.broadcast %c1_i32 : i32 to vector<8x1xi32>
    %2 = arith.maxsi %0, %1 : vector<8x1xi32>
    %3 = arith.sitofp %2 : vector<8x1xi32> to vector<8x1xf32>
    %cst = arith.constant 1.000000e+00 : f32
    %4 = vector.broadcast %cst : f32 to vector<8x1xf32>
    %5 = arith.divf %4, %3 : vector<8x1xf32>
    %6 = vector.shape_cast %5 : vector<8x1xf32> to vector<8x1x1xf32>
    %7 = tpu.iota {dimensions = array<i32: 1>} : vector<8x8x1xi32>
    %8 = vector.shape_cast %0 : vector<8x1xi32> to vector<8x1x1xi32>
    %9 = vector.broadcast %8 : vector<8x1x1xi32> to vector<8x8x1xi32>
    %10 = arith.cmpi slt, %7, %9 : vector<8x8x1xi32>
    %11 = arith.extui %10 : vector<8x8x1xi1> to vector<8x8x1xi32>
    %12 = arith.sitofp %11 : vector<8x8x1xi32> to vector<8x8x1xf32>
    %c0_1 = arith.constant 0 : index
    %c0_2 = arith.constant 0 : index
    %c0_3 = arith.constant 0 : index
    %13 = vector.load %arg2[%c0_1, %c0_2, %c0_3] : memref<8x8x128xf32, #tpu.memory_space<vmem>>, vector<8x8x128xf32>
    %14 = vector.shape_cast %13 : vector<8x8x128xf32> to vector<64x128xf32>
    %c0_4 = arith.constant 0 : index
    %c0_5 = arith.constant 0 : index
    %15 = vector.load %arg3[%c0_4, %c0_5] : memref<128x128xf32, #tpu.memory_space<vmem>>, vector<128x128xf32>
    %c0_6 = arith.constant 0 : index
    %c0_7 = arith.constant 0 : index
    %16 = vector.load %arg4[%c0_6, %c0_7] : memref<1x128xf32, #tpu.memory_space<vmem>>, vector<1x128xf32>
    %c0_8 = arith.constant 0 : index
    %c0_9 = arith.constant 0 : index
    %17 = vector.load %arg5[%c0_8, %c0_9] : memref<1x128xf32, #tpu.memory_space<vmem>>, vector<1x128xf32>
    %c0_10 = arith.constant 0 : index
    %c0_11 = arith.constant 0 : index
    %18 = vector.load %arg6[%c0_10, %c0_11] : memref<1x128xf32, #tpu.memory_space<vmem>>, vector<1x128xf32>
    %c0_12 = arith.constant 0 : index
    %c0_13 = arith.constant 0 : index
    %19 = vector.load %arg7[%c0_12, %c0_13] : memref<1x128xf32, #tpu.memory_space<vmem>>, vector<1x128xf32>
    %cst_14 = arith.constant dense<0.000000e+00> : vector<64x128xf32>
    %20 = tpu.matmul %14, %15, %cst_14 {dimension_numbers = #tpu.dot_dimension_numbers<[1], [0], [0], [1], [0, 0, 1, 1], [], []>} : vector<64x128xf32>, vector<128x128xf32>, vector<64x128xf32> -> vector<64x128xf32>
    %21 = vector.broadcast %16 : vector<1x128xf32> to vector<64x128xf32>
    %22 = arith.addf %20, %21 : vector<64x128xf32>
    %23 = vector.shape_cast %22 : vector<64x128xf32> to vector<8x8x128xf32>
    %24 = vector.broadcast %12 : vector<8x8x1xf32> to vector<8x8x128xf32>
    %25 = arith.mulf %23, %24 : vector<8x8x128xf32>
    %cst_15 = arith.constant dense<0.000000e+00> : vector<8x128xf32>
    %26 = vector.multi_reduction <add>, %25, %cst_15 [1] : vector<8x8x128xf32> to vector<8x128xf32>
    %27 = vector.shape_cast %26 : vector<8x128xf32> to vector<8x1x128xf32>
    %28 = vector.broadcast %6 : vector<8x1x1xf32> to vector<8x1x128xf32>
    %29 = arith.mulf %27, %28 : vector<8x1x128xf32>
    %30 = vector.shape_cast %19 : vector<1x128xf32> to vector<1x1x128xf32>
    %31 = vector.broadcast %30 : vector<1x1x128xf32> to vector<8x1x128xf32>
    %32 = arith.mulf %29, %31 : vector<8x1x128xf32>
    %33 = vector.broadcast %32 : vector<8x1x128xf32> to vector<8x8x128xf32>
    %34 = arith.subf %23, %33 : vector<8x8x128xf32>
    %35 = arith.mulf %34, %34 : vector<8x8x128xf32>
    %36 = vector.broadcast %12 : vector<8x8x1xf32> to vector<8x8x128xf32>
    %37 = arith.mulf %35, %36 : vector<8x8x128xf32>
    %cst_16 = arith.constant dense<0.000000e+00> : vector<8x128xf32>
    %38 = vector.multi_reduction <add>, %37, %cst_16 [1] : vector<8x8x128xf32> to vector<8x128xf32>
    %39 = vector.shape_cast %38 : vector<8x128xf32> to vector<8x1x128xf32>
    %40 = vector.broadcast %6 : vector<8x1x1xf32> to vector<8x1x128xf32>
    %41 = arith.mulf %39, %40 : vector<8x1x128xf32>
    %cst_17 = arith.constant 9.99999997E-7 : f32
    %42 = vector.broadcast %cst_17 : f32 to vector<8x1x128xf32>
    %43 = arith.addf %41, %42 : vector<8x1x128xf32>
    %44 = math.rsqrt %43 : vector<8x1x128xf32>
    %45 = vector.shape_cast %17 : vector<1x128xf32> to vector<1x1x128xf32>
    %46 = vector.broadcast %45 : vector<1x1x128xf32> to vector<8x1x128xf32>
    %47 = arith.mulf %46, %44 : vector<8x1x128xf32>
    %48 = vector.broadcast %47 : vector<8x1x128xf32> to vector<8x8x128xf32>
    %49 = arith.mulf %34, %48 : vector<8x8x128xf32>
    %50 = vector.shape_cast %18 : vector<1x128xf32> to vector<1x1x128xf32>
    %51 = vector.broadcast %50 : vector<1x1x128xf32> to vector<8x8x128xf32>
    %52 = arith.addf %49, %51 : vector<8x8x128xf32>
    %cst_18 = arith.constant 0.000000e+00 : f32
    %53 = vector.broadcast %cst_18 : f32 to vector<8x8x128xf32>
    %54 = arith.maximumf %52, %53 : vector<8x8x128xf32>
    %55 = vector.shape_cast %54 : vector<8x8x128xf32> to vector<64x128xf32>
    %c0_19 = arith.constant 0 : index
    %c0_20 = arith.constant 0 : index
    %56 = vector.load %arg8[%c0_19, %c0_20] : memref<128x128xf32, #tpu.memory_space<vmem>>, vector<128x128xf32>
    %c0_21 = arith.constant 0 : index
    %c0_22 = arith.constant 0 : index
    %57 = vector.load %arg9[%c0_21, %c0_22] : memref<1x128xf32, #tpu.memory_space<vmem>>, vector<1x128xf32>
    %c0_23 = arith.constant 0 : index
    %c0_24 = arith.constant 0 : index
    %58 = vector.load %arg10[%c0_23, %c0_24] : memref<1x128xf32, #tpu.memory_space<vmem>>, vector<1x128xf32>
    %c0_25 = arith.constant 0 : index
    %c0_26 = arith.constant 0 : index
    %59 = vector.load %arg11[%c0_25, %c0_26] : memref<1x128xf32, #tpu.memory_space<vmem>>, vector<1x128xf32>
    %c0_27 = arith.constant 0 : index
    %c0_28 = arith.constant 0 : index
    %60 = vector.load %arg12[%c0_27, %c0_28] : memref<1x128xf32, #tpu.memory_space<vmem>>, vector<1x128xf32>
    %cst_29 = arith.constant dense<0.000000e+00> : vector<64x128xf32>
    %61 = tpu.matmul %55, %56, %cst_29 {dimension_numbers = #tpu.dot_dimension_numbers<[1], [0], [0], [1], [0, 0, 1, 1], [], []>} : vector<64x128xf32>, vector<128x128xf32>, vector<64x128xf32> -> vector<64x128xf32>
    %62 = vector.broadcast %57 : vector<1x128xf32> to vector<64x128xf32>
    %63 = arith.addf %61, %62 : vector<64x128xf32>
    %64 = vector.shape_cast %63 : vector<64x128xf32> to vector<8x8x128xf32>
    %65 = vector.broadcast %12 : vector<8x8x1xf32> to vector<8x8x128xf32>
    %66 = arith.mulf %64, %65 : vector<8x8x128xf32>
    %cst_30 = arith.constant dense<0.000000e+00> : vector<8x128xf32>
    %67 = vector.multi_reduction <add>, %66, %cst_30 [1] : vector<8x8x128xf32> to vector<8x128xf32>
    %68 = vector.shape_cast %67 : vector<8x128xf32> to vector<8x1x128xf32>
    %69 = vector.broadcast %6 : vector<8x1x1xf32> to vector<8x1x128xf32>
    %70 = arith.mulf %68, %69 : vector<8x1x128xf32>
    %71 = vector.shape_cast %60 : vector<1x128xf32> to vector<1x1x128xf32>
    %72 = vector.broadcast %71 : vector<1x1x128xf32> to vector<8x1x128xf32>
    %73 = arith.mulf %70, %72 : vector<8x1x128xf32>
    %74 = vector.broadcast %73 : vector<8x1x128xf32> to vector<8x8x128xf32>
    %75 = arith.subf %64, %74 : vector<8x8x128xf32>
    %76 = arith.mulf %75, %75 : vector<8x8x128xf32>
    %77 = vector.broadcast %12 : vector<8x8x1xf32> to vector<8x8x128xf32>
    %78 = arith.mulf %76, %77 : vector<8x8x128xf32>
    %cst_31 = arith.constant dense<0.000000e+00> : vector<8x128xf32>
    %79 = vector.multi_reduction <add>, %78, %cst_31 [1] : vector<8x8x128xf32> to vector<8x128xf32>
    %80 = vector.shape_cast %79 : vector<8x128xf32> to vector<8x1x128xf32>
    %81 = vector.broadcast %6 : vector<8x1x1xf32> to vector<8x1x128xf32>
    %82 = arith.mulf %80, %81 : vector<8x1x128xf32>
    %cst_32 = arith.constant 9.99999997E-7 : f32
    %83 = vector.broadcast %cst_32 : f32 to vector<8x1x128xf32>
    %84 = arith.addf %82, %83 : vector<8x1x128xf32>
    %85 = math.rsqrt %84 : vector<8x1x128xf32>
    %86 = vector.shape_cast %58 : vector<1x128xf32> to vector<1x1x128xf32>
    %87 = vector.broadcast %86 : vector<1x1x128xf32> to vector<8x1x128xf32>
    %88 = arith.mulf %87, %85 : vector<8x1x128xf32>
    %89 = vector.broadcast %88 : vector<8x1x128xf32> to vector<8x8x128xf32>
    %90 = arith.mulf %75, %89 : vector<8x8x128xf32>
    %91 = vector.shape_cast %59 : vector<1x128xf32> to vector<1x1x128xf32>
    %92 = vector.broadcast %91 : vector<1x1x128xf32> to vector<8x8x128xf32>
    %93 = arith.addf %90, %92 : vector<8x8x128xf32>
    %cst_33 = arith.constant 0.000000e+00 : f32
    %94 = vector.broadcast %cst_33 : f32 to vector<8x8x128xf32>
    %95 = arith.maximumf %93, %94 : vector<8x8x128xf32>
    %96 = vector.shape_cast %95 : vector<8x8x128xf32> to vector<64x128xf32>
    %c0_34 = arith.constant 0 : index
    %c0_35 = arith.constant 0 : index
    %97 = vector.load %arg13[%c0_34, %c0_35] : memref<128x128xf32, #tpu.memory_space<vmem>>, vector<128x128xf32>
    %c0_36 = arith.constant 0 : index
    %c0_37 = arith.constant 0 : index
    %98 = vector.load %arg14[%c0_36, %c0_37] : memref<1x128xf32, #tpu.memory_space<vmem>>, vector<1x128xf32>
    %cst_38 = arith.constant dense<0.000000e+00> : vector<64x128xf32>
    %99 = tpu.matmul %96, %97, %cst_38 {dimension_numbers = #tpu.dot_dimension_numbers<[1], [0], [0], [1], [0, 0, 1, 1], [], []>} : vector<64x128xf32>, vector<128x128xf32>, vector<64x128xf32> -> vector<64x128xf32>
    %100 = vector.broadcast %98 : vector<1x128xf32> to vector<64x128xf32>
    %101 = arith.addf %99, %100 : vector<64x128xf32>
    %c0_39 = arith.constant 0 : index
    %c0_40 = arith.constant 0 : index
    %102 = vector.load %arg15[%c0_39, %c0_40] : memref<64x128xf32, #tpu.memory_space<vmem>>, vector<64x128xf32>
    tpu.vector_store %arg15[%c0_39, %c0_40], %101 {strides = array<i32>} : memref<64x128xf32, #tpu.memory_space<vmem>>, vector<64x128xf32>,
    return
  }
  func.func @transform_0(%arg0: i32) -> (i32, i32) {
    %c0_i32 = arith.constant 0 : i32
    %c0_i32_0 = arith.constant 0 : i32
    return %arg0, %c0_i32 : i32, i32
  }
  func.func @transform_1(%arg0: i32) -> (i32, i32, i32) {
    %c0_i32 = arith.constant 0 : i32
    %c0_i32_0 = arith.constant 0 : i32
    %c0_i32_1 = arith.constant 0 : i32
    return %arg0, %c0_i32, %c0_i32_0 : i32, i32, i32
  }
  func.func @transform_2(%arg0: i32) -> (i32, i32) {
    %c0_i32 = arith.constant 0 : i32
    %c0_i32_0 = arith.constant 0 : i32
    %c0_i32_1 = arith.constant 0 : i32
    return %c0_i32, %c0_i32_0 : i32, i32
  }
  func.func @transform_3(%arg0: i32) -> (i32, i32) {
    %c0_i32 = arith.constant 0 : i32
    %c0_i32_0 = arith.constant 0 : i32
    %c0_i32_1 = arith.constant 0 : i32
    return %c0_i32, %c0_i32_0 : i32, i32
  }
  func.func @transform_4(%arg0: i32) -> (i32, i32) {
    %c0_i32 = arith.constant 0 : i32
    %c0_i32_0 = arith.constant 0 : i32
    %c0_i32_1 = arith.constant 0 : i32
    return %c0_i32, %c0_i32_0 : i32, i32
  }
  func.func @transform_5(%arg0: i32) -> (i32, i32) {
    %c0_i32 = arith.constant 0 : i32
    %c0_i32_0 = arith.constant 0 : i32
    %c0_i32_1 = arith.constant 0 : i32
    return %c0_i32, %c0_i32_0 : i32, i32
  }
  func.func @transform_6(%arg0: i32) -> (i32, i32) {
    %c0_i32 = arith.constant 0 : i32
    %c0_i32_0 = arith.constant 0 : i32
    %c0_i32_1 = arith.constant 0 : i32
    return %c0_i32, %c0_i32_0 : i32, i32
  }
  func.func @transform_7(%arg0: i32) -> (i32, i32) {
    %c0_i32 = arith.constant 0 : i32
    %c0_i32_0 = arith.constant 0 : i32
    %c0_i32_1 = arith.constant 0 : i32
    return %c0_i32, %c0_i32_0 : i32, i32
  }
  func.func @transform_8(%arg0: i32) -> (i32, i32) {
    %c0_i32 = arith.constant 0 : i32
    %c0_i32_0 = arith.constant 0 : i32
    %c0_i32_1 = arith.constant 0 : i32
    return %c0_i32, %c0_i32_0 : i32, i32
  }
  func.func @transform_9(%arg0: i32) -> (i32, i32) {
    %c0_i32 = arith.constant 0 : i32
    %c0_i32_0 = arith.constant 0 : i32
    %c0_i32_1 = arith.constant 0 : i32
    return %c0_i32, %c0_i32_0 : i32, i32
  }
  func.func @transform_10(%arg0: i32) -> (i32, i32) {
    %c0_i32 = arith.constant 0 : i32
    %c0_i32_0 = arith.constant 0 : i32
    %c0_i32_1 = arith.constant 0 : i32
    return %c0_i32, %c0_i32_0 : i32, i32
  }
  func.func @transform_11(%arg0: i32) -> (i32, i32) {
    %c0_i32 = arith.constant 0 : i32
    %c0_i32_0 = arith.constant 0 : i32
    %c0_i32_1 = arith.constant 0 : i32
    return %c0_i32, %c0_i32_0 : i32, i32
  }
  func.func @transform_12(%arg0: i32) -> (i32, i32) {
    %c0_i32 = arith.constant 0 : i32
    %c0_i32_0 = arith.constant 0 : i32
    %c0_i32_1 = arith.constant 0 : i32
    return %c0_i32, %c0_i32_0 : i32, i32
  }
  func.func @transform_13(%arg0: i32) -> (i32, i32) {
    %c0_i32 = arith.constant 0 : i32
    %c0_i32_0 = arith.constant 0 : i32
    %c0_i32_1 = arith.constant 0 : i32
    return %c0_i32, %c0_i32_0 : i32, i32
  }
  func.func @transform_14(%arg0: i32) -> (i32, i32) {
    %c0_i32 = arith.constant 0 : i32
    %c0_i32_0 = arith.constant 0 : i32
    return %arg0, %c0_i32 : i32, i32
  }
}

module attributes {stable_mosaic.version = 11 : i64} {
  func.func @kernel(%arg0: i32, %arg1: memref<8x1xi32, #tpu.memory_space<vmem>>, %arg2: memref<8x8x128xf32, #tpu.memory_space<vmem>>, %arg3: memref<128x128xf32, #tpu.memory_space<vmem>>, %arg4: memref<1x128xf32, #tpu.memory_space<vmem>>, %arg5: memref<1x128xf32, #tpu.memory_space<vmem>>, %arg6: memref<1x128xf32, #tpu.memory_space<vmem>>, %arg7: memref<1x128xf32, #tpu.memory_space<vmem>>, %arg8: memref<128x128xf32, #tpu.memory_space<vmem>>, %arg9: memref<1x128xf32, #tpu.memory_space<vmem>>, %arg10: memref<1x128xf32, #tpu.memory_space<vmem>>, %arg11: memref<1x128xf32, #tpu.memory_space<vmem>>, %arg12: memref<1x128xf32, #tpu.memory_space<vmem>>, %arg13: memref<128x128xf32, #tpu.memory_space<vmem>>, %arg14: memref<1x128xf32, #tpu.memory_space<vmem>>, %arg15: memref<64x128xf32, #tpu.memory_space<vmem>>) attributes {dimension_semantics = [#tpu.dimension_semantics<parallel>], iteration_bounds = array<i64: 2>, scalar_prefetch = 0 : i64, scratch_operands = 0 : i64, tpu.core_type = #tpu.core_type<tc>, window_params = [{transform_indices = @transform_0, window_bounds = array<i64: 8, 1>}, {transform_indices = @transform_1, window_bounds = array<i64: 8, 8, 128>}, {pipeline_mode = #tpu.pipeline_mode<synchronous>, transform_indices = @transform_2, window_bounds = array<i64: 128, 128>}, {pipeline_mode = #tpu.pipeline_mode<synchronous>, transform_indices = @transform_3, window_bounds = array<i64: 1, 128>}, {pipeline_mode = #tpu.pipeline_mode<synchronous>, transform_indices = @transform_4, window_bounds = array<i64: 1, 128>}, {pipeline_mode = #tpu.pipeline_mode<synchronous>, transform_indices = @transform_5, window_bounds = array<i64: 1, 128>}, {pipeline_mode = #tpu.pipeline_mode<synchronous>, transform_indices = @transform_6, window_bounds = array<i64: 1, 128>}, {pipeline_mode = #tpu.pipeline_mode<synchronous>, transform_indices = @transform_7, window_bounds = array<i64: 128, 128>}, {pipeline_mode = #tpu.pipeline_mode<synchronous>, transform_indices = @transform_8, window_bounds = array<i64: 1, 128>}, {pipeline_mode = #tpu.pipeline_mode<synchronous>, transform_indices = @transform_9, window_bounds = array<i64: 1, 128>}, {pipeline_mode = #tpu.pipeline_mode<synchronous>, transform_indices = @transform_10, window_bounds = array<i64: 1, 128>}, {pipeline_mode = #tpu.pipeline_mode<synchronous>, transform_indices = @transform_11, window_bounds = array<i64: 1, 128>}, {pipeline_mode = #tpu.pipeline_mode<synchronous>, transform_indices = @transform_12, window_bounds = array<i64: 128, 128>}, {pipeline_mode = #tpu.pipeline_mode<synchronous>, transform_indices = @transform_13, window_bounds = array<i64: 1, 128>}, {transform_indices = @transform_14, window_bounds = array<i64: 64, 128>}]} {
    %c0 = arith.constant 0 : index
    %c0_0 = arith.constant 0 : index
    %0 = vector.load %arg1[%c0, %c0_0] : memref<8x1xi32, #tpu.memory_space<vmem>>, vector<8x1xi32>
    %c1_i32 = arith.constant 1 : i32
    %1 = vector.broadcast %c1_i32 : i32 to vector<8x1xi32>
    %2 = arith.maxsi %0, %1 : vector<8x1xi32>
    %3 = arith.sitofp %2 : vector<8x1xi32> to vector<8x1xf32>
    %cst = arith.constant 1.000000e+00 : f32
    %4 = vector.broadcast %cst : f32 to vector<8x1xf32>
    %5 = arith.divf %4, %3 : vector<8x1xf32>
    %6 = vector.shape_cast %5 : vector<8x1xf32> to vector<8x1x1xf32>
    %7 = tpu.iota {dimensions = array<i32: 1>} : vector<8x8x1xi32>
    %8 = vector.shape_cast %0 : vector<8x1xi32> to vector<8x1x1xi32>
    %9 = vector.broadcast %8 : vector<8x1x1xi32> to vector<8x8x1xi32>
    %10 = arith.cmpi slt, %7, %9 : vector<8x8x1xi32>
    %11 = arith.extui %10 : vector<8x8x1xi1> to vector<8x8x1xi32>
    %12 = arith.sitofp %11 : vector<8x8x1xi32> to vector<8x8x1xf32>
    %c0_1 = arith.constant 0 : index
    %c0_2 = arith.constant 0 : index
    %c0_3 = arith.constant 0 : index
    %13 = vector.load %arg2[%c0_1, %c0_2, %c0_3] : memref<8x8x128xf32, #tpu.memory_space<vmem>>, vector<8x8x128xf32>
    %14 = vector.shape_cast %13 : vector<8x8x128xf32> to vector<64x128xf32>
    %c0_4 = arith.constant 0 : index
    %c0_5 = arith.constant 0 : index
    %15 = vector.load %arg3[%c0_4, %c0_5] : memref<128x128xf32, #tpu.memory_space<vmem>>, vector<128x128xf32>
    %c0_6 = arith.constant 0 : index
    %c0_7 = arith.constant 0 : index
    %16 = vector.load %arg4[%c0_6, %c0_7] : memref<1x128xf32, #tpu.memory_space<vmem>>, vector<1x128xf32>
    %c0_8 = arith.constant 0 : index
    %c0_9 = arith.constant 0 : index
    %17 = vector.load %arg5[%c0_8, %c0_9] : memref<1x128xf32, #tpu.memory_space<vmem>>, vector<1x128xf32>
    %c0_10 = arith.constant 0 : index
    %c0_11 = arith.constant 0 : index
    %18 = vector.load %arg6[%c0_10, %c0_11] : memref<1x128xf32, #tpu.memory_space<vmem>>, vector<1x128xf32>
    %c0_12 = arith.constant 0 : index
    %c0_13 = arith.constant 0 : index
    %19 = vector.load %arg7[%c0_12, %c0_13] : memref<1x128xf32, #tpu.memory_space<vmem>>, vector<1x128xf32>
    %cst_14 = arith.constant dense<0.000000e+00> : vector<64x128xf32>
    %20 = tpu.matmul %14, %15, %cst_14 {dimension_numbers = #tpu.dot_dimension_numbers<[1], [0], [0], [1], [0, 0, 1, 1], [], []>} : vector<64x128xf32>, vector<128x128xf32>, vector<64x128xf32> -> vector<64x128xf32>
    %21 = vector.broadcast %16 : vector<1x128xf32> to vector<64x128xf32>
    %22 = arith.addf %20, %21 : vector<64x128xf32>
    %23 = vector.shape_cast %22 : vector<64x128xf32> to vector<8x8x128xf32>
    %24 = vector.broadcast %12 : vector<8x8x1xf32> to vector<8x8x128xf32>
    %25 = arith.mulf %23, %24 : vector<8x8x128xf32>
    %cst_15 = arith.constant dense<0.000000e+00> : vector<8x128xf32>
    %26 = vector.multi_reduction <add>, %25, %cst_15 [1] : vector<8x8x128xf32> to vector<8x128xf32>
    %27 = vector.shape_cast %26 : vector<8x128xf32> to vector<8x1x128xf32>
    %28 = vector.broadcast %6 : vector<8x1x1xf32> to vector<8x1x128xf32>
    %29 = arith.mulf %27, %28 : vector<8x1x128xf32>
    %30 = vector.shape_cast %19 : vector<1x128xf32> to vector<1x1x128xf32>
    %31 = vector.broadcast %30 : vector<1x1x128xf32> to vector<8x1x128xf32>
    %32 = arith.mulf %29, %31 : vector<8x1x128xf32>
    %33 = vector.broadcast %32 : vector<8x1x128xf32> to vector<8x8x128xf32>
    %34 = arith.subf %23, %33 : vector<8x8x128xf32>
    %35 = arith.mulf %34, %34 : vector<8x8x128xf32>
    %36 = vector.broadcast %12 : vector<8x8x1xf32> to vector<8x8x128xf32>
    %37 = arith.mulf %35, %36 : vector<8x8x128xf32>
    %cst_16 = arith.constant dense<0.000000e+00> : vector<8x128xf32>
    %38 = vector.multi_reduction <add>, %37, %cst_16 [1] : vector<8x8x128xf32> to vector<8x128xf32>
    %39 = vector.shape_cast %38 : vector<8x128xf32> to vector<8x1x128xf32>
    %40 = vector.broadcast %6 : vector<8x1x1xf32> to vector<8x1x128xf32>
    %41 = arith.mulf %39, %40 : vector<8x1x128xf32>
    %cst_17 = arith.constant 9.99999997E-7 : f32
    %42 = vector.broadcast %cst_17 : f32 to vector<8x1x128xf32>
    %43 = arith.addf %41, %42 : vector<8x1x128xf32>
    %44 = math.rsqrt %43 : vector<8x1x128xf32>
    %45 = vector.shape_cast %17 : vector<1x128xf32> to vector<1x1x128xf32>
    %46 = vector.broadcast %45 : vector<1x1x128xf32> to vector<8x1x128xf32>
    %47 = arith.mulf %46, %44 : vector<8x1x128xf32>
    %48 = vector.broadcast %47 : vector<8x1x128xf32> to vector<8x8x128xf32>
    %49 = arith.mulf %34, %48 : vector<8x8x128xf32>
    %50 = vector.shape_cast %18 : vector<1x128xf32> to vector<1x1x128xf32>
    %51 = vector.broadcast %50 : vector<1x1x128xf32> to vector<8x8x128xf32>
    %52 = arith.addf %49, %51 : vector<8x8x128xf32>
    %cst_18 = arith.constant 0.000000e+00 : f32
    %53 = vector.broadcast %cst_18 : f32 to vector<8x8x128xf32>
    %54 = arith.maximumf %52, %53 : vector<8x8x128xf32>
    %55 = vector.shape_cast %54 : vector<8x8x128xf32> to vector<64x128xf32>
    %c0_19 = arith.constant 0 : index
    %c0_20 = arith.constant 0 : index
    %56 = vector.load %arg8[%c0_19, %c0_20] : memref<128x128xf32, #tpu.memory_space<vmem>>, vector<128x128xf32>
    %c0_21 = arith.constant 0 : index
    %c0_22 = arith.constant 0 : index
    %57 = vector.load %arg9[%c0_21, %c0_22] : memref<1x128xf32, #tpu.memory_space<vmem>>, vector<1x128xf32>
    %c0_23 = arith.constant 0 : index
    %c0_24 = arith.constant 0 : index
    %58 = vector.load %arg10[%c0_23, %c0_24] : memref<1x128xf32, #tpu.memory_space<vmem>>, vector<1x128xf32>
    %c0_25 = arith.constant 0 : index
    %c0_26 = arith.constant 0 : index
    %59 = vector.load %arg11[%c0_25, %c0_26] : memref<1x128xf32, #tpu.memory_space<vmem>>, vector<1x128xf32>
    %c0_27 = arith.constant 0 : index
    %c0_28 = arith.constant 0 : index
    %60 = vector.load %arg12[%c0_27, %c0_28] : memref<1x128xf32, #tpu.memory_space<vmem>>, vector<1x128xf32>
    %cst_29 = arith.constant dense<0.000000e+00> : vector<64x128xf32>
    %61 = tpu.matmul %55, %56, %cst_29 {dimension_numbers = #tpu.dot_dimension_numbers<[1], [0], [0], [1], [0, 0, 1, 1], [], []>} : vector<64x128xf32>, vector<128x128xf32>, vector<64x128xf32> -> vector<64x128xf32>
    %62 = vector.broadcast %57 : vector<1x128xf32> to vector<64x128xf32>
    %63 = arith.addf %61, %62 : vector<64x128xf32>
    %64 = vector.shape_cast %63 : vector<64x128xf32> to vector<8x8x128xf32>
    %65 = vector.broadcast %12 : vector<8x8x1xf32> to vector<8x8x128xf32>
    %66 = arith.mulf %64, %65 : vector<8x8x128xf32>
    %cst_30 = arith.constant dense<0.000000e+00> : vector<8x128xf32>
    %67 = vector.multi_reduction <add>, %66, %cst_30 [1] : vector<8x8x128xf32> to vector<8x128xf32>
    %68 = vector.shape_cast %67 : vector<8x128xf32> to vector<8x1x128xf32>
    %69 = vector.broadcast %6 : vector<8x1x1xf32> to vector<8x1x128xf32>
    %70 = arith.mulf %68, %69 : vector<8x1x128xf32>
    %71 = vector.shape_cast %60 : vector<1x128xf32> to vector<1x1x128xf32>
    %72 = vector.broadcast %71 : vector<1x1x128xf32> to vector<8x1x128xf32>
    %73 = arith.mulf %70, %72 : vector<8x1x128xf32>
    %74 = vector.broadcast %73 : vector<8x1x128xf32> to vector<8x8x128xf32>
    %75 = arith.subf %64, %74 : vector<8x8x128xf32>
    %76 = arith.mulf %75, %75 : vector<8x8x128xf32>
    %77 = vector.broadcast %12 : vector<8x8x1xf32> to vector<8x8x128xf32>
    %78 = arith.mulf %76, %77 : vector<8x8x128xf32>
    %cst_31 = arith.constant dense<0.000000e+00> : vector<8x128xf32>
    %79 = vector.multi_reduction <add>, %78, %cst_31 [1] : vector<8x8x128xf32> to vector<8x128xf32>
    %80 = vector.shape_cast %79 : vector<8x128xf32> to vector<8x1x128xf32>
    %81 = vector.broadcast %6 : vector<8x1x1xf32> to vector<8x1x128xf32>
    %82 = arith.mulf %80, %81 : vector<8x1x128xf32>
    %cst_32 = arith.constant 9.99999997E-7 : f32
    %83 = vector.broadcast %cst_32 : f32 to vector<8x1x128xf32>
    %84 = arith.addf %82, %83 : vector<8x1x128xf32>
    %85 = math.rsqrt %84 : vector<8x1x128xf32>
    %86 = vector.shape_cast %58 : vector<1x128xf32> to vector<1x1x128xf32>
    %87 = vector.broadcast %86 : vector<1x1x128xf32> to vector<8x1x128xf32>
    %88 = arith.mulf %87, %85 : vector<8x1x128xf32>
    %89 = vector.broadcast %88 : vector<8x1x128xf32> to vector<8x8x128xf32>
    %90 = arith.mulf %75, %89 : vector<8x8x128xf32>
    %91 = vector.shape_cast %59 : vector<1x128xf32> to vector<1x1x128xf32>
    %92 = vector.broadcast %91 : vector<1x1x128xf32> to vector<8x8x128xf32>
    %93 = arith.addf %90, %92 : vector<8x8x128xf32>
    %cst_33 = arith.constant 0.000000e+00 : f32
    %94 = vector.broadcast %cst_33 : f32 to vector<8x8x128xf32>
    %95 = arith.maximumf %93, %94 : vector<8x8x128xf32>
    %96 = vector.shape_cast %95 : vector<8x8x128xf32> to vector<64x128xf32>
    %c0_34 = arith.constant 0 : index
    %c0_35 = arith.constant 0 : index
    %97 = vector.load %arg13[%c0_34, %c0_35] : memref<128x128xf32, #tpu.memory_space<vmem>>, vector<128x128xf32>
    %c0_36 = arith.constant 0 : index
    %c0_37 = arith.constant 0 : index
    %98 = vector.load %arg14[%c0_36, %c0_37] : memref<1x128xf32, #tpu.memory_space<vmem>>, vector<1x128xf32>
    %cst_38 = arith.constant dense<0.000000e+00> : vector<64x128xf32>
    %99 = tpu.matmul %96, %97, %cst_38 {dimension_numbers = #tpu.dot_dimension_numbers<[1], [0], [0], [1], [0, 0, 1, 1], [], []>} : vector<64x128xf32>, vector<128x128xf32>, vector<64x128xf32> -> vector<64x128xf32>
    %100 = vector.broadcast %98 : vector<1x128xf32> to vector<64x128xf32>
    %101 = arith.addf %99, %100 : vector<64x128xf32>
    %c0_39 = arith.constant 0 : index
    %c0_40 = arith.constant 0 : index
    %102 = vector.load %arg15[%c0_39, %c0_40] : memref<64x128xf32, #tpu.memory_space<vmem>>, vector<64x128xf32>
    tpu.vector_store %arg15[%c0_39, %c0_40], %101 {strides = array<i32>} : memref<64x128xf32, #tpu.memory_space<vmem>>, vector<64x128xf32>,
    return
  }
  func.func @transform_0(%arg0: i32) -> (i32, i32) {
    %c0_i32 = arith.constant 0 : i32
    %c0_i32_0 = arith.constant 0 : i32
    return %arg0, %c0_i32 : i32, i32
  }
  func.func @transform_1(%arg0: i32) -> (i32, i32, i32) {
    %c0_i32 = arith.constant 0 : i32
    %c0_i32_0 = arith.constant 0 : i32
    %c0_i32_1 = arith.constant 0 : i32
    return %arg0, %c0_i32, %c0_i32_0 : i32, i32, i32
  }
  func.func @transform_2(%arg0: i32) -> (i32, i32) {
    %c0_i32 = arith.constant 0 : i32
    %c0_i32_0 = arith.constant 0 : i32
    %c0_i32_1 = arith.constant 0 : i32
    return %c0_i32, %c0_i32_0 : i32, i32
  }
  func.func @transform_3(%arg0: i32) -> (i32, i32) {
    %c0_i32 = arith.constant 0 : i32
    %c0_i32_0 = arith.constant 0 : i32
    %c0_i32_1 = arith.constant 0 : i32
    return %c0_i32, %c0_i32_0 : i32, i32
  }
  func.func @transform_4(%arg0: i32) -> (i32, i32) {
    %c0_i32 = arith.constant 0 : i32
    %c0_i32_0 = arith.constant 0 : i32
    %c0_i32_1 = arith.constant 0 : i32
    return %c0_i32, %c0_i32_0 : i32, i32
  }
  func.func @transform_5(%arg0: i32) -> (i32, i32) {
    %c0_i32 = arith.constant 0 : i32
    %c0_i32_0 = arith.constant 0 : i32
    %c0_i32_1 = arith.constant 0 : i32
    return %c0_i32, %c0_i32_0 : i32, i32
  }
  func.func @transform_6(%arg0: i32) -> (i32, i32) {
    %c0_i32 = arith.constant 0 : i32
    %c0_i32_0 = arith.constant 0 : i32
    %c0_i32_1 = arith.constant 0 : i32
    return %c0_i32, %c0_i32_0 : i32, i32
  }
  func.func @transform_7(%arg0: i32) -> (i32, i32) {
    %c0_i32 = arith.constant 0 : i32
    %c0_i32_0 = arith.constant 0 : i32
    %c0_i32_1 = arith.constant 0 : i32
    return %c0_i32, %c0_i32_0 : i32, i32
  }
  func.func @transform_8(%arg0: i32) -> (i32, i32) {
    %c0_i32 = arith.constant 0 : i32
    %c0_i32_0 = arith.constant 0 : i32
    %c0_i32_1 = arith.constant 0 : i32
    return %c0_i32, %c0_i32_0 : i32, i32
  }
  func.func @transform_9(%arg0: i32) -> (i32, i32) {
    %c0_i32 = arith.constant 0 : i32
    %c0_i32_0 = arith.constant 0 : i32
    %c0_i32_1 = arith.constant 0 : i32
    return %c0_i32, %c0_i32_0 : i32, i32
  }
  func.func @transform_10(%arg0: i32) -> (i32, i32) {
    %c0_i32 = arith.constant 0 : i32
    %c0_i32_0 = arith.constant 0 : i32
    %c0_i32_1 = arith.constant 0 : i32
    return %c0_i32, %c0_i32_0 : i32, i32
  }
  func.func @transform_11(%arg0: i32) -> (i32, i32) {
    %c0_i32 = arith.constant 0 : i32
    %c0_i32_0 = arith.constant 0 : i32
    %c0_i32_1 = arith.constant 0 : i32
    return %c0_i32, %c0_i32_0 : i32, i32
  }
  func.func @transform_12(%arg0: i32) -> (i32, i32) {
    %c0_i32 = arith.constant 0 : i32
    %c0_i32_0 = arith.constant 0 : i32
    %c0_i32_1 = arith.constant 0 : i32
    return %c0_i32, %c0_i32_0 : i32, i32
  }
  func.func @transform_13(%arg0: i32) -> (i32, i32) {
    %c0_i32 = arith.constant 0 : i32
    %c0_i32_0 = arith.constant 0 : i32
    %c0_i32_1 = arith.constant 0 : i32
    return %c0_i32, %c0_i32_0 : i32, i32
  }
  func.func @transform_14(%arg0: i32) -> (i32, i32) {
    %c0_i32 = arith.constant 0 : i32
    %c0_i32_0 = arith.constant 0 : i32
    return %arg0, %c0_i32 : i32, i32
  }
}

</mosaic_0001>

<llo_original>
// kernel: tpu_custom_call.1
$region0: #{tpu_custom_call.1}
  #allocation0 [shape = 'u32[]', space=smem, size = 0x4, offset = 0x4, fixed_abs, tag = 'smem constant byte address 0x4 - core index']
  #allocation1 [shape = 'u32[144,128]{1,0:T(1,128)}', space=vmem, size = 0x12000, scoped, tag = 'internal scratch']
  %s0 = inlined_call_operand.vmem [shape: s32[16,1], index: 0, kind: input, shape index: {}]
  %s1 = inlined_call_operand.hbm [shape: f32[16,8,128], index: 1, kind: input, shape index: {}]
  %s2 = inlined_call_operand.hbm [shape: f32[128,128], index: 2, kind: input, shape index: {}]
  %s3 = inlined_call_operand.vmem [shape: f32[1,128], index: 3, kind: input, shape index: {}]
  %s4 = inlined_call_operand.vmem [shape: f32[1,128], index: 4, kind: input, shape index: {}]
  %s5 = inlined_call_operand.vmem [shape: f32[1,128], index: 5, kind: input, shape index: {}]
  %s6 = inlined_call_operand.vmem [shape: f32[1,128], index: 6, kind: input, shape index: {}]
  %s7 = inlined_call_operand.hbm [shape: f32[128,128], index: 7, kind: input, shape index: {}]
  %s8 = inlined_call_operand.vmem [shape: f32[1,128], index: 8, kind: input, shape index: {}]
  %s9 = inlined_call_operand.vmem [shape: f32[1,128], index: 9, kind: input, shape index: {}]
  %s10 = inlined_call_operand.vmem [shape: f32[1,128], index: 10, kind: input, shape index: {}]
  %s11 = inlined_call_operand.vmem [shape: f32[1,128], index: 11, kind: input, shape index: {}]
  %s12 = inlined_call_operand.hbm [shape: f32[128,128], index: 12, kind: input, shape index: {}]
  %s13 = inlined_call_operand.vmem [shape: f32[1,128], index: 13, kind: input, shape index: {}]
  %s14 = inlined_call_operand.hbm [shape: f32[128,128], index: 14, kind: output, shape index: {}]
  %s15 = sld [smem:[#allocation0]]
  $region105: #{tpu_custom_call.1} parent=0
    _
  %s17 = ssub.s32 1, %s15
  %s18 = scalar_select 0, %s17, %s15
  $region1: #{tpu_custom_call.1} parent=0
    #allocation2 [shape = 'u8[65536]{0}', space=vmem, size = 0x10000, scoped, tag = 'input window, operand 1']
    #allocation3 [shape = 's32[2]{0}', space=sflag, size = 0x8, scoped, tag = 'scoped memory for tpu_custom_call.1']
    #allocation4 [shape = 's32[2]{0}', space=sflag, size = 0x8, scoped, tag = 'scoped memory for tpu_custom_call.1']
    #allocation5 [shape = 'u8[65536]{0}', space=vmem, size = 0x10000, scoped, tag = 'input window, operand 2, single buffered']
    #allocation6 [shape = 's32[1]{0}', space=sflag, size = 0x4, scoped, tag = 'scoped memory for tpu_custom_call.1']
    #allocation7 [shape = 'u8[65536]{0}', space=vmem, size = 0x10000, scoped, tag = 'input window, operand 7, single buffered']
    #allocation8 [shape = 'u8[65536]{0}', space=vmem, size = 0x10000, scoped, tag = 'input window, operand 12, single buffered']
    #allocation9 [shape = 's32[1]{0}', space=sflag, size = 0x4, scoped, tag = 'scoped memory for tpu_custom_call.1']
    #allocation10 [shape = 'u8[65536]{0}', space=vmem, size = 0x10000, scoped, tag = 'output window, operand 0']
    %19 = vsyncpa [#allocation3], 0
    %s20 = scalar_lea.sflag [#allocation3], 1
    %21 = vsyncpa %s20, 0
    %22 = vsyncpa [#allocation6], 0
    %23 = vsyncpa [#allocation9], 0
    %24 = vsyncpa [#allocation4], 0
    %s25 = scalar_lea.sflag [#allocation4], 1
    %26 = vsyncpa %s25, 0
    loop: start=0, step=1, limit=4
    $region2: #{tpu_custom_call.1} parent=1 // loop_pre_header
      _
    $region3: #{tpu_custom_call.1} parent=1 // loop_header
      %s28 = sphi 0, %s32
      %p29 = scmp.ge.s32.totalorder %s28, 4
      %s38 = sphi 0, %s40
      %s41 = sphi 0, %s38
      %s42 = sphi 0, %s41
      %s58 = sphi 0, %s42
      %s64 = sphi 0, %s66
      %s67 = sphi 0, %s64
      %s68 = sphi 0, %s67
      %s84 = sphi 0, %s68
      %s88 = sphi 0, %s88
      %s90 = sphi 0, %s88
      %s91 = sphi 0, %s90
      %s105 = sphi 0, %s91
      %s109 = sphi 0, %s109
      %s111 = sphi 0, %s109
      %s112 = sphi 0, %s111
      %s126 = sphi 0, %s112
      %s130 = sphi 0, %s130
      %s132 = sphi 0, %s130
      %s133 = sphi 0, %s132
      %s147 = sphi 0, %s133
      %s151 = sphi 0, %s151
      %s153 = sphi 0, %s151
      %s154 = sphi 0, %s153
      %s168 = sphi 0, %s154
      %s172 = sphi 0, %s172
      %s174 = sphi 0, %s172
      %s175 = sphi 0, %s174
      %s189 = sphi 0, %s175
      %s193 = sphi 0, %s193
      %s195 = sphi 0, %s193
      %s196 = sphi 0, %s195
      %s210 = sphi 0, %s196
      %s214 = sphi 0, %s214
      %s216 = sphi 0, %s214
      %s217 = sphi 0, %s216
      %s231 = sphi 0, %s217
      %s235 = sphi 0, %s235
      %s237 = sphi 0, %s235
      %s238 = sphi 0, %s237
      %s252 = sphi 0, %s238
      %s256 = sphi 0, %s256
      %s258 = sphi 0, %s256
      %s259 = sphi 0, %s258
      %s273 = sphi 0, %s259
      %s277 = sphi 0, %s277
      %s279 = sphi 0, %s277
      %s280 = sphi 0, %s279
      %s294 = sphi 0, %s280
      %s298 = sphi 0, %s298
      %s300 = sphi 0, %s298
      %s301 = sphi 0, %s300
      %s315 = sphi 0, %s301
      %s319 = sphi 0, %s319
      %s321 = sphi 0, %s319
      %s322 = sphi 0, %s321
      %s336 = sphi 0, %s322
      %s342 = sphi 0, %s344
      %s345 = sphi 0, %s342
      %s346 = sphi 0, %s345
      %s362 = sphi 0, %s346
    $region4: #{tpu_custom_call.1} parent=1 // loop_header_branch
      %31 = sbr.rel (%p29) target = $region8
    $region5: #{tpu_custom_call.1} parent=1 // loop_body
      %s33 = ssub.s32 %s28, 1
      %s34 = ssub.s32 %s28, 2
      %s35 = sadd.s32 %s28, 1
      %s36 = ssub.s32 %s28, %s35
      %p37 = scmp.eq.s32.totalorder %s36, 0
      %s39 = sadd.s32 %s38, 1
      %s40 = scalar_select %p37, %s38, %s39
      %p43 = pneg %p37
      %p44 = scmp.eq.s32.totalorder %s28, 1
      %p45 = por %p43, %p44
      %p46 = scmp.ne.s32.totalorder %s38, %s41
      %p47 = scmp.eq.s32.totalorder %s28, 0
      %p48 = por %p46, %p47
      %p49 = scmp.ne.s32.totalorder %s38, %s41
      %p50 = scmp.eq.s32.totalorder %s33, 1
      %p51 = por %p49, %p50
      %p52 = scmp.ne.s32.totalorder %s41, %s42
      %p53 = scmp.eq.s32.totalorder %s33, 0
      %p54 = por %p52, %p53
      %p55 = scmp.ne.s32.totalorder %s41, %s42
      %p56 = scmp.eq.s32.totalorder %s34, 1
      %p57 = por %p55, %p56
      %p59 = scmp.ne.s32.totalorder %s42, %s58
      %p60 = scmp.eq.s32.totalorder %s34, 0
      %p61 = por %p59, %p60
      %s62 = ssub.s32 %s28, %s35
      %p63 = scmp.eq.s32.totalorder %s62, 0
      %s65 = sadd.s32 %s64, 1
      %s66 = scalar_select %p63, %s64, %s65
      %p69 = pneg %p63
      %p70 = scmp.eq.s32.totalorder %s28, 1
      %p71 = por %p69, %p70
      %p72 = scmp.ne.s32.totalorder %s64, %s67
      %p73 = scmp.eq.s32.totalorder %s28, 0
      %p74 = por %p72, %p73
      %p75 = scmp.ne.s32.totalorder %s64, %s67
      %p76 = scmp.eq.s32.totalorder %s33, 1
      %p77 = por %p75, %p76
      %p78 = scmp.ne.s32.totalorder %s67, %s68
      %p79 = scmp.eq.s32.totalorder %s33, 0
      %p80 = por %p78, %p79
      %p81 = scmp.ne.s32.totalorder %s67, %s68
      %p82 = scmp.eq.s32.totalorder %s34, 1
      %p83 = por %p81, %p82
      %p85 = scmp.ne.s32.totalorder %s68, %s84
      %p86 = scmp.eq.s32.totalorder %s34, 0
      %p87 = por %p85, %p86
      %s89 = sadd.s32 %s88, 1
      %p92 = scmp.eq.s32.totalorder %s28, 1
      %p93 = scmp.ne.s32.totalorder %s88, %s90
      %p94 = scmp.eq.s32.totalorder %s28, 0
      %p95 = por %p93, %p94
      %p96 = scmp.ne.s32.totalorder %s88, %s90
      %p97 = scmp.eq.s32.totalorder %s33, 1
      %p98 = por %p96, %p97
      %p99 = scmp.ne.s32.totalorder %s90, %s91
      %p100 = scmp.eq.s32.totalorder %s33, 0
      %p101 = por %p99, %p100
      %p102 = scmp.ne.s32.totalorder %s90, %s91
      %p103 = scmp.eq.s32.totalorder %s34, 1
      %p104 = por %p102, %p103
      %p106 = scmp.ne.s32.totalorder %s91, %s105
      %p107 = scmp.eq.s32.totalorder %s34, 0
      %p108 = por %p106, %p107
      %s110 = sadd.s32 %s109, 1
      %p113 = scmp.eq.s32.totalorder %s28, 1
      %p114 = scmp.ne.s32.totalorder %s109, %s111
      %p115 = scmp.eq.s32.totalorder %s28, 0
      %p116 = por %p114, %p115
      %p117 = scmp.ne.s32.totalorder %s109, %s111
      %p118 = scmp.eq.s32.totalorder %s33, 1
      %p119 = por %p117, %p118
      %p120 = scmp.ne.s32.totalorder %s111, %s112
      %p121 = scmp.eq.s32.totalorder %s33, 0
      %p122 = por %p120, %p121
      %p123 = scmp.ne.s32.totalorder %s111, %s112
      %p124 = scmp.eq.s32.totalorder %s34, 1
      %p125 = por %p123, %p124
      %p127 = scmp.ne.s32.totalorder %s112, %s126
      %p128 = scmp.eq.s32.totalorder %s34, 0
      %p129 = por %p127, %p128
      %s131 = sadd.s32 %s130, 1
      %p134 = scmp.eq.s32.totalorder %s28, 1
      %p135 = scmp.ne.s32.totalorder %s130, %s132
      %p136 = scmp.eq.s32.totalorder %s28, 0
      %p137 = por %p135, %p136
      %p138 = scmp.ne.s32.totalorder %s130, %s132
      %p139 = scmp.eq.s32.totalorder %s33, 1
      %p140 = por %p138, %p139
      %p141 = scmp.ne.s32.totalorder %s132, %s133
      %p142 = scmp.eq.s32.totalorder %s33, 0
      %p143 = por %p141, %p142
      %p144 = scmp.ne.s32.totalorder %s132, %s133
      %p145 = scmp.eq.s32.totalorder %s34, 1
      %p146 = por %p144, %p145
      %p148 = scmp.ne.s32.totalorder %s133, %s147
      %p149 = scmp.eq.s32.totalorder %s34, 0
      %p150 = por %p148, %p149
      %s152 = sadd.s32 %s151, 1
      %p155 = scmp.eq.s32.totalorder %s28, 1
      %p156 = scmp.ne.s32.totalorder %s151, %s153
      %p157 = scmp.eq.s32.totalorder %s28, 0
      %p158 = por %p156, %p157
      %p159 = scmp.ne.s32.totalorder %s151, %s153
      %p160 = scmp.eq.s32.totalorder %s33, 1
      %p161 = por %p159, %p160
      %p162 = scmp.ne.s32.totalorder %s153, %s154
      %p163 = scmp.eq.s32.totalorder %s33, 0
      %p164 = por %p162, %p163
      %p165 = scmp.ne.s32.totalorder %s153, %s154
      %p166 = scmp.eq.s32.totalorder %s34, 1
      %p167 = por %p165, %p166
      %p169 = scmp.ne.s32.totalorder %s154, %s168
      %p170 = scmp.eq.s32.totalorder %s34, 0
      %p171 = por %p169, %p170
      %s173 = sadd.s32 %s172, 1
      %p176 = scmp.eq.s32.totalorder %s28, 1
      %p177 = scmp.ne.s32.totalorder %s172, %s174
      %p178 = scmp.eq.s32.totalorder %s28, 0
      %p179 = por %p177, %p178
      %p180 = scmp.ne.s32.totalorder %s172, %s174
      %p181 = scmp.eq.s32.totalorder %s33, 1
      %p182 = por %p180, %p181
      %p183 = scmp.ne.s32.totalorder %s174, %s175
      %p184 = scmp.eq.s32.totalorder %s33, 0
      %p185 = por %p183, %p184
      %p186 = scmp.ne.s32.totalorder %s174, %s175
      %p187 = scmp.eq.s32.totalorder %s34, 1
      %p188 = por %p186, %p187
      %p190 = scmp.ne.s32.totalorder %s175, %s189
      %p191 = scmp.eq.s32.totalorder %s34, 0
      %p192 = por %p190, %p191
      %s194 = sadd.s32 %s193, 1
      %p197 = scmp.eq.s32.totalorder %s28, 1
      %p198 = scmp.ne.s32.totalorder %s193, %s195
      %p199 = scmp.eq.s32.totalorder %s28, 0
      %p200 = por %p198, %p199
      %p201 = scmp.ne.s32.totalorder %s193, %s195
      %p202 = scmp.eq.s32.totalorder %s33, 1
      %p203 = por %p201, %p202
      %p204 = scmp.ne.s32.totalorder %s195, %s196
      %p205 = scmp.eq.s32.totalorder %s33, 0
      %p206 = por %p204, %p205
      %p207 = scmp.ne.s32.totalorder %s195, %s196
      %p208 = scmp.eq.s32.totalorder %s34, 1
      %p209 = por %p207, %p208
      %p211 = scmp.ne.s32.totalorder %s196, %s210
      %p212 = scmp.eq.s32.totalorder %s34, 0
      %p213 = por %p211, %p212
      %s215 = sadd.s32 %s214, 1
      %p218 = scmp.eq.s32.totalorder %s28, 1
      %p219 = scmp.ne.s32.totalorder %s214, %s216
      %p220 = scmp.eq.s32.totalorder %s28, 0
      %p221 = por %p219, %p220
      %p222 = scmp.ne.s32.totalorder %s214, %s216
      %p223 = scmp.eq.s32.totalorder %s33, 1
      %p224 = por %p222, %p223
      %p225 = scmp.ne.s32.totalorder %s216, %s217
      %p226 = scmp.eq.s32.totalorder %s33, 0
      %p227 = por %p225, %p226
      %p228 = scmp.ne.s32.totalorder %s216, %s217
      %p229 = scmp.eq.s32.totalorder %s34, 1
      %p230 = por %p228, %p229
      %p232 = scmp.ne.s32.totalorder %s217, %s231
      %p233 = scmp.eq.s32.totalorder %s34, 0
      %p234 = por %p232, %p233
      %s236 = sadd.s32 %s235, 1
      %p239 = scmp.eq.s32.totalorder %s28, 1
      %p240 = scmp.ne.s32.totalorder %s235, %s237
      %p241 = scmp.eq.s32.totalorder %s28, 0
      %p242 = por %p240, %p241
      %p243 = scmp.ne.s32.totalorder %s235, %s237
      %p244 = scmp.eq.s32.totalorder %s33, 1
      %p245 = por %p243, %p244
      %p246 = scmp.ne.s32.totalorder %s237, %s238
      %p247 = scmp.eq.s32.totalorder %s33, 0
      %p248 = por %p246, %p247
      %p249 = scmp.ne.s32.totalorder %s237, %s238
      %p250 = scmp.eq.s32.totalorder %s34, 1
      %p251 = por %p249, %p250
      %p253 = scmp.ne.s32.totalorder %s238, %s252
      %p254 = scmp.eq.s32.totalorder %s34, 0
      %p255 = por %p253, %p254
      %s257 = sadd.s32 %s256, 1
      %p260 = scmp.eq.s32.totalorder %s28, 1
      %p261 = scmp.ne.s32.totalorder %s256, %s258
      %p262 = scmp.eq.s32.totalorder %s28, 0
      %p263 = por %p261, %p262
      %p264 = scmp.ne.s32.totalorder %s256, %s258
      %p265 = scmp.eq.s32.totalorder %s33, 1
      %p266 = por %p264, %p265
      %p267 = scmp.ne.s32.totalorder %s258, %s259
      %p268 = scmp.eq.s32.totalorder %s33, 0
      %p269 = por %p267, %p268
      %p270 = scmp.ne.s32.totalorder %s258, %s259
      %p271 = scmp.eq.s32.totalorder %s34, 1
      %p272 = por %p270, %p271
      %p274 = scmp.ne.s32.totalorder %s259, %s273
      %p275 = scmp.eq.s32.totalorder %s34, 0
      %p276 = por %p274, %p275
      %s278 = sadd.s32 %s277, 1
      %p281 = scmp.eq.s32.totalorder %s28, 1
      %p282 = scmp.ne.s32.totalorder %s277, %s279
      %p283 = scmp.eq.s32.totalorder %s28, 0
      %p284 = por %p282, %p283
      %p285 = scmp.ne.s32.totalorder %s277, %s279
      %p286 = scmp.eq.s32.totalorder %s33, 1
      %p287 = por %p285, %p286
      %p288 = scmp.ne.s32.totalorder %s279, %s280
      %p289 = scmp.eq.s32.totalorder %s33, 0
      %p290 = por %p288, %p289
      %p291 = scmp.ne.s32.totalorder %s279, %s280
      %p292 = scmp.eq.s32.totalorder %s34, 1
      %p293 = por %p291, %p292
      %p295 = scmp.ne.s32.totalorder %s280, %s294
      %p296 = scmp.eq.s32.totalorder %s34, 0
      %p297 = por %p295, %p296
      %s299 = sadd.s32 %s298, 1
      %p302 = scmp.eq.s32.totalorder %s28, 1
      %p303 = scmp.ne.s32.totalorder %s298, %s300
      %p304 = scmp.eq.s32.totalorder %s28, 0
      %p305 = por %p303, %p304
      %p306 = scmp.ne.s32.totalorder %s298, %s300
      %p307 = scmp.eq.s32.totalorder %s33, 1
      %p308 = por %p306, %p307
      %p309 = scmp.ne.s32.totalorder %s300, %s301
      %p310 = scmp.eq.s32.totalorder %s33, 0
      %p311 = por %p309, %p310
      %p312 = scmp.ne.s32.totalorder %s300, %s301
      %p313 = scmp.eq.s32.totalorder %s34, 1
      %p314 = por %p312, %p313
      %p316 = scmp.ne.s32.totalorder %s301, %s315
      %p317 = scmp.eq.s32.totalorder %s34, 0
      %p318 = por %p316, %p317
      %s320 = sadd.s32 %s319, 1
      %p323 = scmp.eq.s32.totalorder %s28, 1
      %p324 = scmp.ne.s32.totalorder %s319, %s321
      %p325 = scmp.eq.s32.totalorder %s28, 0
      %p326 = por %p324, %p325
      %p327 = scmp.ne.s32.totalorder %s319, %s321
      %p328 = scmp.eq.s32.totalorder %s33, 1
      %p329 = por %p327, %p328
      %p330 = scmp.ne.s32.totalorder %s321, %s322
      %p331 = scmp.eq.s32.totalorder %s33, 0
      %p332 = por %p330, %p331
      %p333 = scmp.ne.s32.totalorder %s321, %s322
      %p334 = scmp.eq.s32.totalorder %s34, 1
      %p335 = por %p333, %p334
      %p337 = scmp.ne.s32.totalorder %s322, %s336
      %p338 = scmp.eq.s32.totalorder %s34, 0
      %p339 = por %p337, %p338
      %s340 = ssub.s32 %s28, %s35
      %p341 = scmp.eq.s32.totalorder %s340, 0
      %s343 = sadd.s32 %s342, 1
      %s344 = scalar_select %p341, %s342, %s343
      %p347 = pneg %p341
      %p348 = scmp.eq.s32.totalorder %s28, 1
      %p349 = por %p347, %p348
      %p350 = scmp.ne.s32.totalorder %s342, %s345
      %p351 = scmp.eq.s32.totalorder %s28, 0
      %p352 = por %p350, %p351
      %p353 = scmp.ne.s32.totalorder %s342, %s345
      %p354 = scmp.eq.s32.totalorder %s33, 1
      %p355 = por %p353, %p354
      %p356 = scmp.ne.s32.totalorder %s345, %s346
      %p357 = scmp.eq.s32.totalorder %s33, 0
      %p358 = por %p356, %p357
      %p359 = scmp.ne.s32.totalorder %s345, %s346
      %p360 = scmp.eq.s32.totalorder %s34, 1
      %p361 = por %p359, %p360
      %p363 = scmp.ne.s32.totalorder %s346, %s362
      %p364 = scmp.eq.s32.totalorder %s34, 0
      %p365 = por %p363, %p364
      %p366 = scmp.le.s32.totalorder 1, %s28
      %p367 = scmp.lt.s32.totalorder %s28, 3
      %p368 = pnand %p366, %p367
      %p369 = pneg %p368
      // Predicated region
      $region9: #{tpu_custom_call.1} parent=5 // pred_check
        _
      $region10: #{tpu_custom_call.1} parent=5 // pred_check_branch
        %371 = sbr.rel (%p368) target = $region12
      $region11: #{tpu_custom_call.1} parent=5 // pred_region
        %s372 = ssub.s32 %s28, 1
        // Predicated region
        $region13: #{tpu_custom_call.1} parent=11 // pred_check
          %p373 = pneg %p101
        $region14: #{tpu_custom_call.1} parent=11 // pred_check_branch
          %375 = sbr.rel (%p373) target = $region16
        $region15: #{tpu_custom_call.1} parent=11 // pred_region
          %s377 = ssub.s32 2048, 2048
          %378 = vsyncadd [#allocation6], %s377
          %s379 = sshll.u32 [#allocation5], 4
          %s380 = int_to_ptr.vmem [resolvable:$true] %s379
          %385 = dma.hbm_to_vmem [thread:$0]  %s2, 2048, %s380, [#allocation6], 128, 128, 8
        $region16: #{tpu_custom_call.1} parent=11 // pred_fallthru
          _
        // Predicated region
        $region17: #{tpu_custom_call.1} parent=11 // pred_check
          %p386 = pneg %p122
        $region18: #{tpu_custom_call.1} parent=11 // pred_check_branch
          %388 = sbr.rel (%p386) target = $region20
        $region19: #{tpu_custom_call.1} parent=11 // pred_region
          _
        $region20: #{tpu_custom_call.1} parent=11 // pred_fallthru
          _
        // Predicated region
        $region21: #{tpu_custom_call.1} parent=11 // pred_check
          %p389 = pneg %p143
        $region22: #{tpu_custom_call.1} parent=11 // pred_check_branch
          %391 = sbr.rel (%p389) target = $region24
        $region23: #{tpu_custom_call.1} parent=11 // pred_region
          _
        $region24: #{tpu_custom_call.1} parent=11 // pred_fallthru
          _
        // Predicated region
        $region25: #{tpu_custom_call.1} parent=11 // pred_check
          %p392 = pneg %p164
        $region26: #{tpu_custom_call.1} parent=11 // pred_check_branch
          %394 = sbr.rel (%p392) target = $region28
        $region27: #{tpu_custom_call.1} parent=11 // pred_region
          _
        $region28: #{tpu_custom_call.1} parent=11 // pred_fallthru
          _
        // Predicated region
        $region29: #{tpu_custom_call.1} parent=11 // pred_check
          %p395 = pneg %p185
        $region30: #{tpu_custom_call.1} parent=11 // pred_check_branch
          %397 = sbr.rel (%p395) target = $region32
        $region31: #{tpu_custom_call.1} parent=11 // pred_region
          _
        $region32: #{tpu_custom_call.1} parent=11 // pred_fallthru
          _
        // Predicated region
        $region33: #{tpu_custom_call.1} parent=11 // pred_check
          %p398 = pneg %p206
        $region34: #{tpu_custom_call.1} parent=11 // pred_check_branch
          %400 = sbr.rel (%p398) target = $region36
        $region35: #{tpu_custom_call.1} parent=11 // pred_region
          %s402 = ssub.s32 2048, 2048
          %403 = vsyncadd [#allocation6], %s402
          %s404 = sshll.u32 [#allocation7], 4
          %s405 = int_to_ptr.vmem [resolvable:$true] %s404
          %410 = dma.hbm_to_vmem [thread:$0]  %s7, 2048, %s405, [#allocation6], 128, 128, 8
        $region36: #{tpu_custom_call.1} parent=11 // pred_fallthru
          _
        // Predicated region
        $region37: #{tpu_custom_call.1} parent=11 // pred_check
          %p411 = pneg %p227
        $region38: #{tpu_custom_call.1} parent=11 // pred_check_branch
          %413 = sbr.rel (%p411) target = $region40
        $region39: #{tpu_custom_call.1} parent=11 // pred_region
          _
        $region40: #{tpu_custom_call.1} parent=11 // pred_fallthru
          _
        // Predicated region
        $region41: #{tpu_custom_call.1} parent=11 // pred_check
          %p414 = pneg %p248
        $region42: #{tpu_custom_call.1} parent=11 // pred_check_branch
          %416 = sbr.rel (%p414) target = $region44
        $region43: #{tpu_custom_call.1} parent=11 // pred_region
          _
        $region44: #{tpu_custom_call.1} parent=11 // pred_fallthru
          _
        // Predicated region
        $region45: #{tpu_custom_call.1} parent=11 // pred_check
          %p417 = pneg %p269
        $region46: #{tpu_custom_call.1} parent=11 // pred_check_branch
          %419 = sbr.rel (%p417) target = $region48
        $region47: #{tpu_custom_call.1} parent=11 // pred_region
          _
        $region48: #{tpu_custom_call.1} parent=11 // pred_fallthru
          _
        // Predicated region
        $region49: #{tpu_custom_call.1} parent=11 // pred_check
          %p420 = pneg %p290
        $region50: #{tpu_custom_call.1} parent=11 // pred_check_branch
          %422 = sbr.rel (%p420) target = $region52
        $region51: #{tpu_custom_call.1} parent=11 // pred_region
          _
        $region52: #{tpu_custom_call.1} parent=11 // pred_fallthru
          _
        // Predicated region
        $region53: #{tpu_custom_call.1} parent=11 // pred_check
          %p423 = pneg %p311
        $region54: #{tpu_custom_call.1} parent=11 // pred_check_branch
          %425 = sbr.rel (%p423) target = $region56
        $region55: #{tpu_custom_call.1} parent=11 // pred_region
          %s427 = ssub.s32 2048, 2048
          %428 = vsyncadd [#allocation9], %s427
          %s429 = sshll.u32 [#allocation8], 4
          %s430 = int_to_ptr.vmem [resolvable:$true] %s429
          %435 = dma.hbm_to_vmem [thread:$0]  %s12, 2048, %s430, [#allocation9], 128, 128, 8
        $region56: #{tpu_custom_call.1} parent=11 // pred_fallthru
          _
        // Predicated region
        $region57: #{tpu_custom_call.1} parent=11 // pred_check
          %p436 = pneg %p332
        $region58: #{tpu_custom_call.1} parent=11 // pred_check_branch
          %438 = sbr.rel (%p436) target = $region60
        $region59: #{tpu_custom_call.1} parent=11 // pred_region
          _
        $region60: #{tpu_custom_call.1} parent=11 // pred_fallthru
          _
      $region12: #{tpu_custom_call.1} parent=5 // pred_fallthru
        _
      %p439 = scmp.lt.s32.totalorder %s28, 2
      // Predicated region
      $region61: #{tpu_custom_call.1} parent=5 // pred_check
        %p440 = pneg %p439
      $region62: #{tpu_custom_call.1} parent=5 // pred_check_branch
        %442 = sbr.rel (%p440) target = $region64
      $region63: #{tpu_custom_call.1} parent=5 // pred_region
        // Predicated region
        $region65: #{tpu_custom_call.1} parent=63 // pred_check
          %p443 = pneg %p48
        $region66: #{tpu_custom_call.1} parent=63 // pred_check_branch
          %445 = sbr.rel (%p443) target = $region68
        $region67: #{tpu_custom_call.1} parent=63 // pred_region
          %p446 = scmp.lt.s32.totalorder %s28, 1
          %s447 = scalar_select %p446, %s28, 1
          %s448 = smul.addr %s447, 8
          %s449 = scalar_lea.vmem %s0, %s448
        $region68: #{tpu_custom_call.1} parent=63 // pred_fallthru
          _
        // Predicated region
        $region69: #{tpu_custom_call.1} parent=63 // pred_check
          %p450 = pneg %p74
        $region70: #{tpu_custom_call.1} parent=63 // pred_check_branch
          %452 = sbr.rel (%p450) target = $region72
        $region71: #{tpu_custom_call.1} parent=63 // pred_region
          %s453 = sand.u32 %s64, 1
          %s454 = scalar_lea.sflag [#allocation3], %s453
          %s455 = sand.u32 %s64, 1
          %s456 = smul.addr %s455, 64
          %s457 = scalar_lea.vmem [#allocation2], %s456
          %s458 = smul.u32 8, %s28
          %s460 = ssub.s32 1024, 1024
          %461 = vsyncadd %s454, %s460
          %s462 = smul.addr %s458, 128
          %s463 = scalar_lea.hbm %s1, %s462
          %s464 = sshll.u32 %s457, 4
          %s465 = int_to_ptr.vmem [resolvable:$true] %s464
          %470 = dma.hbm_to_vmem [thread:$0]  %s463, 1024, %s465, %s454, 128, 128, 8
        $region72: #{tpu_custom_call.1} parent=63 // pred_fallthru
          _
      $region64: #{tpu_custom_call.1} parent=5 // pred_fallthru
        _
      %p471 = scmp.le.s32.totalorder 1, %s28
      %p472 = scmp.lt.s32.totalorder %s28, 3
      %p473 = pnand %p471, %p472
      %p474 = pneg %p473
      // Predicated region
      $region73: #{tpu_custom_call.1} parent=5 // pred_check
        _
      $region74: #{tpu_custom_call.1} parent=5 // pred_check_branch
        %476 = sbr.rel (%p473) target = $region76
      $region75: #{tpu_custom_call.1} parent=5 // pred_region
        %s477 = ssub.s32 %s28, 1
        %s478 = sand.u32 %s67, 1
        %s479 = scalar_lea.sflag [#allocation3], %s478
        %s480 = sand.u32 %s67, 1
        %s481 = smul.addr %s480, 64
        %s482 = scalar_lea.vmem [#allocation2], %s481
        // Predicated region
        $region77: #{tpu_custom_call.1} parent=75 // pred_check
          %p483 = pneg %p80
        $region78: #{tpu_custom_call.1} parent=75 // pred_check_branch
          %485 = sbr.rel (%p483) target = $region80
        $region79: #{tpu_custom_call.1} parent=75 // pred_region
          %486 = dma.done %s479, 1024
        $region80: #{tpu_custom_call.1} parent=75 // pred_fallthru
          _
        // Predicated region
        $region81: #{tpu_custom_call.1} parent=75 // pred_check
          %p487 = pneg %p101
        $region82: #{tpu_custom_call.1} parent=75 // pred_check_branch
          %489 = sbr.rel (%p487) target = $region84
        $region83: #{tpu_custom_call.1} parent=75 // pred_region
          %490 = dma.done [#allocation6], 2048
        $region84: #{tpu_custom_call.1} parent=75 // pred_fallthru
          _
        // Predicated region
        $region85: #{tpu_custom_call.1} parent=75 // pred_check
          %p491 = pneg %p206
        $region86: #{tpu_custom_call.1} parent=75 // pred_check_branch
          %493 = sbr.rel (%p491) target = $region88
        $region87: #{tpu_custom_call.1} parent=75 // pred_region
          %494 = dma.done [#allocation6], 2048
        $region88: #{tpu_custom_call.1} parent=75 // pred_fallthru
          _
        // Predicated region
        $region89: #{tpu_custom_call.1} parent=75 // pred_check
          %p495 = pneg %p311
        $region90: #{tpu_custom_call.1} parent=75 // pred_check_branch
          %497 = sbr.rel (%p495) target = $region92
        $region91: #{tpu_custom_call.1} parent=75 // pred_region
          %498 = dma.done [#allocation9], 2048
        $region92: #{tpu_custom_call.1} parent=75 // pred_fallthru
          _
        %p499 = scmp.lt.s32.totalorder %s33, 1
        %s500 = scalar_select %p499, %s33, 1
        %s501 = smul.addr %s500, 8
        %s502 = scalar_lea.vmem %s0, %s501
        %p503 = pneg %p54
        %p504 = pneg %p51
        %s505 = sand.u32 %s67, 1
        %s506 = scalar_lea.sflag [#allocation3], %s505
        %s507 = sand.u32 %s67, 1
        %s508 = smul.addr %s507, 64
        %s509 = scalar_lea.vmem [#allocation2], %s508
        %p510 = pneg %p80
        %p511 = pneg %p77
        %p512 = pneg %p101
        %p513 = pneg %p98
        %p514 = pneg %p122
        %p515 = pneg %p119
        %p516 = pneg %p143
        %p517 = pneg %p140
        %p518 = pneg %p164
        %p519 = pneg %p161
        %p520 = pneg %p185
        %p521 = pneg %p182
        %p522 = pneg %p206
        %p523 = pneg %p203
        %p524 = pneg %p227
        %p525 = pneg %p224
        %p526 = pneg %p248
        %p527 = pneg %p245
        %p528 = pneg %p269
        %p529 = pneg %p266
        %p530 = pneg %p290
        %p531 = pneg %p287
        %p532 = pneg %p311
        %p533 = pneg %p308
        %p534 = pneg %p332
        %p535 = pneg %p329
        %p536 = pneg %p358
        %p537 = pneg %p355
        %s538 = sand.u32 %s345, 1
        %s539 = scalar_lea.sflag [#allocation4], %s538
        %s540 = sand.u32 %s345, 1
        %s541 = smul.addr %s540, 64
        %s542 = scalar_lea.vmem [#allocation10], %s541
        %p543 = scmp.lt.s32.totalorder %s33, 1
        %s544 = scalar_select %p543, %s33, 1
        %s545 = smul.addr %s544, 8
        %s546 = scalar_lea.vmem %s0, %s545
        %s547 = smul.u32 8, %s33
        %s548 = smul.u32 8, %s33
        %v549 = vld [vmem:[%s546] sm:$0xff]
        %vm550 = vcmp.gt.s32.totalorder %v549, 1
        %v551 = vsel %vm550, %v549, 1
        %v552 = vcvt.s32.f32 %v551
        %v553 = vrcp.pop %v552
        %v554 = vmul.f32 1.0, %v553
        %v556 = vcombine.high %v554, %v554
        %v558 = vunpack.c.l.s4 1966171168
        %v559 = vunpack.c.0.s8 %v558
        %v560 = vlaneseq
        %v561 = vshrl.u32 %v560, 7
        %v562 = vsub.s32 %v559, %v561
        %v563 = vrot.slane %v554, %v562
        %v565 = vunpack.c.l.s4 1966171168
        %v566 = vunpack.c.0.s8 %v565
        %v567 = vlaneseq
        %v568 = vshrl.u32 %v567, 7
        %v569 = vsub.s32 %v566, %v568
        %v570 = vrot.slane %v556, %v569
        %v571 = vcombine.high %v563, %v563
        %v572 = vcombine.high %v570, %v570
        %v574 = vunpack.c.l.s4 1966171168
        %v575 = vunpack.c.0.s8 %v574
        %v576 = vlaneseq
        %v577 = vshrl.u32 %v576, 7
        %v578 = vsub.s32 %v575, %v577
        %v579 = vrot.slane %v563, %v578
        %v581 = vunpack.c.l.s4 1966171168
        %v582 = vunpack.c.0.s8 %v581
        %v583 = vlaneseq
        %v584 = vshrl.u32 %v583, 7
        %v585 = vsub.s32 %v582, %v584
        %v586 = vrot.slane %v570, %v585
        %v588 = vunpack.c.l.s4 1966171168
        %v589 = vunpack.c.0.s8 %v588
        %v590 = vlaneseq
        %v591 = vshrl.u32 %v590, 7
        %v592 = vsub.s32 %v589, %v591
        %v593 = vrot.slane %v571, %v592
        %v595 = vunpack.c.l.s4 1966171168
        %v596 = vunpack.c.0.s8 %v595
        %v597 = vlaneseq
        %v598 = vshrl.u32 %v597, 7
        %v599 = vsub.s32 %v596, %v598
        %v600 = vrot.slane %v572, %v599
        %v601 = vcombine.high %v579, %v579
        %v602 = vcombine.high %v586, %v586
        %v603 = vcombine.high %v593, %v593
        %v604 = vcombine.high %v600, %v600
        %v605 = vlaneseq
        %v606 = vshrl.u32 %v605, 7
        %v607 = vcombine.high %v549, %v549
        %v609 = vunpack.c.l.s4 1966171168
        %v610 = vunpack.c.0.s8 %v609
        %v611 = vlaneseq
        %v612 = vshrl.u32 %v611, 7
        %v613 = vsub.s32 %v610, %v612
        %v614 = vrot.slane %v549, %v613
        %v616 = vunpack.c.l.s4 1966171168
        %v617 = vunpack.c.0.s8 %v616
        %v618 = vlaneseq
        %v619 = vshrl.u32 %v618, 7
        %v620 = vsub.s32 %v617, %v619
        %v621 = vrot.slane %v607, %v620
        %v622 = vcombine.high %v614, %v614
        %v623 = vcombine.high %v621, %v621
        %v625 = vunpack.c.l.s4 1966171168
        %v626 = vunpack.c.0.s8 %v625
        %v627 = vlaneseq
        %v628 = vshrl.u32 %v627, 7
        %v629 = vsub.s32 %v626, %v628
        %v630 = vrot.slane %v614, %v629
        %v632 = vunpack.c.l.s4 1966171168
        %v633 = vunpack.c.0.s8 %v632
        %v634 = vlaneseq
        %v635 = vshrl.u32 %v634, 7
        %v636 = vsub.s32 %v633, %v635
        %v637 = vrot.slane %v621, %v636
        %v639 = vunpack.c.l.s4 1966171168
        %v640 = vunpack.c.0.s8 %v639
        %v641 = vlaneseq
        %v642 = vshrl.u32 %v641, 7
        %v643 = vsub.s32 %v640, %v642
        %v644 = vrot.slane %v622, %v643
        %v646 = vunpack.c.l.s4 1966171168
        %v647 = vunpack.c.0.s8 %v646
        %v648 = vlaneseq
        %v649 = vshrl.u32 %v648, 7
        %v650 = vsub.s32 %v647, %v649
        %v651 = vrot.slane %v623, %v650
        %v652 = vcombine.high %v630, %v630
        %v653 = vcombine.high %v637, %v637
        %v654 = vcombine.high %v644, %v644
        %v655 = vcombine.high %v651, %v651
        %v656 = vlaneseq
        %v657 = vshrl.u32 %v656, 7
        %v658 = vsub.s32 0, %v657
        %v659 = vrot.slane %v630, %v658
        %v660 = vlaneseq
        %v661 = vshrl.u32 %v660, 7
        %v662 = vsub.s32 0, %v661
        %v663 = vrot.slane %v644, %v662
        %v664 = vlaneseq
        %v665 = vshrl.u32 %v664, 7
        %v666 = vsub.s32 0, %v665
        %v667 = vrot.slane %v652, %v666
        %v668 = vlaneseq
        %v669 = vshrl.u32 %v668, 7
        %v670 = vsub.s32 0, %v669
        %v671 = vrot.slane %v654, %v670
        %v672 = vlaneseq
        %v673 = vshrl.u32 %v672, 7
        %v674 = vsub.s32 0, %v673
        %v675 = vrot.slane %v637, %v674
        %v676 = vlaneseq
        %v677 = vshrl.u32 %v676, 7
        %v678 = vsub.s32 0, %v677
        %v679 = vrot.slane %v651, %v678
        %v680 = vlaneseq
        %v681 = vshrl.u32 %v680, 7
        %v682 = vsub.s32 0, %v681
        %v683 = vrot.slane %v653, %v682
        %v684 = vlaneseq
        %v685 = vshrl.u32 %v684, 7
        %v686 = vsub.s32 0, %v685
        %v687 = vrot.slane %v655, %v686
        %vm688 = vcmp.lt.s32.totalorder %v606, %v659
        %vm689 = vcmp.lt.s32.totalorder %v606, %v663
        %vm690 = vcmp.lt.s32.totalorder %v606, %v667
        %vm691 = vcmp.lt.s32.totalorder %v606, %v671
        %vm692 = vcmp.lt.s32.totalorder %v606, %v675
        %vm693 = vcmp.lt.s32.totalorder %v606, %v679
        %vm694 = vcmp.lt.s32.totalorder %v606, %v683
        %vm695 = vcmp.lt.s32.totalorder %v606, %v687
        %v696 = vsel %vm688, 1, 0
        %v697 = vsel %vm689, 1, 0
        %v698 = vsel %vm690, 1, 0
        %v699 = vsel %vm691, 1, 0
        %v700 = vsel %vm692, 1, 0
        %v701 = vsel %vm693, 1, 0
        %v702 = vsel %vm694, 1, 0
        %v703 = vsel %vm695, 1, 0
        %v704 = vcvt.s32.f32 %v696
        %v705 = vcvt.s32.f32 %v697
        %v706 = vcvt.s32.f32 %v698
        %v707 = vcvt.s32.f32 %v699
        %v708 = vcvt.s32.f32 %v700
        %v709 = vcvt.s32.f32 %v701
        %v710 = vcvt.s32.f32 %v702
        %v711 = vcvt.s32.f32 %v703
        %v712 = vld [vmem:[%s482] sm:$0xff]
        %v713 = vld [vmem:[%s482 + $0x8] sm:$0xff]
        %v714 = vld [vmem:[%s482 + $0x10] sm:$0xff]
        %v715 = vld [vmem:[%s482 + $0x18] sm:$0xff]
        %v716 = vld [vmem:[%s482 + $0x20] sm:$0xff]
        %v717 = vld [vmem:[%s482 + $0x28] sm:$0xff]
        %v718 = vld [vmem:[%s482 + $0x30] sm:$0xff]
        %v719 = vld [vmem:[%s482 + $0x38] sm:$0xff]
        %v720 = vld [vmem:[#allocation5] sm:$0xff]
        %v721 = vld [vmem:[#allocation5 + $0x8] sm:$0xff]
        %v722 = vld [vmem:[#allocation5 + $0x10] sm:$0xff]
        %v723 = vld [vmem:[#allocation5 + $0x18] sm:$0xff]
        %v724 = vld [vmem:[#allocation5 + $0x20] sm:$0xff]
        %v725 = vld [vmem:[#allocation5 + $0x28] sm:$0xff]
        %v726 = vld [vmem:[#allocation5 + $0x30] sm:$0xff]
        %v727 = vld [vmem:[#allocation5 + $0x38] sm:$0xff]
        %v728 = vld [vmem:[#allocation5 + $0x40] sm:$0xff]
        %v729 = vld [vmem:[#allocation5 + $0x48] sm:$0xff]
        %v730 = vld [vmem:[#allocation5 + $0x50] sm:$0xff]
        %v731 = vld [vmem:[#allocation5 + $0x58] sm:$0xff]
        %v732 = vld [vmem:[#allocation5 + $0x60] sm:$0xff]
        %v733 = vld [vmem:[#allocation5 + $0x68] sm:$0xff]
        %v734 = vld [vmem:[#allocation5 + $0x70] sm:$0xff]
        %v735 = vld [vmem:[#allocation5 + $0x78] sm:$0xff]
        %v736 = vld [vmem:[%s3] sm:$0x1]
        %v737 = vld [vmem:[%s4] sm:$0x1]
        %v738 = vld [vmem:[%s5] sm:$0x1]
        %v739 = vld [vmem:[%s6] sm:$0x1]
        %v741 = vlaneseq
        %v742 = vshrl.u32 %v741, 7
        %v743 = vsub.s32 0, %v742
        %v744 = vrot.slane %v736, %v743
        %746 = vmatprep.subr.mxu0 0.0
        %747 = vmatpush1.msra.mxu0 %v720
        %748 = vmatprep.subr.mxu0 0.0
        %749 = vmatpush1.msra.mxu0 %v721
        %750 = vmatprep.subr.mxu0 0.0
        %751 = vmatpush1.msra.mxu0 %v722
        %752 = vmatprep.subr.mxu0 0.0
        %753 = vmatpush1.msra.mxu0 %v723
        %754 = vmatprep.subr.mxu0 0.0
        %755 = vmatpush1.msra.mxu0 %v724
        %756 = vmatprep.subr.mxu0 0.0
        %757 = vmatpush1.msra.mxu0 %v725
        %758 = vmatprep.subr.mxu0 0.0
        %759 = vmatpush1.msra.mxu0 %v726
        %760 = vmatprep.subr.mxu0 0.0
        %761 = vmatpush1.msra.mxu0 %v727
        %762 = vmatprep.subr.mxu0 0.0
        %763 = vmatpush1.msra.mxu0 %v728
        %764 = vmatprep.subr.mxu0 0.0
        %765 = vmatpush1.msra.mxu0 %v729
        %766 = vmatprep.subr.mxu0 0.0
        %767 = vmatpush1.msra.mxu0 %v730
        %768 = vmatprep.subr.mxu0 0.0
        %769 = vmatpush1.msra.mxu0 %v731
        %770 = vmatprep.subr.mxu0 0.0
        %771 = vmatpush1.msra.mxu0 %v732
        %772 = vmatprep.subr.mxu0 0.0
        %773 = vmatpush1.msra.mxu0 %v733
        %774 = vmatprep.subr.mxu0 0.0
        %775 = vmatpush1.msra.mxu0 %v734
        %776 = vmatprep.subr.mxu0 0.0
        %777 = vmatpush1.msra.mxu0 %v735
        %778 = vmatprep.subr.mxu0 0.0
        %779 = vmatpush1.msra.mxu0 0.0
        %780 = vmatprep.subr.mxu0 0.0
        %781 = vmatpush1.msra.mxu0 0.0
        %782 = vmatprep.subr.mxu0 0.0
        %783 = vmatpush1.msra.mxu0 0.0
        %784 = vmatprep.subr.mxu0 0.0
        %785 = vmatpush1.msra.mxu0 0.0
        %786 = vmatprep.subr.mxu0 0.0
        %787 = vmatpush1.msra.mxu0 0.0
        %788 = vmatprep.subr.mxu0 0.0
        %789 = vmatpush1.msra.mxu0 0.0
        %790 = vmatprep.subr.mxu0 0.0
        %791 = vmatpush1.msra.mxu0 0.0
        %792 = vmatprep.subr.mxu0 0.0
        %793 = vmatpush1.msra.mxu0 0.0
        %794 = vmatprep.subr.mxu0 0.0
        %795 = vmatpush1.msra.mxu0 0.0
        %796 = vmatprep.subr.mxu0 0.0
        %797 = vmatpush1.msra.mxu0 0.0
        %798 = vmatprep.subr.mxu0 0.0
        %799 = vmatpush1.msra.mxu0 0.0
        %800 = vmatprep.subr.mxu0 0.0
        %801 = vmatpush1.msra.mxu0 0.0
        %802 = vmatprep.subr.mxu0 0.0
        %803 = vmatpush1.msra.mxu0 0.0
        %804 = vmatprep.subr.mxu0 0.0
        %805 = vmatpush1.msra.mxu0 0.0
        %806 = vmatprep.subr.mxu0 0.0
        %807 = vmatpush1.msra.mxu0 0.0
        %808 = vmatprep.subr.mxu0 0.0
        %809 = vmatpush1.msra.mxu0 0.0
        %810 = vmatprep.mubr.f32.mxu0 0.0
        %811 = vmatmul.mubr.f32.gmra.mrb[0].mxu0 %v712
        %v812 = vpop.f32.mrb[0].mxu0
        %v813 = vadd.f32 %v744, %v812
        %v814 = vpop.f32.mrb[0].mxu0
        %815 = vmatprep.mubr.f32.mxu0 0.0
        %816 = vmatmul.mubr.f32.gmra.mrb[0].mxu0 %v713
        %v817 = vpop.f32.mrb[0].mxu0
        %v818 = vadd.f32 %v744, %v817
        %v819 = vpop.f32.mrb[0].mxu0
        %820 = vmatprep.mubr.f32.mxu0 0.0
        %821 = vmatmul.mubr.f32.gmra.mrb[0].mxu0 %v714
        %v822 = vpop.f32.mrb[0].mxu0
        %v823 = vadd.f32 %v744, %v822
        %v824 = vpop.f32.mrb[0].mxu0
        %825 = vmatprep.mubr.f32.mxu0 0.0
        %826 = vmatmul.mubr.f32.gmra.mrb[0].mxu0 %v715
        %v827 = vpop.f32.mrb[0].mxu0
        %v828 = vadd.f32 %v744, %v827
        %v829 = vpop.f32.mrb[0].mxu0
        %830 = vmatprep.mubr.f32.mxu0 0.0
        %831 = vmatmul.mubr.f32.gmra.mrb[0].mxu0 %v716
        %v832 = vpop.f32.mrb[0].mxu0
        %v833 = vadd.f32 %v744, %v832
        %v834 = vpop.f32.mrb[0].mxu0
        %835 = vmatprep.mubr.f32.mxu0 0.0
        %836 = vmatmul.mubr.f32.gmra.mrb[0].mxu0 %v717
        %v837 = vpop.f32.mrb[0].mxu0
        %v838 = vadd.f32 %v744, %v837
        %v839 = vpop.f32.mrb[0].mxu0
        %840 = vmatprep.mubr.f32.mxu0 0.0
        %841 = vmatmul.mubr.f32.gmra.mrb[0].mxu0 %v718
        %v842 = vpop.f32.mrb[0].mxu0
        %v843 = vadd.f32 %v744, %v842
        %v844 = vpop.f32.mrb[0].mxu0
        %845 = vmatprep.mubr.f32.mxu0 0.0
        %846 = vmatmul.mubr.f32.gmra.mrb[0].mxu0 %v719
        %v847 = vpop.f32.mrb[0].mxu0
        %v848 = vadd.f32 %v744, %v847
        %v849 = vpop.f32.mrb[0].mxu0
        %850 = vdwg.mxu0
        %852 = vset.pattern.permute.xlu0 0
        %853 = vperm.xlu0 %852, %v704
        %v854 = vpop.permute.xlu0 %853
        %857 = vset.pattern.permute.xlu0 0
        %858 = vperm.xlu0 %857, %v705
        %v859 = vpop.permute.xlu0 %858
        %862 = vset.pattern.permute.xlu0 0
        %863 = vperm.xlu0 %862, %v706
        %v864 = vpop.permute.xlu0 %863
        %867 = vset.pattern.permute.xlu0 0
        %868 = vperm.xlu0 %867, %v707
        %v869 = vpop.permute.xlu0 %868
        %872 = vset.pattern.permute.xlu0 0
        %873 = vperm.xlu0 %872, %v708
        %v874 = vpop.permute.xlu0 %873
        %877 = vset.pattern.permute.xlu0 0
        %878 = vperm.xlu0 %877, %v709
        %v879 = vpop.permute.xlu0 %878
        %882 = vset.pattern.permute.xlu0 0
        %883 = vperm.xlu0 %882, %v710
        %v884 = vpop.permute.xlu0 %883
        %887 = vset.pattern.permute.xlu0 0
        %888 = vperm.xlu0 %887, %v711
        %v889 = vpop.permute.xlu0 %888
        %v891 = vmul.f32 %v813, %v854
        %v892 = vmul.f32 %v818, %v859
        %v893 = vmul.f32 %v823, %v864
        %v894 = vmul.f32 %v828, %v869
        %v895 = vmul.f32 %v833, %v874
        %v896 = vmul.f32 %v838, %v879
        %v897 = vmul.f32 %v843, %v884
        %v898 = vmul.f32 %v848, %v889
        %v899 = vrot.slane %v891, 4
        %v900 = vadd.f32 %v891, %v899
        %v901 = vrot.slane %v900, 2
        %v902 = vadd.f32 %v900, %v901
        %v903 = vrot.slane %v902, 1
        %v904 = vadd.f32 %v902, %v903
        %v905 = vrot.slane %v892, 4
        %v906 = vadd.f32 %v892, %v905
        %v907 = vrot.slane %v906, 2
        %v908 = vadd.f32 %v906, %v907
        %v909 = vrot.slane %v908, 1
        %v910 = vadd.f32 %v908, %v909
        %v911 = vrot.slane %v893, 4
        %v912 = vadd.f32 %v893, %v911
        %v913 = vrot.slane %v912, 2
        %v914 = vadd.f32 %v912, %v913
        %v915 = vrot.slane %v914, 1
        %v916 = vadd.f32 %v914, %v915
        %v917 = vrot.slane %v894, 4
        %v918 = vadd.f32 %v894, %v917
        %v919 = vrot.slane %v918, 2
        %v920 = vadd.f32 %v918, %v919
        %v921 = vrot.slane %v920, 1
        %v922 = vadd.f32 %v920, %v921
        %v923 = vrot.slane %v895, 4
        %v924 = vadd.f32 %v895, %v923
        %v925 = vrot.slane %v924, 2
        %v926 = vadd.f32 %v924, %v925
        %v927 = vrot.slane %v926, 1
        %v928 = vadd.f32 %v926, %v927
        %v929 = vrot.slane %v896, 4
        %v930 = vadd.f32 %v896, %v929
        %v931 = vrot.slane %v930, 2
        %v932 = vadd.f32 %v930, %v931
        %v933 = vrot.slane %v932, 1
        %v934 = vadd.f32 %v932, %v933
        %v935 = vrot.slane %v897, 4
        %v936 = vadd.f32 %v897, %v935
        %v937 = vrot.slane %v936, 2
        %v938 = vadd.f32 %v936, %v937
        %v939 = vrot.slane %v938, 1
        %v940 = vadd.f32 %v938, %v939
        %v941 = vrot.slane %v898, 4
        %v942 = vadd.f32 %v898, %v941
        %v943 = vrot.slane %v942, 2
        %v944 = vadd.f32 %v942, %v943
        %v945 = vrot.slane %v944, 1
        %v946 = vadd.f32 %v944, %v945
        %947 = vset.pattern.permute.xlu0 0
        %948 = vperm.xlu0 %947, %v579
        %v949 = vpop.permute.xlu0 %948
        %v951 = vlaneseq
        %v952 = vshrl.u32 %v951, 7
        %v953 = vsub.s32 0, %v952
        %v954 = vrot.slane %v949, %v953
        %955 = vset.pattern.permute.xlu0 0
        %956 = vperm.xlu0 %955, %v593
        %v957 = vpop.permute.xlu0 %956
        %v959 = vlaneseq
        %v960 = vshrl.u32 %v959, 7
        %v961 = vsub.s32 0, %v960
        %v962 = vrot.slane %v957, %v961
        %963 = vset.pattern.permute.xlu0 0
        %964 = vperm.xlu0 %963, %v601
        %v965 = vpop.permute.xlu0 %964
        %v967 = vlaneseq
        %v968 = vshrl.u32 %v967, 7
        %v969 = vsub.s32 0, %v968
        %v970 = vrot.slane %v965, %v969
        %971 = vset.pattern.permute.xlu0 0
        %972 = vperm.xlu0 %971, %v603
        %v973 = vpop.permute.xlu0 %972
        %v975 = vlaneseq
        %v976 = vshrl.u32 %v975, 7
        %v977 = vsub.s32 0, %v976
        %v978 = vrot.slane %v973, %v977
        %979 = vset.pattern.permute.xlu0 0
        %980 = vperm.xlu0 %979, %v586
        %v981 = vpop.permute.xlu0 %980
        %v983 = vlaneseq
        %v984 = vshrl.u32 %v983, 7
        %v985 = vsub.s32 0, %v984
        %v986 = vrot.slane %v981, %v985
        %987 = vset.pattern.permute.xlu0 0
        %988 = vperm.xlu0 %987, %v600
        %v989 = vpop.permute.xlu0 %988
        %v991 = vlaneseq
        %v992 = vshrl.u32 %v991, 7
        %v993 = vsub.s32 0, %v992
        %v994 = vrot.slane %v989, %v993
        %995 = vset.pattern.permute.xlu0 0
        %996 = vperm.xlu0 %995, %v602
        %v997 = vpop.permute.xlu0 %996
        %v999 = vlaneseq
        %v1000 = vshrl.u32 %v999, 7
        %v1001 = vsub.s32 0, %v1000
        %v1002 = vrot.slane %v997, %v1001
        %1003 = vset.pattern.permute.xlu0 0
        %1004 = vperm.xlu0 %1003, %v604
        %v1005 = vpop.permute.xlu0 %1004
        %v1007 = vlaneseq
        %v1008 = vshrl.u32 %v1007, 7
        %v1009 = vsub.s32 0, %v1008
        %v1010 = vrot.slane %v1005, %v1009
        %v1011 = vmul.f32 %v904, %v954
        %v1012 = vmul.f32 %v910, %v962
        %v1013 = vmul.f32 %v916, %v970
        %v1014 = vmul.f32 %v922, %v978
        %v1015 = vmul.f32 %v928, %v986
        %v1016 = vmul.f32 %v934, %v994
        %v1017 = vmul.f32 %v940, %v1002
        %v1018 = vmul.f32 %v946, %v1010
        %v1019 = vmul.f32 %v1011, %v739
        %v1020 = vmul.f32 %v1012, %v739
        %v1021 = vmul.f32 %v1013, %v739
        %v1022 = vmul.f32 %v1014, %v739
        %v1023 = vmul.f32 %v1015, %v739
        %v1024 = vmul.f32 %v1016, %v739
        %v1025 = vmul.f32 %v1017, %v739
        %v1026 = vmul.f32 %v1018, %v739
        %v1027 = vlaneseq
        %v1028 = vshrl.u32 %v1027, 7
        %v1029 = vsub.s32 0, %v1028
        %v1030 = vrot.slane %v1019, %v1029
        %v1031 = vlaneseq
        %v1032 = vshrl.u32 %v1031, 7
        %v1033 = vsub.s32 0, %v1032
        %v1034 = vrot.slane %v1020, %v1033
        %v1035 = vlaneseq
        %v1036 = vshrl.u32 %v1035, 7
        %v1037 = vsub.s32 0, %v1036
        %v1038 = vrot.slane %v1021, %v1037
        %v1039 = vlaneseq
        %v1040 = vshrl.u32 %v1039, 7
        %v1041 = vsub.s32 0, %v1040
        %v1042 = vrot.slane %v1022, %v1041
        %v1043 = vlaneseq
        %v1044 = vshrl.u32 %v1043, 7
        %v1045 = vsub.s32 0, %v1044
        %v1046 = vrot.slane %v1023, %v1045
        %v1047 = vlaneseq
        %v1048 = vshrl.u32 %v1047, 7
        %v1049 = vsub.s32 0, %v1048
        %v1050 = vrot.slane %v1024, %v1049
        %v1051 = vlaneseq
        %v1052 = vshrl.u32 %v1051, 7
        %v1053 = vsub.s32 0, %v1052
        %v1054 = vrot.slane %v1025, %v1053
        %v1055 = vlaneseq
        %v1056 = vshrl.u32 %v1055, 7
        %v1057 = vsub.s32 0, %v1056
        %v1058 = vrot.slane %v1026, %v1057
        %v1059 = vsub.f32 %v813, %v1030
        %v1060 = vsub.f32 %v818, %v1034
        %v1061 = vsub.f32 %v823, %v1038
        %v1062 = vsub.f32 %v828, %v1042
        %v1063 = vsub.f32 %v833, %v1046
        %v1064 = vsub.f32 %v838, %v1050
        %v1065 = vsub.f32 %v843, %v1054
        %v1066 = vsub.f32 %v848, %v1058
        %v1067 = vmul.f32 %v1059, %v1059
        %v1068 = vmul.f32 %v1060, %v1060
        %v1069 = vmul.f32 %v1061, %v1061
        %v1070 = vmul.f32 %v1062, %v1062
        %v1071 = vmul.f32 %v1063, %v1063
        %v1072 = vmul.f32 %v1064, %v1064
        %v1073 = vmul.f32 %v1065, %v1065
        %v1074 = vmul.f32 %v1066, %v1066
        %v1075 = vmul.f32 %v1067, %v854
        %v1076 = vmul.f32 %v1068, %v859
        %v1077 = vmul.f32 %v1069, %v864
        %v1078 = vmul.f32 %v1070, %v869
        %v1079 = vmul.f32 %v1071, %v874
        %v1080 = vmul.f32 %v1072, %v879
        %v1081 = vmul.f32 %v1073, %v884
        %v1082 = vmul.f32 %v1074, %v889
        %v1083 = vrot.slane %v1075, 4
        %v1084 = vadd.f32 %v1075, %v1083
        %v1085 = vrot.slane %v1084, 2
        %v1086 = vadd.f32 %v1084, %v1085
        %v1087 = vrot.slane %v1086, 1
        %v1088 = vadd.f32 %v1086, %v1087
        %v1089 = vrot.slane %v1076, 4
        %v1090 = vadd.f32 %v1076, %v1089
        %v1091 = vrot.slane %v1090, 2
        %v1092 = vadd.f32 %v1090, %v1091
        %v1093 = vrot.slane %v1092, 1
        %v1094 = vadd.f32 %v1092, %v1093
        %v1095 = vrot.slane %v1077, 4
        %v1096 = vadd.f32 %v1077, %v1095
        %v1097 = vrot.slane %v1096, 2
        %v1098 = vadd.f32 %v1096, %v1097
        %v1099 = vrot.slane %v1098, 1
        %v1100 = vadd.f32 %v1098, %v1099
        %v1101 = vrot.slane %v1078, 4
        %v1102 = vadd.f32 %v1078, %v1101
        %v1103 = vrot.slane %v1102, 2
        %v1104 = vadd.f32 %v1102, %v1103
        %v1105 = vrot.slane %v1104, 1
        %v1106 = vadd.f32 %v1104, %v1105
        %v1107 = vrot.slane %v1079, 4
        %v1108 = vadd.f32 %v1079, %v1107
        %v1109 = vrot.slane %v1108, 2
        %v1110 = vadd.f32 %v1108, %v1109
        %v1111 = vrot.slane %v1110, 1
        %v1112 = vadd.f32 %v1110, %v1111
        %v1113 = vrot.slane %v1080, 4
        %v1114 = vadd.f32 %v1080, %v1113
        %v1115 = vrot.slane %v1114, 2
        %v1116 = vadd.f32 %v1114, %v1115
        %v1117 = vrot.slane %v1116, 1
        %v1118 = vadd.f32 %v1116, %v1117
        %v1119 = vrot.slane %v1081, 4
        %v1120 = vadd.f32 %v1081, %v1119
        %v1121 = vrot.slane %v1120, 2
        %v1122 = vadd.f32 %v1120, %v1121
        %v1123 = vrot.slane %v1122, 1
        %v1124 = vadd.f32 %v1122, %v1123
        %v1125 = vrot.slane %v1082, 4
        %v1126 = vadd.f32 %v1082, %v1125
        %v1127 = vrot.slane %v1126, 2
        %v1128 = vadd.f32 %v1126, %v1127
        %v1129 = vrot.slane %v1128, 1
        %v1130 = vadd.f32 %v1128, %v1129
        %v1131 = vmul.f32 %v1088, %v954
        %v1132 = vmul.f32 %v1094, %v962
        %v1133 = vmul.f32 %v1100, %v970
        %v1134 = vmul.f32 %v1106, %v978
        %v1135 = vmul.f32 %v1112, %v986
        %v1136 = vmul.f32 %v1118, %v994
        %v1137 = vmul.f32 %v1124, %v1002
        %v1138 = vmul.f32 %v1130, %v1010
        %v1139 = vadd.f32 %v1131, 1e-06
        %v1140 = vadd.f32 %v1132, 1e-06
        %v1141 = vadd.f32 %v1133, 1e-06
        %v1142 = vadd.f32 %v1134, 1e-06
        %v1143 = vadd.f32 %v1135, 1e-06
        %v1144 = vadd.f32 %v1136, 1e-06
        %v1145 = vadd.f32 %v1137, 1e-06
        %v1146 = vadd.f32 %v1138, 1e-06
        %v1147 = vrsqrt.pop %v1139
        %v1148 = vrsqrt.pop %v1140
        %v1149 = vrsqrt.pop %v1141
        %v1150 = vrsqrt.pop %v1142
        %v1151 = vrsqrt.pop %v1143
        %v1152 = vrsqrt.pop %v1144
        %v1153 = vrsqrt.pop %v1145
        %v1154 = vrsqrt.pop %v1146
        %v1155 = vmul.f32 %v737, %v1147
        %v1156 = vmul.f32 %v737, %v1148
        %v1157 = vmul.f32 %v737, %v1149
        %v1158 = vmul.f32 %v737, %v1150
        %v1159 = vmul.f32 %v737, %v1151
        %v1160 = vmul.f32 %v737, %v1152
        %v1161 = vmul.f32 %v737, %v1153
        %v1162 = vmul.f32 %v737, %v1154
        %v1171 = vlaneseq
        %v1172 = vshrl.u32 %v1171, 7
        %v1173 = vsub.s32 0, %v1172
        %v1174 = vrot.slane %v1155, %v1173
        %v1175 = vlaneseq
        %v1176 = vshrl.u32 %v1175, 7
        %v1177 = vsub.s32 0, %v1176
        %v1178 = vrot.slane %v1156, %v1177
        %v1179 = vlaneseq
        %v1180 = vshrl.u32 %v1179, 7
        %v1181 = vsub.s32 0, %v1180
        %v1182 = vrot.slane %v1157, %v1181
        %v1183 = vlaneseq
        %v1184 = vshrl.u32 %v1183, 7
        %v1185 = vsub.s32 0, %v1184
        %v1186 = vrot.slane %v1158, %v1185
        %v1187 = vlaneseq
        %v1188 = vshrl.u32 %v1187, 7
        %v1189 = vsub.s32 0, %v1188
        %v1190 = vrot.slane %v1159, %v1189
        %v1191 = vlaneseq
        %v1192 = vshrl.u32 %v1191, 7
        %v1193 = vsub.s32 0, %v1192
        %v1194 = vrot.slane %v1160, %v1193
        %v1195 = vlaneseq
        %v1196 = vshrl.u32 %v1195, 7
        %v1197 = vsub.s32 0, %v1196
        %v1198 = vrot.slane %v1161, %v1197
        %v1199 = vlaneseq
        %v1200 = vshrl.u32 %v1199, 7
        %v1201 = vsub.s32 0, %v1200
        %v1202 = vrot.slane %v1162, %v1201
        %v1211 = vmul.f32 %v1059, %v1174
        %v1212 = vmul.f32 %v1060, %v1178
        %v1213 = vmul.f32 %v1061, %v1182
        %v1214 = vmul.f32 %v1062, %v1186
        %v1215 = vmul.f32 %v1063, %v1190
        %v1216 = vmul.f32 %v1064, %v1194
        %v1217 = vmul.f32 %v1065, %v1198
        %v1218 = vmul.f32 %v1066, %v1202
        %v1220 = vlaneseq
        %v1221 = vshrl.u32 %v1220, 7
        %v1222 = vsub.s32 0, %v1221
        %v1223 = vrot.slane %v738, %v1222
        %v1225 = vadd.f32 %v1211, %v1223
        %v1226 = vadd.f32 %v1212, %v1223
        %v1227 = vadd.f32 %v1213, %v1223
        %v1228 = vadd.f32 %v1214, %v1223
        %v1229 = vadd.f32 %v1215, %v1223
        %v1230 = vadd.f32 %v1216, %v1223
        %v1231 = vadd.f32 %v1217, %v1223
        %v1232 = vadd.f32 %v1218, %v1223
        %v1233 = vmax.f32 %v1225, 0.0
        %v1234 = vmax.f32 %v1226, 0.0
        %v1235 = vmax.f32 %v1227, 0.0
        %v1236 = vmax.f32 %v1228, 0.0
        %v1237 = vmax.f32 %v1229, 0.0
        %v1238 = vmax.f32 %v1230, 0.0
        %v1239 = vmax.f32 %v1231, 0.0
        %v1240 = vmax.f32 %v1232, 0.0
        %v1241 = vld [vmem:[#allocation7] sm:$0xff]
        %v1242 = vld [vmem:[#allocation7 + $0x8] sm:$0xff]
        %v1243 = vld [vmem:[#allocation7 + $0x10] sm:$0xff]
        %v1244 = vld [vmem:[#allocation7 + $0x18] sm:$0xff]
        %v1245 = vld [vmem:[#allocation7 + $0x20] sm:$0xff]
        %v1246 = vld [vmem:[#allocation7 + $0x28] sm:$0xff]
        %v1247 = vld [vmem:[#allocation7 + $0x30] sm:$0xff]
        %v1248 = vld [vmem:[#allocation7 + $0x38] sm:$0xff]
        %v1249 = vld [vmem:[#allocation7 + $0x40] sm:$0xff]
        %v1250 = vld [vmem:[#allocation7 + $0x48] sm:$0xff]
        %v1251 = vld [vmem:[#allocation7 + $0x50] sm:$0xff]
        %v1252 = vld [vmem:[#allocation7 + $0x58] sm:$0xff]
        %v1253 = vld [vmem:[#allocation7 + $0x60] sm:$0xff]
        %v1254 = vld [vmem:[#allocation7 + $0x68] sm:$0xff]
        %v1255 = vld [vmem:[#allocation7 + $0x70] sm:$0xff]
        %v1256 = vld [vmem:[#allocation7 + $0x78] sm:$0xff]
        %v1257 = vld [vmem:[%s8] sm:$0x1]
        %v1258 = vld [vmem:[%s9] sm:$0x1]
        %v1259 = vld [vmem:[%s10] sm:$0x1]
        %v1260 = vld [vmem:[%s11] sm:$0x1]
        %v1262 = vlaneseq
        %v1263 = vshrl.u32 %v1262, 7
        %v1264 = vsub.s32 0, %v1263
        %v1265 = vrot.slane %v1257, %v1264
        %1267 = vmatprep.subr.mxu0 0.0
        %1268 = vmatpush1.msra.mxu0 %v1241
        %1269 = vmatprep.subr.mxu0 0.0
        %1270 = vmatpush1.msra.mxu0 %v1242
        %1271 = vmatprep.subr.mxu0 0.0
        %1272 = vmatpush1.msra.mxu0 %v1243
        %1273 = vmatprep.subr.mxu0 0.0
        %1274 = vmatpush1.msra.mxu0 %v1244
        %1275 = vmatprep.subr.mxu0 0.0
        %1276 = vmatpush1.msra.mxu0 %v1245
        %1277 = vmatprep.subr.mxu0 0.0
        %1278 = vmatpush1.msra.mxu0 %v1246
        %1279 = vmatprep.subr.mxu0 0.0
        %1280 = vmatpush1.msra.mxu0 %v1247
        %1281 = vmatprep.subr.mxu0 0.0
        %1282 = vmatpush1.msra.mxu0 %v1248
        %1283 = vmatprep.subr.mxu0 0.0
        %1284 = vmatpush1.msra.mxu0 %v1249
        %1285 = vmatprep.subr.mxu0 0.0
        %1286 = vmatpush1.msra.mxu0 %v1250
        %1287 = vmatprep.subr.mxu0 0.0
        %1288 = vmatpush1.msra.mxu0 %v1251
        %1289 = vmatprep.subr.mxu0 0.0
        %1290 = vmatpush1.msra.mxu0 %v1252
        %1291 = vmatprep.subr.mxu0 0.0
        %1292 = vmatpush1.msra.mxu0 %v1253
        %1293 = vmatprep.subr.mxu0 0.0
        %1294 = vmatpush1.msra.mxu0 %v1254
        %1295 = vmatprep.subr.mxu0 0.0
        %1296 = vmatpush1.msra.mxu0 %v1255
        %1297 = vmatprep.subr.mxu0 0.0
        %1298 = vmatpush1.msra.mxu0 %v1256
        %1299 = vmatprep.subr.mxu0 0.0
        %1300 = vmatpush1.msra.mxu0 0.0
        %1301 = vmatprep.subr.mxu0 0.0
        %1302 = vmatpush1.msra.mxu0 0.0
        %1303 = vmatprep.subr.mxu0 0.0
        %1304 = vmatpush1.msra.mxu0 0.0
        %1305 = vmatprep.subr.mxu0 0.0
        %1306 = vmatpush1.msra.mxu0 0.0
        %1307 = vmatprep.subr.mxu0 0.0
        %1308 = vmatpush1.msra.mxu0 0.0
        %1309 = vmatprep.subr.mxu0 0.0
        %1310 = vmatpush1.msra.mxu0 0.0
        %1311 = vmatprep.subr.mxu0 0.0
        %1312 = vmatpush1.msra.mxu0 0.0
        %1313 = vmatprep.subr.mxu0 0.0
        %1314 = vmatpush1.msra.mxu0 0.0
        %1315 = vmatprep.subr.mxu0 0.0
        %1316 = vmatpush1.msra.mxu0 0.0
        %1317 = vmatprep.subr.mxu0 0.0
        %1318 = vmatpush1.msra.mxu0 0.0
        %1319 = vmatprep.subr.mxu0 0.0
        %1320 = vmatpush1.msra.mxu0 0.0
        %1321 = vmatprep.subr.mxu0 0.0
        %1322 = vmatpush1.msra.mxu0 0.0
        %1323 = vmatprep.subr.mxu0 0.0
        %1324 = vmatpush1.msra.mxu0 0.0
        %1325 = vmatprep.subr.mxu0 0.0
        %1326 = vmatpush1.msra.mxu0 0.0
        %1327 = vmatprep.subr.mxu0 0.0
        %1328 = vmatpush1.msra.mxu0 0.0
        %1329 = vmatprep.subr.mxu0 0.0
        %1330 = vmatpush1.msra.mxu0 0.0
        %1331 = vmatprep.mubr.f32.mxu0 0.0
        %1332 = vmatmul.mubr.f32.gmra.mrb[0].mxu0 %v1233
        %v1333 = vpop.f32.mrb[0].mxu0
        %v1334 = vadd.f32 %v1265, %v1333
        %v1335 = vpop.f32.mrb[0].mxu0
        %1336 = vmatprep.mubr.f32.mxu0 0.0
        %1337 = vmatmul.mubr.f32.gmra.mrb[0].mxu0 %v1234
        %v1338 = vpop.f32.mrb[0].mxu0
        %v1339 = vadd.f32 %v1265, %v1338
        %v1340 = vpop.f32.mrb[0].mxu0
        %1341 = vmatprep.mubr.f32.mxu0 0.0
        %1342 = vmatmul.mubr.f32.gmra.mrb[0].mxu0 %v1235
        %v1343 = vpop.f32.mrb[0].mxu0
        %v1344 = vadd.f32 %v1265, %v1343
        %v1345 = vpop.f32.mrb[0].mxu0
        %1346 = vmatprep.mubr.f32.mxu0 0.0
        %1347 = vmatmul.mubr.f32.gmra.mrb[0].mxu0 %v1236
        %v1348 = vpop.f32.mrb[0].mxu0
        %v1349 = vadd.f32 %v1265, %v1348
        %v1350 = vpop.f32.mrb[0].mxu0
        %1351 = vmatprep.mubr.f32.mxu0 0.0
        %1352 = vmatmul.mubr.f32.gmra.mrb[0].mxu0 %v1237
        %v1353 = vpop.f32.mrb[0].mxu0
        %v1354 = vadd.f32 %v1265, %v1353
        %v1355 = vpop.f32.mrb[0].mxu0
        %1356 = vmatprep.mubr.f32.mxu0 0.0
        %1357 = vmatmul.mubr.f32.gmra.mrb[0].mxu0 %v1238
        %v1358 = vpop.f32.mrb[0].mxu0
        %v1359 = vadd.f32 %v1265, %v1358
        %v1360 = vpop.f32.mrb[0].mxu0
        %1361 = vmatprep.mubr.f32.mxu0 0.0
        %1362 = vmatmul.mubr.f32.gmra.mrb[0].mxu0 %v1239
        %v1363 = vpop.f32.mrb[0].mxu0
        %v1364 = vadd.f32 %v1265, %v1363
        %v1365 = vpop.f32.mrb[0].mxu0
        %1366 = vmatprep.mubr.f32.mxu0 0.0
        %1367 = vmatmul.mubr.f32.gmra.mrb[0].mxu0 %v1240
        %v1368 = vpop.f32.mrb[0].mxu0
        %v1369 = vadd.f32 %v1265, %v1368
        %v1370 = vpop.f32.mrb[0].mxu0
        %1371 = vdwg.mxu0
        %v1372 = vmul.f32 %v1334, %v854
        %v1373 = vmul.f32 %v1339, %v859
        %v1374 = vmul.f32 %v1344, %v864
        %v1375 = vmul.f32 %v1349, %v869
        %v1376 = vmul.f32 %v1354, %v874
        %v1377 = vmul.f32 %v1359, %v879
        %v1378 = vmul.f32 %v1364, %v884
        %v1379 = vmul.f32 %v1369, %v889
        %v1380 = vrot.slane %v1372, 4
        %v1381 = vadd.f32 %v1372, %v1380
        %v1382 = vrot.slane %v1381, 2
        %v1383 = vadd.f32 %v1381, %v1382
        %v1384 = vrot.slane %v1383, 1
        %v1385 = vadd.f32 %v1383, %v1384
        %v1386 = vrot.slane %v1373, 4
        %v1387 = vadd.f32 %v1373, %v1386
        %v1388 = vrot.slane %v1387, 2
        %v1389 = vadd.f32 %v1387, %v1388
        %v1390 = vrot.slane %v1389, 1
        %v1391 = vadd.f32 %v1389, %v1390
        %v1392 = vrot.slane %v1374, 4
        %v1393 = vadd.f32 %v1374, %v1392
        %v1394 = vrot.slane %v1393, 2
        %v1395 = vadd.f32 %v1393, %v1394
        %v1396 = vrot.slane %v1395, 1
        %v1397 = vadd.f32 %v1395, %v1396
        %v1398 = vrot.slane %v1375, 4
        %v1399 = vadd.f32 %v1375, %v1398
        %v1400 = vrot.slane %v1399, 2
        %v1401 = vadd.f32 %v1399, %v1400
        %v1402 = vrot.slane %v1401, 1
        %v1403 = vadd.f32 %v1401, %v1402
        %v1404 = vrot.slane %v1376, 4
        %v1405 = vadd.f32 %v1376, %v1404
        %v1406 = vrot.slane %v1405, 2
        %v1407 = vadd.f32 %v1405, %v1406
        %v1408 = vrot.slane %v1407, 1
        %v1409 = vadd.f32 %v1407, %v1408
        %v1410 = vrot.slane %v1377, 4
        %v1411 = vadd.f32 %v1377, %v1410
        %v1412 = vrot.slane %v1411, 2
        %v1413 = vadd.f32 %v1411, %v1412
        %v1414 = vrot.slane %v1413, 1
        %v1415 = vadd.f32 %v1413, %v1414
        %v1416 = vrot.slane %v1378, 4
        %v1417 = vadd.f32 %v1378, %v1416
        %v1418 = vrot.slane %v1417, 2
        %v1419 = vadd.f32 %v1417, %v1418
        %v1420 = vrot.slane %v1419, 1
        %v1421 = vadd.f32 %v1419, %v1420
        %v1422 = vrot.slane %v1379, 4
        %v1423 = vadd.f32 %v1379, %v1422
        %v1424 = vrot.slane %v1423, 2
        %v1425 = vadd.f32 %v1423, %v1424
        %v1426 = vrot.slane %v1425, 1
        %v1427 = vadd.f32 %v1425, %v1426
        %v1428 = vmul.f32 %v1385, %v954
        %v1429 = vmul.f32 %v1391, %v962
        %v1430 = vmul.f32 %v1397, %v970
        %v1431 = vmul.f32 %v1403, %v978
        %v1432 = vmul.f32 %v1409, %v986
        %v1433 = vmul.f32 %v1415, %v994
        %v1434 = vmul.f32 %v1421, %v1002
        %v1435 = vmul.f32 %v1427, %v1010
        %v1436 = vmul.f32 %v1428, %v1260
        %v1437 = vmul.f32 %v1429, %v1260
        %v1438 = vmul.f32 %v1430, %v1260
        %v1439 = vmul.f32 %v1431, %v1260
        %v1440 = vmul.f32 %v1432, %v1260
        %v1441 = vmul.f32 %v1433, %v1260
        %v1442 = vmul.f32 %v1434, %v1260
        %v1443 = vmul.f32 %v1435, %v1260
        %v1444 = vlaneseq
        %v1445 = vshrl.u32 %v1444, 7
        %v1446 = vsub.s32 0, %v1445
        %v1447 = vrot.slane %v1436, %v1446
        %v1448 = vlaneseq
        %v1449 = vshrl.u32 %v1448, 7
        %v1450 = vsub.s32 0, %v1449
        %v1451 = vrot.slane %v1437, %v1450
        %v1452 = vlaneseq
        %v1453 = vshrl.u32 %v1452, 7
        %v1454 = vsub.s32 0, %v1453
        %v1455 = vrot.slane %v1438, %v1454
        %v1456 = vlaneseq
        %v1457 = vshrl.u32 %v1456, 7
        %v1458 = vsub.s32 0, %v1457
        %v1459 = vrot.slane %v1439, %v1458
        %v1460 = vlaneseq
        %v1461 = vshrl.u32 %v1460, 7
        %v1462 = vsub.s32 0, %v1461
        %v1463 = vrot.slane %v1440, %v1462
        %v1464 = vlaneseq
        %v1465 = vshrl.u32 %v1464, 7
        %v1466 = vsub.s32 0, %v1465
        %v1467 = vrot.slane %v1441, %v1466
        %v1468 = vlaneseq
        %v1469 = vshrl.u32 %v1468, 7
        %v1470 = vsub.s32 0, %v1469
        %v1471 = vrot.slane %v1442, %v1470
        %v1472 = vlaneseq
        %v1473 = vshrl.u32 %v1472, 7
        %v1474 = vsub.s32 0, %v1473
        %v1475 = vrot.slane %v1443, %v1474
        %v1476 = vsub.f32 %v1334, %v1447
        %v1477 = vsub.f32 %v1339, %v1451
        %v1478 = vsub.f32 %v1344, %v1455
        %v1479 = vsub.f32 %v1349, %v1459
        %v1480 = vsub.f32 %v1354, %v1463
        %v1481 = vsub.f32 %v1359, %v1467
        %v1482 = vsub.f32 %v1364, %v1471
        %v1483 = vsub.f32 %v1369, %v1475
        %v1484 = vmul.f32 %v1476, %v1476
        %v1485 = vmul.f32 %v1477, %v1477
        %v1486 = vmul.f32 %v1478, %v1478
        %v1487 = vmul.f32 %v1479, %v1479
        %v1488 = vmul.f32 %v1480, %v1480
        %v1489 = vmul.f32 %v1481, %v1481
        %v1490 = vmul.f32 %v1482, %v1482
        %v1491 = vmul.f32 %v1483, %v1483
        %v1492 = vmul.f32 %v1484, %v854
        %v1493 = vmul.f32 %v1485, %v859
        %v1494 = vmul.f32 %v1486, %v864
        %v1495 = vmul.f32 %v1487, %v869
        %v1496 = vmul.f32 %v1488, %v874
        %v1497 = vmul.f32 %v1489, %v879
        %v1498 = vmul.f32 %v1490, %v884
        %v1499 = vmul.f32 %v1491, %v889
        %v1500 = vrot.slane %v1492, 4
        %v1501 = vadd.f32 %v1492, %v1500
        %v1502 = vrot.slane %v1501, 2
        %v1503 = vadd.f32 %v1501, %v1502
        %v1504 = vrot.slane %v1503, 1
        %v1505 = vadd.f32 %v1503, %v1504
        %v1506 = vrot.slane %v1493, 4
        %v1507 = vadd.f32 %v1493, %v1506
        %v1508 = vrot.slane %v1507, 2
        %v1509 = vadd.f32 %v1507, %v1508
        %v1510 = vrot.slane %v1509, 1
        %v1511 = vadd.f32 %v1509, %v1510
        %v1512 = vrot.slane %v1494, 4
        %v1513 = vadd.f32 %v1494, %v1512
        %v1514 = vrot.slane %v1513, 2
        %v1515 = vadd.f32 %v1513, %v1514
        %v1516 = vrot.slane %v1515, 1
        %v1517 = vadd.f32 %v1515, %v1516
        %v1518 = vrot.slane %v1495, 4
        %v1519 = vadd.f32 %v1495, %v1518
        %v1520 = vrot.slane %v1519, 2
        %v1521 = vadd.f32 %v1519, %v1520
        %v1522 = vrot.slane %v1521, 1
        %v1523 = vadd.f32 %v1521, %v1522
        %v1524 = vrot.slane %v1496, 4
        %v1525 = vadd.f32 %v1496, %v1524
        %v1526 = vrot.slane %v1525, 2
        %v1527 = vadd.f32 %v1525, %v1526
        %v1528 = vrot.slane %v1527, 1
        %v1529 = vadd.f32 %v1527, %v1528
        %v1530 = vrot.slane %v1497, 4
        %v1531 = vadd.f32 %v1497, %v1530
        %v1532 = vrot.slane %v1531, 2
        %v1533 = vadd.f32 %v1531, %v1532
        %v1534 = vrot.slane %v1533, 1
        %v1535 = vadd.f32 %v1533, %v1534
        %v1536 = vrot.slane %v1498, 4
        %v1537 = vadd.f32 %v1498, %v1536
        %v1538 = vrot.slane %v1537, 2
        %v1539 = vadd.f32 %v1537, %v1538
        %v1540 = vrot.slane %v1539, 1
        %v1541 = vadd.f32 %v1539, %v1540
        %v1542 = vrot.slane %v1499, 4
        %v1543 = vadd.f32 %v1499, %v1542
        %v1544 = vrot.slane %v1543, 2
        %v1545 = vadd.f32 %v1543, %v1544
        %v1546 = vrot.slane %v1545, 1
        %v1547 = vadd.f32 %v1545, %v1546
        %v1548 = vmul.f32 %v1505, %v954
        %v1549 = vmul.f32 %v1511, %v962
        %v1550 = vmul.f32 %v1517, %v970
        %v1551 = vmul.f32 %v1523, %v978
        %v1552 = vmul.f32 %v1529, %v986
        %v1553 = vmul.f32 %v1535, %v994
        %v1554 = vmul.f32 %v1541, %v1002
        %v1555 = vmul.f32 %v1547, %v1010
        %v1556 = vadd.f32 %v1548, 1e-06
        %v1557 = vadd.f32 %v1549, 1e-06
        %v1558 = vadd.f32 %v1550, 1e-06
        %v1559 = vadd.f32 %v1551, 1e-06
        %v1560 = vadd.f32 %v1552, 1e-06
        %v1561 = vadd.f32 %v1553, 1e-06
        %v1562 = vadd.f32 %v1554, 1e-06
        %v1563 = vadd.f32 %v1555, 1e-06
        %v1564 = vrsqrt.pop %v1556
        %v1565 = vrsqrt.pop %v1557
        %v1566 = vrsqrt.pop %v1558
        %v1567 = vrsqrt.pop %v1559
        %v1568 = vrsqrt.pop %v1560
        %v1569 = vrsqrt.pop %v1561
        %v1570 = vrsqrt.pop %v1562
        %v1571 = vrsqrt.pop %v1563
        %v1572 = vmul.f32 %v1258, %v1564
        %v1573 = vmul.f32 %v1258, %v1565
        %v1574 = vmul.f32 %v1258, %v1566
        %v1575 = vmul.f32 %v1258, %v1567
        %v1576 = vmul.f32 %v1258, %v1568
        %v1577 = vmul.f32 %v1258, %v1569
        %v1578 = vmul.f32 %v1258, %v1570
        %v1579 = vmul.f32 %v1258, %v1571
        %v1588 = vlaneseq
        %v1589 = vshrl.u32 %v1588, 7
        %v1590 = vsub.s32 0, %v1589
        %v1591 = vrot.slane %v1572, %v1590
        %v1592 = vlaneseq
        %v1593 = vshrl.u32 %v1592, 7
        %v1594 = vsub.s32 0, %v1593
        %v1595 = vrot.slane %v1573, %v1594
        %v1596 = vlaneseq
        %v1597 = vshrl.u32 %v1596, 7
        %v1598 = vsub.s32 0, %v1597
        %v1599 = vrot.slane %v1574, %v1598
        %v1600 = vlaneseq
        %v1601 = vshrl.u32 %v1600, 7
        %v1602 = vsub.s32 0, %v1601
        %v1603 = vrot.slane %v1575, %v1602
        %v1604 = vlaneseq
        %v1605 = vshrl.u32 %v1604, 7
        %v1606 = vsub.s32 0, %v1605
        %v1607 = vrot.slane %v1576, %v1606
        %v1608 = vlaneseq
        %v1609 = vshrl.u32 %v1608, 7
        %v1610 = vsub.s32 0, %v1609
        %v1611 = vrot.slane %v1577, %v1610
        %v1612 = vlaneseq
        %v1613 = vshrl.u32 %v1612, 7
        %v1614 = vsub.s32 0, %v1613
        %v1615 = vrot.slane %v1578, %v1614
        %v1616 = vlaneseq
        %v1617 = vshrl.u32 %v1616, 7
        %v1618 = vsub.s32 0, %v1617
        %v1619 = vrot.slane %v1579, %v1618
        %v1628 = vmul.f32 %v1476, %v1591
        %v1629 = vmul.f32 %v1477, %v1595
        %v1630 = vmul.f32 %v1478, %v1599
        %v1631 = vmul.f32 %v1479, %v1603
        %v1632 = vmul.f32 %v1480, %v1607
        %v1633 = vmul.f32 %v1481, %v1611
        %v1634 = vmul.f32 %v1482, %v1615
        %v1635 = vmul.f32 %v1483, %v1619
        %v1637 = vlaneseq
        %v1638 = vshrl.u32 %v1637, 7
        %v1639 = vsub.s32 0, %v1638
        %v1640 = vrot.slane %v1259, %v1639
        %v1642 = vadd.f32 %v1628, %v1640
        %v1643 = vadd.f32 %v1629, %v1640
        %v1644 = vadd.f32 %v1630, %v1640
        %v1645 = vadd.f32 %v1631, %v1640
        %v1646 = vadd.f32 %v1632, %v1640
        %v1647 = vadd.f32 %v1633, %v1640
        %v1648 = vadd.f32 %v1634, %v1640
        %v1649 = vadd.f32 %v1635, %v1640
        %v1650 = vmax.f32 %v1642, 0.0
        %v1651 = vmax.f32 %v1643, 0.0
        %v1652 = vmax.f32 %v1644, 0.0
        %v1653 = vmax.f32 %v1645, 0.0
        %v1654 = vmax.f32 %v1646, 0.0
        %v1655 = vmax.f32 %v1647, 0.0
        %v1656 = vmax.f32 %v1648, 0.0
        %v1657 = vmax.f32 %v1649, 0.0
        %v1658 = vld [vmem:[#allocation8] sm:$0xff]
        %v1659 = vld [vmem:[#allocation8 + $0x8] sm:$0xff]
        %v1660 = vld [vmem:[#allocation8 + $0x10] sm:$0xff]
        %v1661 = vld [vmem:[#allocation8 + $0x18] sm:$0xff]
        %v1662 = vld [vmem:[#allocation8 + $0x20] sm:$0xff]
        %v1663 = vld [vmem:[#allocation8 + $0x28] sm:$0xff]
        %v1664 = vld [vmem:[#allocation8 + $0x30] sm:$0xff]
        %v1665 = vld [vmem:[#allocation8 + $0x38] sm:$0xff]
        %v1666 = vld [vmem:[#allocation8 + $0x40] sm:$0xff]
        %v1667 = vld [vmem:[#allocation8 + $0x48] sm:$0xff]
        %v1668 = vld [vmem:[#allocation8 + $0x50] sm:$0xff]
        %v1669 = vld [vmem:[#allocation8 + $0x58] sm:$0xff]
        %v1670 = vld [vmem:[#allocation8 + $0x60] sm:$0xff]
        %v1671 = vld [vmem:[#allocation8 + $0x68] sm:$0xff]
        %v1672 = vld [vmem:[#allocation8 + $0x70] sm:$0xff]
        %v1673 = vld [vmem:[#allocation8 + $0x78] sm:$0xff]
        %v1674 = vld [vmem:[%s13] sm:$0x1]
        %v1676 = vlaneseq
        %v1677 = vshrl.u32 %v1676, 7
        %v1678 = vsub.s32 0, %v1677
        %v1679 = vrot.slane %v1674, %v1678
        %1681 = vmatprep.subr.mxu0 0.0
        %1682 = vmatpush1.msra.mxu0 %v1658
        %1683 = vmatprep.subr.mxu0 0.0
        %1684 = vmatpush1.msra.mxu0 %v1659
        %1685 = vmatprep.subr.mxu0 0.0
        %1686 = vmatpush1.msra.mxu0 %v1660
        %1687 = vmatprep.subr.mxu0 0.0
        %1688 = vmatpush1.msra.mxu0 %v1661
        %1689 = vmatprep.subr.mxu0 0.0
        %1690 = vmatpush1.msra.mxu0 %v1662
        %1691 = vmatprep.subr.mxu0 0.0
        %1692 = vmatpush1.msra.mxu0 %v1663
        %1693 = vmatprep.subr.mxu0 0.0
        %1694 = vmatpush1.msra.mxu0 %v1664
        %1695 = vmatprep.subr.mxu0 0.0
        %1696 = vmatpush1.msra.mxu0 %v1665
        %1697 = vmatprep.subr.mxu0 0.0
        %1698 = vmatpush1.msra.mxu0 %v1666
        %1699 = vmatprep.subr.mxu0 0.0
        %1700 = vmatpush1.msra.mxu0 %v1667
        %1701 = vmatprep.subr.mxu0 0.0
        %1702 = vmatpush1.msra.mxu0 %v1668
        %1703 = vmatprep.subr.mxu0 0.0
        %1704 = vmatpush1.msra.mxu0 %v1669
        %1705 = vmatprep.subr.mxu0 0.0
        %1706 = vmatpush1.msra.mxu0 %v1670
        %1707 = vmatprep.subr.mxu0 0.0
        %1708 = vmatpush1.msra.mxu0 %v1671
        %1709 = vmatprep.subr.mxu0 0.0
        %1710 = vmatpush1.msra.mxu0 %v1672
        %1711 = vmatprep.subr.mxu0 0.0
        %1712 = vmatpush1.msra.mxu0 %v1673
        %1713 = vmatprep.subr.mxu0 0.0
        %1714 = vmatpush1.msra.mxu0 0.0
        %1715 = vmatprep.subr.mxu0 0.0
        %1716 = vmatpush1.msra.mxu0 0.0
        %1717 = vmatprep.subr.mxu0 0.0
        %1718 = vmatpush1.msra.mxu0 0.0
        %1719 = vmatprep.subr.mxu0 0.0
        %1720 = vmatpush1.msra.mxu0 0.0
        %1721 = vmatprep.subr.mxu0 0.0
        %1722 = vmatpush1.msra.mxu0 0.0
        %1723 = vmatprep.subr.mxu0 0.0
        %1724 = vmatpush1.msra.mxu0 0.0
        %1725 = vmatprep.subr.mxu0 0.0
        %1726 = vmatpush1.msra.mxu0 0.0
        %1727 = vmatprep.subr.mxu0 0.0
        %1728 = vmatpush1.msra.mxu0 0.0
        %1729 = vmatprep.subr.mxu0 0.0
        %1730 = vmatpush1.msra.mxu0 0.0
        %1731 = vmatprep.subr.mxu0 0.0
        %1732 = vmatpush1.msra.mxu0 0.0
        %1733 = vmatprep.subr.mxu0 0.0
        %1734 = vmatpush1.msra.mxu0 0.0
        %1735 = vmatprep.subr.mxu0 0.0
        %1736 = vmatpush1.msra.mxu0 0.0
        %1737 = vmatprep.subr.mxu0 0.0
        %1738 = vmatpush1.msra.mxu0 0.0
        %1739 = vmatprep.subr.mxu0 0.0
        %1740 = vmatpush1.msra.mxu0 0.0
        %1741 = vmatprep.subr.mxu0 0.0
        %1742 = vmatpush1.msra.mxu0 0.0
        %1743 = vmatprep.subr.mxu0 0.0
        %1744 = vmatpush1.msra.mxu0 0.0
        %1745 = vmatprep.mubr.f32.mxu0 0.0
        %1746 = vmatmul.mubr.f32.gmra.mrb[0].mxu0 %v1650
        %v1747 = vpop.f32.mrb[0].mxu0
        %v1748 = vadd.f32 %v1679, %v1747
        %v1749 = vpop.f32.mrb[0].mxu0
        %1750 = vmatprep.mubr.f32.mxu0 0.0
        %1751 = vmatmul.mubr.f32.gmra.mrb[0].mxu0 %v1651
        %v1752 = vpop.f32.mrb[0].mxu0
        %v1753 = vadd.f32 %v1679, %v1752
        %v1754 = vpop.f32.mrb[0].mxu0
        %1755 = vmatprep.mubr.f32.mxu0 0.0
        %1756 = vmatmul.mubr.f32.gmra.mrb[0].mxu0 %v1652
        %v1757 = vpop.f32.mrb[0].mxu0
        %v1758 = vadd.f32 %v1679, %v1757
        %v1759 = vpop.f32.mrb[0].mxu0
        %1760 = vmatprep.mubr.f32.mxu0 0.0
        %1761 = vmatmul.mubr.f32.gmra.mrb[0].mxu0 %v1653
        %v1762 = vpop.f32.mrb[0].mxu0
        %v1763 = vadd.f32 %v1679, %v1762
        %v1764 = vpop.f32.mrb[0].mxu0
        %1765 = vmatprep.mubr.f32.mxu0 0.0
        %1766 = vmatmul.mubr.f32.gmra.mrb[0].mxu0 %v1654
        %v1767 = vpop.f32.mrb[0].mxu0
        %v1768 = vadd.f32 %v1679, %v1767
        %v1769 = vpop.f32.mrb[0].mxu0
        %1770 = vmatprep.mubr.f32.mxu0 0.0
        %1771 = vmatmul.mubr.f32.gmra.mrb[0].mxu0 %v1655
        %v1772 = vpop.f32.mrb[0].mxu0
        %v1773 = vadd.f32 %v1679, %v1772
        %v1774 = vpop.f32.mrb[0].mxu0
        %1775 = vmatprep.mubr.f32.mxu0 0.0
        %1776 = vmatmul.mubr.f32.gmra.mrb[0].mxu0 %v1656
        %v1777 = vpop.f32.mrb[0].mxu0
        %v1778 = vadd.f32 %v1679, %v1777
        %v1779 = vpop.f32.mrb[0].mxu0
        %1780 = vmatprep.mubr.f32.mxu0 0.0
        %1781 = vmatmul.mubr.f32.gmra.mrb[0].mxu0 %v1657
        %v1782 = vpop.f32.mrb[0].mxu0
        %v1783 = vadd.f32 %v1679, %v1782
        %v1784 = vpop.f32.mrb[0].mxu0
        %1785 = vdwg.mxu0
        %1786 = vst [vmem:[%s542] sm:$0xff] %v1748
        %1787 = vst [vmem:[%s542 + $0x8] sm:$0xff] %v1753
        %1788 = vst [vmem:[%s542 + $0x10] sm:$0xff] %v1758
        %1789 = vst [vmem:[%s542 + $0x18] sm:$0xff] %v1763
        %1790 = vst [vmem:[%s542 + $0x20] sm:$0xff] %v1768
        %1791 = vst [vmem:[%s542 + $0x28] sm:$0xff] %v1773
        %1792 = vst [vmem:[%s542 + $0x30] sm:$0xff] %v1778
        %1793 = vst [vmem:[%s542 + $0x38] sm:$0xff] %v1783
        %s1794 = sand.u32 %s345, 1
        %s1795 = scalar_lea.sflag [#allocation4], %s1794
        %s1796 = sand.u32 %s345, 1
        %s1797 = smul.addr %s1796, 64
        %s1798 = scalar_lea.vmem [#allocation10], %s1797
        // Predicated region
        $region93: #{tpu_custom_call.1} parent=75 // pred_check
          %p1799 = pneg %p355
        $region94: #{tpu_custom_call.1} parent=75 // pred_check_branch
          %1801 = sbr.rel (%p1799) target = $region96
        $region95: #{tpu_custom_call.1} parent=75 // pred_region
          %s1802 = smul.u32 8, %s33
          %s1804 = ssub.s32 1024, 1024
          %1805 = vsyncadd %s1795, %s1804
          %s1806 = smul.addr %s1802, 128
          %s1807 = scalar_lea.hbm %s14, %s1806
          %s1808 = sshll.u32 %s1798, 4
          %s1809 = int_to_ptr.vmem [resolvable:$true] %s1808
          %1814 = dma.vmem_to_hbm [thread:$0]  %s1809, 1024, %s1807, %s1795, 128, 128, 8
        $region96: #{tpu_custom_call.1} parent=75 // pred_fallthru
          _
      $region76: #{tpu_custom_call.1} parent=5 // pred_fallthru
        _
      %p1815 = scmp.le.s32.totalorder 2, %s28
      // Predicated region
      $region97: #{tpu_custom_call.1} parent=5 // pred_check
        %p1816 = pneg %p1815
      $region98: #{tpu_custom_call.1} parent=5 // pred_check_branch
        %1818 = sbr.rel (%p1816) target = $region100
      $region99: #{tpu_custom_call.1} parent=5 // pred_region
        %s1819 = ssub.s32 %s28, 2
        // Predicated region
        $region101: #{tpu_custom_call.1} parent=99 // pred_check
          %p1820 = pneg %p361
        $region102: #{tpu_custom_call.1} parent=99 // pred_check_branch
          %1822 = sbr.rel (%p1820) target = $region104
        $region103: #{tpu_custom_call.1} parent=99 // pred_region
          %s1823 = sand.u32 %s346, 1
          %s1824 = scalar_lea.sflag [#allocation4], %s1823
          %s1825 = sand.u32 %s346, 1
          %s1826 = smul.addr %s1825, 64
          %s1827 = scalar_lea.vmem [#allocation10], %s1826
          %1828 = dma.done %s1824, 1024
        $region104: #{tpu_custom_call.1} parent=99 // pred_fallthru
          _
      $region100: #{tpu_custom_call.1} parent=5 // pred_fallthru
        _
    $region6: #{tpu_custom_call.1} parent=1 // loop_footer
      %s32 = sadd.s32 1, %s28
    $region7: #{tpu_custom_call.1} parent=1 // loop_footer_branch
      %27 = sbr.rel target = $region3
    $region8: #{tpu_custom_call.1} parent=1 // loop_exit
      _
    %1829 = vsyncpa [#allocation3], 1
    %s1830 = scalar_lea.sflag [#allocation3], 1
    %1831 = vsyncpa %s1830, 1
    %1832 = vsyncpa [#allocation6], 1
    %1833 = vsyncpa [#allocation9], 1
    %1834 = vsyncpa [#allocation4], 1
    %s1835 = scalar_lea.sflag [#allocation4], 1
    %1836 = vsyncpa %s1835, 1

// kernel: tpu_custom_call.1
$region0: #{tpu_custom_call.1}
  #allocation0 [shape = 'u32[]', space=smem, size = 0x4, offset = 0x4, fixed_abs, tag = 'smem constant byte address 0x4 - core index']
  #allocation1 [shape = 'u32[144,128]{1,0:T(1,128)}', space=vmem, size = 0x12000, scoped, tag = 'internal scratch']
  %s0 = inlined_call_operand.vmem [shape: s32[16,1], index: 0, kind: input, shape index: {}]
  %s1 = inlined_call_operand.hbm [shape: f32[16,8,128], index: 1, kind: input, shape index: {}]
  %s2 = inlined_call_operand.hbm [shape: f32[128,128], index: 2, kind: input, shape index: {}]
  %s3 = inlined_call_operand.vmem [shape: f32[1,128], index: 3, kind: input, shape index: {}]
  %s4 = inlined_call_operand.vmem [shape: f32[1,128], index: 4, kind: input, shape index: {}]
  %s5 = inlined_call_operand.vmem [shape: f32[1,128], index: 5, kind: input, shape index: {}]
  %s6 = inlined_call_operand.vmem [shape: f32[1,128], index: 6, kind: input, shape index: {}]
  %s7 = inlined_call_operand.hbm [shape: f32[128,128], index: 7, kind: input, shape index: {}]
  %s8 = inlined_call_operand.vmem [shape: f32[1,128], index: 8, kind: input, shape index: {}]
  %s9 = inlined_call_operand.vmem [shape: f32[1,128], index: 9, kind: input, shape index: {}]
  %s10 = inlined_call_operand.vmem [shape: f32[1,128], index: 10, kind: input, shape index: {}]
  %s11 = inlined_call_operand.vmem [shape: f32[1,128], index: 11, kind: input, shape index: {}]
  %s12 = inlined_call_operand.hbm [shape: f32[128,128], index: 12, kind: input, shape index: {}]
  %s13 = inlined_call_operand.vmem [shape: f32[1,128], index: 13, kind: input, shape index: {}]
  %s14 = inlined_call_operand.hbm [shape: f32[128,128], index: 14, kind: output, shape index: {}]
  %s15 = sld [smem:[#allocation0]]
  $region105: #{tpu_custom_call.1} parent=0
    _
  %s17 = ssub.s32 1, %s15
  %s18 = scalar_select 0, %s17, %s15
  $region1: #{tpu_custom_call.1} parent=0
    #allocation2 [shape = 'u8[65536]{0}', space=vmem, size = 0x10000, scoped, tag = 'input window, operand 1']
    #allocation3 [shape = 's32[2]{0}', space=sflag, size = 0x8, scoped, tag = 'scoped memory for tpu_custom_call.1']
    #allocation4 [shape = 's32[2]{0}', space=sflag, size = 0x8, scoped, tag = 'scoped memory for tpu_custom_call.1']
    #allocation5 [shape = 'u8[65536]{0}', space=vmem, size = 0x10000, scoped, tag = 'input window, operand 2, single buffered']
    #allocation6 [shape = 's32[1]{0}', space=sflag, size = 0x4, scoped, tag = 'scoped memory for tpu_custom_call.1']
    #allocation7 [shape = 'u8[65536]{0}', space=vmem, size = 0x10000, scoped, tag = 'input window, operand 7, single buffered']
    #allocation8 [shape = 'u8[65536]{0}', space=vmem, size = 0x10000, scoped, tag = 'input window, operand 12, single buffered']
    #allocation9 [shape = 's32[1]{0}', space=sflag, size = 0x4, scoped, tag = 'scoped memory for tpu_custom_call.1']
    #allocation10 [shape = 'u8[65536]{0}', space=vmem, size = 0x10000, scoped, tag = 'output window, operand 0']
    %19 = vsyncpa [#allocation3], 0
    %s20 = scalar_lea.sflag [#allocation3], 1
    %21 = vsyncpa %s20, 0
    %22 = vsyncpa [#allocation6], 0
    %23 = vsyncpa [#allocation9], 0
    %24 = vsyncpa [#allocation4], 0
    %s25 = scalar_lea.sflag [#allocation4], 1
    %26 = vsyncpa %s25, 0
    loop: start=0, step=1, limit=4
    $region2: #{tpu_custom_call.1} parent=1 // loop_pre_header
      _
    $region3: #{tpu_custom_call.1} parent=1 // loop_header
      %s28 = sphi 0, %s32
      %p29 = scmp.ge.s32.totalorder %s28, 4
      %s38 = sphi 0, %s40
      %s41 = sphi 0, %s38
      %s42 = sphi 0, %s41
      %s58 = sphi 0, %s42
      %s64 = sphi 0, %s66
      %s67 = sphi 0, %s64
      %s68 = sphi 0, %s67
      %s84 = sphi 0, %s68
      %s88 = sphi 0, %s88
      %s90 = sphi 0, %s88
      %s91 = sphi 0, %s90
      %s105 = sphi 0, %s91
      %s109 = sphi 0, %s109
      %s111 = sphi 0, %s109
      %s112 = sphi 0, %s111
      %s126 = sphi 0, %s112
      %s130 = sphi 0, %s130
      %s132 = sphi 0, %s130
      %s133 = sphi 0, %s132
      %s147 = sphi 0, %s133
      %s151 = sphi 0, %s151
      %s153 = sphi 0, %s151
      %s154 = sphi 0, %s153
      %s168 = sphi 0, %s154
      %s172 = sphi 0, %s172
      %s174 = sphi 0, %s172
      %s175 = sphi 0, %s174
      %s189 = sphi 0, %s175
      %s193 = sphi 0, %s193
      %s195 = sphi 0, %s193
      %s196 = sphi 0, %s195
      %s210 = sphi 0, %s196
      %s214 = sphi 0, %s214
      %s216 = sphi 0, %s214
      %s217 = sphi 0, %s216
      %s231 = sphi 0, %s217
      %s235 = sphi 0, %s235
      %s237 = sphi 0, %s235
      %s238 = sphi 0, %s237
      %s252 = sphi 0, %s238
      %s256 = sphi 0, %s256
      %s258 = sphi 0, %s256
      %s259 = sphi 0, %s258
      %s273 = sphi 0, %s259
      %s277 = sphi 0, %s277
      %s279 = sphi 0, %s277
      %s280 = sphi 0, %s279
      %s294 = sphi 0, %s280
      %s298 = sphi 0, %s298
      %s300 = sphi 0, %s298
      %s301 = sphi 0, %s300
      %s315 = sphi 0, %s301
      %s319 = sphi 0, %s319
      %s321 = sphi 0, %s319
      %s322 = sphi 0, %s321
      %s336 = sphi 0, %s322
      %s342 = sphi 0, %s344
      %s345 = sphi 0, %s342
      %s346 = sphi 0, %s345
      %s362 = sphi 0, %s346
    $region4: #{tpu_custom_call.1} parent=1 // loop_header_branch
      %31 = sbr.rel (%p29) target = $region8
    $region5: #{tpu_custom_call.1} parent=1 // loop_body
      %s33 = ssub.s32 %s28, 1
      %s34 = ssub.s32 %s28, 2
      %s35 = sadd.s32 %s28, 1
      %s36 = ssub.s32 %s28, %s35
      %p37 = scmp.eq.s32.totalorder %s36, 0
      %s39 = sadd.s32 %s38, 1
      %s40 = scalar_select %p37, %s38, %s39
      %p43 = pneg %p37
      %p44 = scmp.eq.s32.totalorder %s28, 1
      %p45 = por %p43, %p44
      %p46 = scmp.ne.s32.totalorder %s38, %s41
      %p47 = scmp.eq.s32.totalorder %s28, 0
      %p48 = por %p46, %p47
      %p49 = scmp.ne.s32.totalorder %s38, %s41
      %p50 = scmp.eq.s32.totalorder %s33, 1
      %p51 = por %p49, %p50
      %p52 = scmp.ne.s32.totalorder %s41, %s42
      %p53 = scmp.eq.s32.totalorder %s33, 0
      %p54 = por %p52, %p53
      %p55 = scmp.ne.s32.totalorder %s41, %s42
      %p56 = scmp.eq.s32.totalorder %s34, 1
      %p57 = por %p55, %p56
      %p59 = scmp.ne.s32.totalorder %s42, %s58
      %p60 = scmp.eq.s32.totalorder %s34, 0
      %p61 = por %p59, %p60
      %s62 = ssub.s32 %s28, %s35
      %p63 = scmp.eq.s32.totalorder %s62, 0
      %s65 = sadd.s32 %s64, 1
      %s66 = scalar_select %p63, %s64, %s65
      %p69 = pneg %p63
      %p70 = scmp.eq.s32.totalorder %s28, 1
      %p71 = por %p69, %p70
      %p72 = scmp.ne.s32.totalorder %s64, %s67
      %p73 = scmp.eq.s32.totalorder %s28, 0
      %p74 = por %p72, %p73
      %p75 = scmp.ne.s32.totalorder %s64, %s67
      %p76 = scmp.eq.s32.totalorder %s33, 1
      %p77 = por %p75, %p76
      %p78 = scmp.ne.s32.totalorder %s67, %s68
      %p79 = scmp.eq.s32.totalorder %s33, 0
      %p80 = por %p78, %p79
      %p81 = scmp.ne.s32.totalorder %s67, %s68
      %p82 = scmp.eq.s32.totalorder %s34, 1
      %p83 = por %p81, %p82
      %p85 = scmp.ne.s32.totalorder %s68, %s84
      %p86 = scmp.eq.s32.totalorder %s34, 0
      %p87 = por %p85, %p86
      %s89 = sadd.s32 %s88, 1
      %p92 = scmp.eq.s32.totalorder %s28, 1
      %p93 = scmp.ne.s32.totalorder %s88, %s90
      %p94 = scmp.eq.s32.totalorder %s28, 0
      %p95 = por %p93, %p94
      %p96 = scmp.ne.s32.totalorder %s88, %s90
      %p97 = scmp.eq.s32.totalorder %s33, 1
      %p98 = por %p96, %p97
      %p99 = scmp.ne.s32.totalorder %s90, %s91
      %p100 = scmp.eq.s32.totalorder %s33, 0
      %p101 = por %p99, %p100
      %p102 = scmp.ne.s32.totalorder %s90, %s91
      %p103 = scmp.eq.s32.totalorder %s34, 1
      %p104 = por %p102, %p103
      %p106 = scmp.ne.s32.totalorder %s91, %s105
      %p107 = scmp.eq.s32.totalorder %s34, 0
      %p108 = por %p106, %p107
      %s110 = sadd.s32 %s109, 1
      %p113 = scmp.eq.s32.totalorder %s28, 1
      %p114 = scmp.ne.s32.totalorder %s109, %s111
      %p115 = scmp.eq.s32.totalorder %s28, 0
      %p116 = por %p114, %p115
      %p117 = scmp.ne.s32.totalorder %s109, %s111
      %p118 = scmp.eq.s32.totalorder %s33, 1
      %p119 = por %p117, %p118
      %p120 = scmp.ne.s32.totalorder %s111, %s112
      %p121 = scmp.eq.s32.totalorder %s33, 0
      %p122 = por %p120, %p121
      %p123 = scmp.ne.s32.totalorder %s111, %s112
      %p124 = scmp.eq.s32.totalorder %s34, 1
      %p125 = por %p123, %p124
      %p127 = scmp.ne.s32.totalorder %s112, %s126
      %p128 = scmp.eq.s32.totalorder %s34, 0
      %p129 = por %p127, %p128
      %s131 = sadd.s32 %s130, 1
      %p134 = scmp.eq.s32.totalorder %s28, 1
      %p135 = scmp.ne.s32.totalorder %s130, %s132
      %p136 = scmp.eq.s32.totalorder %s28, 0
      %p137 = por %p135, %p136
      %p138 = scmp.ne.s32.totalorder %s130, %s132
      %p139 = scmp.eq.s32.totalorder %s33, 1
      %p140 = por %p138, %p139
      %p141 = scmp.ne.s32.totalorder %s132, %s133
      %p142 = scmp.eq.s32.totalorder %s33, 0
      %p143 = por %p141, %p142
      %p144 = scmp.ne.s32.totalorder %s132, %s133
      %p145 = scmp.eq.s32.totalorder %s34, 1
      %p146 = por %p144, %p145
      %p148 = scmp.ne.s32.totalorder %s133, %s147
      %p149 = scmp.eq.s32.totalorder %s34, 0
      %p150 = por %p148, %p149
      %s152 = sadd.s32 %s151, 1
      %p155 = scmp.eq.s32.totalorder %s28, 1
      %p156 = scmp.ne.s32.totalorder %s151, %s153
      %p157 = scmp.eq.s32.totalorder %s28, 0
      %p158 = por %p156, %p157
      %p159 = scmp.ne.s32.totalorder %s151, %s153
      %p160 = scmp.eq.s32.totalorder %s33, 1
      %p161 = por %p159, %p160
      %p162 = scmp.ne.s32.totalorder %s153, %s154
      %p163 = scmp.eq.s32.totalorder %s33, 0
      %p164 = por %p162, %p163
      %p165 = scmp.ne.s32.totalorder %s153, %s154
      %p166 = scmp.eq.s32.totalorder %s34, 1
      %p167 = por %p165, %p166
      %p169 = scmp.ne.s32.totalorder %s154, %s168
      %p170 = scmp.eq.s32.totalorder %s34, 0
      %p171 = por %p169, %p170
      %s173 = sadd.s32 %s172, 1
      %p176 = scmp.eq.s32.totalorder %s28, 1
      %p177 = scmp.ne.s32.totalorder %s172, %s174
      %p178 = scmp.eq.s32.totalorder %s28, 0
      %p179 = por %p177, %p178
      %p180 = scmp.ne.s32.totalorder %s172, %s174
      %p181 = scmp.eq.s32.totalorder %s33, 1
      %p182 = por %p180, %p181
      %p183 = scmp.ne.s32.totalorder %s174, %s175
      %p184 = scmp.eq.s32.totalorder %s33, 0
      %p185 = por %p183, %p184
      %p186 = scmp.ne.s32.totalorder %s174, %s175
      %p187 = scmp.eq.s32.totalorder %s34, 1
      %p188 = por %p186, %p187
      %p190 = scmp.ne.s32.totalorder %s175, %s189
      %p191 = scmp.eq.s32.totalorder %s34, 0
      %p192 = por %p190, %p191
      %s194 = sadd.s32 %s193, 1
      %p197 = scmp.eq.s32.totalorder %s28, 1
      %p198 = scmp.ne.s32.totalorder %s193, %s195
      %p199 = scmp.eq.s32.totalorder %s28, 0
      %p200 = por %p198, %p199
      %p201 = scmp.ne.s32.totalorder %s193, %s195
      %p202 = scmp.eq.s32.totalorder %s33, 1
      %p203 = por %p201, %p202
      %p204 = scmp.ne.s32.totalorder %s195, %s196
      %p205 = scmp.eq.s32.totalorder %s33, 0
      %p206 = por %p204, %p205
      %p207 = scmp.ne.s32.totalorder %s195, %s196
      %p208 = scmp.eq.s32.totalorder %s34, 1
      %p209 = por %p207, %p208
      %p211 = scmp.ne.s32.totalorder %s196, %s210
      %p212 = scmp.eq.s32.totalorder %s34, 0
      %p213 = por %p211, %p212
      %s215 = sadd.s32 %s214, 1
      %p218 = scmp.eq.s32.totalorder %s28, 1
      %p219 = scmp.ne.s32.totalorder %s214, %s216
      %p220 = scmp.eq.s32.totalorder %s28, 0
      %p221 = por %p219, %p220
      %p222 = scmp.ne.s32.totalorder %s214, %s216
      %p223 = scmp.eq.s32.totalorder %s33, 1
      %p224 = por %p222, %p223
      %p225 = scmp.ne.s32.totalorder %s216, %s217
      %p226 = scmp.eq.s32.totalorder %s33, 0
      %p227 = por %p225, %p226
      %p228 = scmp.ne.s32.totalorder %s216, %s217
      %p229 = scmp.eq.s32.totalorder %s34, 1
      %p230 = por %p228, %p229
      %p232 = scmp.ne.s32.totalorder %s217, %s231
      %p233 = scmp.eq.s32.totalorder %s34, 0
      %p234 = por %p232, %p233
      %s236 = sadd.s32 %s235, 1
      %p239 = scmp.eq.s32.totalorder %s28, 1
      %p240 = scmp.ne.s32.totalorder %s235, %s237
      %p241 = scmp.eq.s32.totalorder %s28, 0
      %p242 = por %p240, %p241
      %p243 = scmp.ne.s32.totalorder %s235, %s237
      %p244 = scmp.eq.s32.totalorder %s33, 1
      %p245 = por %p243, %p244
      %p246 = scmp.ne.s32.totalorder %s237, %s238
      %p247 = scmp.eq.s32.totalorder %s33, 0
      %p248 = por %p246, %p247
      %p249 = scmp.ne.s32.totalorder %s237, %s238
      %p250 = scmp.eq.s32.totalorder %s34, 1
      %p251 = por %p249, %p250
      %p253 = scmp.ne.s32.totalorder %s238, %s252
      %p254 = scmp.eq.s32.totalorder %s34, 0
      %p255 = por %p253, %p254
      %s257 = sadd.s32 %s256, 1
      %p260 = scmp.eq.s32.totalorder %s28, 1
      %p261 = scmp.ne.s32.totalorder %s256, %s258
      %p262 = scmp.eq.s32.totalorder %s28, 0
      %p263 = por %p261, %p262
      %p264 = scmp.ne.s32.totalorder %s256, %s258
      %p265 = scmp.eq.s32.totalorder %s33, 1
      %p266 = por %p264, %p265
      %p267 = scmp.ne.s32.totalorder %s258, %s259
      %p268 = scmp.eq.s32.totalorder %s33, 0
      %p269 = por %p267, %p268
      %p270 = scmp.ne.s32.totalorder %s258, %s259
      %p271 = scmp.eq.s32.totalorder %s34, 1
      %p272 = por %p270, %p271
      %p274 = scmp.ne.s32.totalorder %s259, %s273
      %p275 = scmp.eq.s32.totalorder %s34, 0
      %p276 = por %p274, %p275
      %s278 = sadd.s32 %s277, 1
      %p281 = scmp.eq.s32.totalorder %s28, 1
      %p282 = scmp.ne.s32.totalorder %s277, %s279
      %p283 = scmp.eq.s32.totalorder %s28, 0
      %p284 = por %p282, %p283
      %p285 = scmp.ne.s32.totalorder %s277, %s279
      %p286 = scmp.eq.s32.totalorder %s33, 1
      %p287 = por %p285, %p286
      %p288 = scmp.ne.s32.totalorder %s279, %s280
      %p289 = scmp.eq.s32.totalorder %s33, 0
      %p290 = por %p288, %p289
      %p291 = scmp.ne.s32.totalorder %s279, %s280
      %p292 = scmp.eq.s32.totalorder %s34, 1
      %p293 = por %p291, %p292
      %p295 = scmp.ne.s32.totalorder %s280, %s294
      %p296 = scmp.eq.s32.totalorder %s34, 0
      %p297 = por %p295, %p296
      %s299 = sadd.s32 %s298, 1
      %p302 = scmp.eq.s32.totalorder %s28, 1
      %p303 = scmp.ne.s32.totalorder %s298, %s300
      %p304 = scmp.eq.s32.totalorder %s28, 0
      %p305 = por %p303, %p304
      %p306 = scmp.ne.s32.totalorder %s298, %s300
      %p307 = scmp.eq.s32.totalorder %s33, 1
      %p308 = por %p306, %p307
      %p309 = scmp.ne.s32.totalorder %s300, %s301
      %p310 = scmp.eq.s32.totalorder %s33, 0
      %p311 = por %p309, %p310
      %p312 = scmp.ne.s32.totalorder %s300, %s301
      %p313 = scmp.eq.s32.totalorder %s34, 1
      %p314 = por %p312, %p313
      %p316 = scmp.ne.s32.totalorder %s301, %s315
      %p317 = scmp.eq.s32.totalorder %s34, 0
      %p318 = por %p316, %p317
      %s320 = sadd.s32 %s319, 1
      %p323 = scmp.eq.s32.totalorder %s28, 1
      %p324 = scmp.ne.s32.totalorder %s319, %s321
      %p325 = scmp.eq.s32.totalorder %s28, 0
      %p326 = por %p324, %p325
      %p327 = scmp.ne.s32.totalorder %s319, %s321
      %p328 = scmp.eq.s32.totalorder %s33, 1
      %p329 = por %p327, %p328
      %p330 = scmp.ne.s32.totalorder %s321, %s322
      %p331 = scmp.eq.s32.totalorder %s33, 0
      %p332 = por %p330, %p331
      %p333 = scmp.ne.s32.totalorder %s321, %s322
      %p334 = scmp.eq.s32.totalorder %s34, 1
      %p335 = por %p333, %p334
      %p337 = scmp.ne.s32.totalorder %s322, %s336
      %p338 = scmp.eq.s32.totalorder %s34, 0
      %p339 = por %p337, %p338
      %s340 = ssub.s32 %s28, %s35
      %p341 = scmp.eq.s32.totalorder %s340, 0
      %s343 = sadd.s32 %s342, 1
      %s344 = scalar_select %p341, %s342, %s343
      %p347 = pneg %p341
      %p348 = scmp.eq.s32.totalorder %s28, 1
      %p349 = por %p347, %p348
      %p350 = scmp.ne.s32.totalorder %s342, %s345
      %p351 = scmp.eq.s32.totalorder %s28, 0
      %p352 = por %p350, %p351
      %p353 = scmp.ne.s32.totalorder %s342, %s345
      %p354 = scmp.eq.s32.totalorder %s33, 1
      %p355 = por %p353, %p354
      %p356 = scmp.ne.s32.totalorder %s345, %s346
      %p357 = scmp.eq.s32.totalorder %s33, 0
      %p358 = por %p356, %p357
      %p359 = scmp.ne.s32.totalorder %s345, %s346
      %p360 = scmp.eq.s32.totalorder %s34, 1
      %p361 = por %p359, %p360
      %p363 = scmp.ne.s32.totalorder %s346, %s362
      %p364 = scmp.eq.s32.totalorder %s34, 0
      %p365 = por %p363, %p364
      %p366 = scmp.le.s32.totalorder 1, %s28
      %p367 = scmp.lt.s32.totalorder %s28, 3
      %p368 = pnand %p366, %p367
      %p369 = pneg %p368
      // Predicated region
      $region9: #{tpu_custom_call.1} parent=5 // pred_check
        _
      $region10: #{tpu_custom_call.1} parent=5 // pred_check_branch
        %371 = sbr.rel (%p368) target = $region12
      $region11: #{tpu_custom_call.1} parent=5 // pred_region
        %s372 = ssub.s32 %s28, 1
        // Predicated region
        $region13: #{tpu_custom_call.1} parent=11 // pred_check
          %p373 = pneg %p101
        $region14: #{tpu_custom_call.1} parent=11 // pred_check_branch
          %375 = sbr.rel (%p373) target = $region16
        $region15: #{tpu_custom_call.1} parent=11 // pred_region
          %s377 = ssub.s32 2048, 2048
          %378 = vsyncadd [#allocation6], %s377
          %s379 = sshll.u32 [#allocation5], 4
          %s380 = int_to_ptr.vmem [resolvable:$true] %s379
          %385 = dma.hbm_to_vmem [thread:$0]  %s2, 2048, %s380, [#allocation6], 128, 128, 8
        $region16: #{tpu_custom_call.1} parent=11 // pred_fallthru
          _
        // Predicated region
        $region17: #{tpu_custom_call.1} parent=11 // pred_check
          %p386 = pneg %p122
        $region18: #{tpu_custom_call.1} parent=11 // pred_check_branch
          %388 = sbr.rel (%p386) target = $region20
        $region19: #{tpu_custom_call.1} parent=11 // pred_region
          _
        $region20: #{tpu_custom_call.1} parent=11 // pred_fallthru
          _
        // Predicated region
        $region21: #{tpu_custom_call.1} parent=11 // pred_check
          %p389 = pneg %p143
        $region22: #{tpu_custom_call.1} parent=11 // pred_check_branch
          %391 = sbr.rel (%p389) target = $region24
        $region23: #{tpu_custom_call.1} parent=11 // pred_region
          _
        $region24: #{tpu_custom_call.1} parent=11 // pred_fallthru
          _
        // Predicated region
        $region25: #{tpu_custom_call.1} parent=11 // pred_check
          %p392 = pneg %p164
        $region26: #{tpu_custom_call.1} parent=11 // pred_check_branch
          %394 = sbr.rel (%p392) target = $region28
        $region27: #{tpu_custom_call.1} parent=11 // pred_region
          _
        $region28: #{tpu_custom_call.1} parent=11 // pred_fallthru
          _
        // Predicated region
        $region29: #{tpu_custom_call.1} parent=11 // pred_check
          %p395 = pneg %p185
        $region30: #{tpu_custom_call.1} parent=11 // pred_check_branch
          %397 = sbr.rel (%p395) target = $region32
        $region31: #{tpu_custom_call.1} parent=11 // pred_region
          _
        $region32: #{tpu_custom_call.1} parent=11 // pred_fallthru
          _
        // Predicated region
        $region33: #{tpu_custom_call.1} parent=11 // pred_check
          %p398 = pneg %p206
        $region34: #{tpu_custom_call.1} parent=11 // pred_check_branch
          %400 = sbr.rel (%p398) target = $region36
        $region35: #{tpu_custom_call.1} parent=11 // pred_region
          %s402 = ssub.s32 2048, 2048
          %403 = vsyncadd [#allocation6], %s402
          %s404 = sshll.u32 [#allocation7], 4
          %s405 = int_to_ptr.vmem [resolvable:$true] %s404
          %410 = dma.hbm_to_vmem [thread:$0]  %s7, 2048, %s405, [#allocation6], 128, 128, 8
        $region36: #{tpu_custom_call.1} parent=11 // pred_fallthru
          _
        // Predicated region
        $region37: #{tpu_custom_call.1} parent=11 // pred_check
          %p411 = pneg %p227
        $region38: #{tpu_custom_call.1} parent=11 // pred_check_branch
          %413 = sbr.rel (%p411) target = $region40
        $region39: #{tpu_custom_call.1} parent=11 // pred_region
          _
        $region40: #{tpu_custom_call.1} parent=11 // pred_fallthru
          _
        // Predicated region
        $region41: #{tpu_custom_call.1} parent=11 // pred_check
          %p414 = pneg %p248
        $region42: #{tpu_custom_call.1} parent=11 // pred_check_branch
          %416 = sbr.rel (%p414) target = $region44
        $region43: #{tpu_custom_call.1} parent=11 // pred_region
          _
        $region44: #{tpu_custom_call.1} parent=11 // pred_fallthru
          _
        // Predicated region
        $region45: #{tpu_custom_call.1} parent=11 // pred_check
          %p417 = pneg %p269
        $region46: #{tpu_custom_call.1} parent=11 // pred_check_branch
          %419 = sbr.rel (%p417) target = $region48
        $region47: #{tpu_custom_call.1} parent=11 // pred_region
          _
        $region48: #{tpu_custom_call.1} parent=11 // pred_fallthru
          _
        // Predicated region
        $region49: #{tpu_custom_call.1} parent=11 // pred_check
          %p420 = pneg %p290
        $region50: #{tpu_custom_call.1} parent=11 // pred_check_branch
          %422 = sbr.rel (%p420) target = $region52
        $region51: #{tpu_custom_call.1} parent=11 // pred_region
          _
        $region52: #{tpu_custom_call.1} parent=11 // pred_fallthru
          _
        // Predicated region
        $region53: #{tpu_custom_call.1} parent=11 // pred_check
          %p423 = pneg %p311
        $region54: #{tpu_custom_call.1} parent=11 // pred_check_branch
          %425 = sbr.rel (%p423) target = $region56
        $region55: #{tpu_custom_call.1} parent=11 // pred_region
          %s427 = ssub.s32 2048, 2048
          %428 = vsyncadd [#allocation9], %s427
          %s429 = sshll.u32 [#allocation8], 4
          %s430 = int_to_ptr.vmem [resolvable:$true] %s429
          %435 = dma.hbm_to_vmem [thread:$0]  %s12, 2048, %s430, [#allocation9], 128, 128, 8
        $region56: #{tpu_custom_call.1} parent=11 // pred_fallthru
          _
        // Predicated region
        $region57: #{tpu_custom_call.1} parent=11 // pred_check
          %p436 = pneg %p332
        $region58: #{tpu_custom_call.1} parent=11 // pred_check_branch
          %438 = sbr.rel (%p436) target = $region60
        $region59: #{tpu_custom_call.1} parent=11 // pred_region
          _
        $region60: #{tpu_custom_call.1} parent=11 // pred_fallthru
          _
      $region12: #{tpu_custom_call.1} parent=5 // pred_fallthru
        _
      %p439 = scmp.lt.s32.totalorder %s28, 2
      // Predicated region
      $region61: #{tpu_custom_call.1} parent=5 // pred_check
        %p440 = pneg %p439
      $region62: #{tpu_custom_call.1} parent=5 // pred_check_branch
        %442 = sbr.rel (%p440) target = $region64
      $region63: #{tpu_custom_call.1} parent=5 // pred_region
        // Predicated region
        $region65: #{tpu_custom_call.1} parent=63 // pred_check
          %p443 = pneg %p48
        $region66: #{tpu_custom_call.1} parent=63 // pred_check_branch
          %445 = sbr.rel (%p443) target = $region68
        $region67: #{tpu_custom_call.1} parent=63 // pred_region
          %p446 = scmp.lt.s32.totalorder %s28, 1
          %s447 = scalar_select %p446, %s28, 1
          %s448 = smul.addr %s447, 8
          %s449 = scalar_lea.vmem %s0, %s448
        $region68: #{tpu_custom_call.1} parent=63 // pred_fallthru
          _
        // Predicated region
        $region69: #{tpu_custom_call.1} parent=63 // pred_check
          %p450 = pneg %p74
        $region70: #{tpu_custom_call.1} parent=63 // pred_check_branch
          %452 = sbr.rel (%p450) target = $region72
        $region71: #{tpu_custom_call.1} parent=63 // pred_region
          %s453 = sand.u32 %s64, 1
          %s454 = scalar_lea.sflag [#allocation3], %s453
          %s455 = sand.u32 %s64, 1
          %s456 = smul.addr %s455, 64
          %s457 = scalar_lea.vmem [#allocation2], %s456
          %s458 = smul.u32 8, %s28
          %s460 = ssub.s32 1024, 1024
          %461 = vsyncadd %s454, %s460
          %s462 = smul.addr %s458, 128
          %s463 = scalar_lea.hbm %s1, %s462
          %s464 = sshll.u32 %s457, 4
          %s465 = int_to_ptr.vmem [resolvable:$true] %s464
          %470 = dma.hbm_to_vmem [thread:$0]  %s463, 1024, %s465, %s454, 128, 128, 8
        $region72: #{tpu_custom_call.1} parent=63 // pred_fallthru
          _
      $region64: #{tpu_custom_call.1} parent=5 // pred_fallthru
        _
      %p471 = scmp.le.s32.totalorder 1, %s28
      %p472 = scmp.lt.s32.totalorder %s28, 3
      %p473 = pnand %p471, %p472
      %p474 = pneg %p473
      // Predicated region
      $region73: #{tpu_custom_call.1} parent=5 // pred_check
        _
      $region74: #{tpu_custom_call.1} parent=5 // pred_check_branch
        %476 = sbr.rel (%p473) target = $region76
      $region75: #{tpu_custom_call.1} parent=5 // pred_region
        %s477 = ssub.s32 %s28, 1
        %s478 = sand.u32 %s67, 1
        %s479 = scalar_lea.sflag [#allocation3], %s478
        %s480 = sand.u32 %s67, 1
        %s481 = smul.addr %s480, 64
        %s482 = scalar_lea.vmem [#allocation2], %s481
        // Predicated region
        $region77: #{tpu_custom_call.1} parent=75 // pred_check
          %p483 = pneg %p80
        $region78: #{tpu_custom_call.1} parent=75 // pred_check_branch
          %485 = sbr.rel (%p483) target = $region80
        $region79: #{tpu_custom_call.1} parent=75 // pred_region
          %486 = dma.done %s479, 1024
        $region80: #{tpu_custom_call.1} parent=75 // pred_fallthru
          _
        // Predicated region
        $region81: #{tpu_custom_call.1} parent=75 // pred_check
          %p487 = pneg %p101
        $region82: #{tpu_custom_call.1} parent=75 // pred_check_branch
          %489 = sbr.rel (%p487) target = $region84
        $region83: #{tpu_custom_call.1} parent=75 // pred_region
          %490 = dma.done [#allocation6], 2048
        $region84: #{tpu_custom_call.1} parent=75 // pred_fallthru
          _
        // Predicated region
        $region85: #{tpu_custom_call.1} parent=75 // pred_check
          %p491 = pneg %p206
        $region86: #{tpu_custom_call.1} parent=75 // pred_check_branch
          %493 = sbr.rel (%p491) target = $region88
        $region87: #{tpu_custom_call.1} parent=75 // pred_region
          %494 = dma.done [#allocation6], 2048
        $region88: #{tpu_custom_call.1} parent=75 // pred_fallthru
          _
        // Predicated region
        $region89: #{tpu_custom_call.1} parent=75 // pred_check
          %p495 = pneg %p311
        $region90: #{tpu_custom_call.1} parent=75 // pred_check_branch
          %497 = sbr.rel (%p495) target = $region92
        $region91: #{tpu_custom_call.1} parent=75 // pred_region
          %498 = dma.done [#allocation9], 2048
        $region92: #{tpu_custom_call.1} parent=75 // pred_fallthru
          _
        %p499 = scmp.lt.s32.totalorder %s33, 1
        %s500 = scalar_select %p499, %s33, 1
        %s501 = smul.addr %s500, 8
        %s502 = scalar_lea.vmem %s0, %s501
        %p503 = pneg %p54
        %p504 = pneg %p51
        %s505 = sand.u32 %s67, 1
        %s506 = scalar_lea.sflag [#allocation3], %s505
        %s507 = sand.u32 %s67, 1
        %s508 = smul.addr %s507, 64
        %s509 = scalar_lea.vmem [#allocation2], %s508
        %p510 = pneg %p80
        %p511 = pneg %p77
        %p512 = pneg %p101
        %p513 = pneg %p98
        %p514 = pneg %p122
        %p515 = pneg %p119
        %p516 = pneg %p143
        %p517 = pneg %p140
        %p518 = pneg %p164
        %p519 = pneg %p161
        %p520 = pneg %p185
        %p521 = pneg %p182
        %p522 = pneg %p206
        %p523 = pneg %p203
        %p524 = pneg %p227
        %p525 = pneg %p224
        %p526 = pneg %p248
        %p527 = pneg %p245
        %p528 = pneg %p269
        %p529 = pneg %p266
        %p530 = pneg %p290
        %p531 = pneg %p287
        %p532 = pneg %p311
        %p533 = pneg %p308
        %p534 = pneg %p332
        %p535 = pneg %p329
        %p536 = pneg %p358
        %p537 = pneg %p355
        %s538 = sand.u32 %s345, 1
        %s539 = scalar_lea.sflag [#allocation4], %s538
        %s540 = sand.u32 %s345, 1
        %s541 = smul.addr %s540, 64
        %s542 = scalar_lea.vmem [#allocation10], %s541
        %p543 = scmp.lt.s32.totalorder %s33, 1
        %s544 = scalar_select %p543, %s33, 1
        %s545 = smul.addr %s544, 8
        %s546 = scalar_lea.vmem %s0, %s545
        %s547 = smul.u32 8, %s33
        %s548 = smul.u32 8, %s33
        %v549 = vld [vmem:[%s546] sm:$0xff]
        %vm550 = vcmp.gt.s32.totalorder %v549, 1
        %v551 = vsel %vm550, %v549, 1
        %v552 = vcvt.s32.f32 %v551
        %v553 = vrcp.pop %v552
        %v554 = vmul.f32 1.0, %v553
        %v556 = vcombine.high %v554, %v554
        %v558 = vunpack.c.l.s4 1966171168
        %v559 = vunpack.c.0.s8 %v558
        %v560 = vlaneseq
        %v561 = vshrl.u32 %v560, 7
        %v562 = vsub.s32 %v559, %v561
        %v563 = vrot.slane %v554, %v562
        %v565 = vunpack.c.l.s4 1966171168
        %v566 = vunpack.c.0.s8 %v565
        %v567 = vlaneseq
        %v568 = vshrl.u32 %v567, 7
        %v569 = vsub.s32 %v566, %v568
        %v570 = vrot.slane %v556, %v569
        %v571 = vcombine.high %v563, %v563
        %v572 = vcombine.high %v570, %v570
        %v574 = vunpack.c.l.s4 1966171168
        %v575 = vunpack.c.0.s8 %v574
        %v576 = vlaneseq
        %v577 = vshrl.u32 %v576, 7
        %v578 = vsub.s32 %v575, %v577
        %v579 = vrot.slane %v563, %v578
        %v581 = vunpack.c.l.s4 1966171168
        %v582 = vunpack.c.0.s8 %v581
        %v583 = vlaneseq
        %v584 = vshrl.u32 %v583, 7
        %v585 = vsub.s32 %v582, %v584
        %v586 = vrot.slane %v570, %v585
        %v588 = vunpack.c.l.s4 1966171168
        %v589 = vunpack.c.0.s8 %v588
        %v590 = vlaneseq
        %v591 = vshrl.u32 %v590, 7
        %v592 = vsub.s32 %v589, %v591
        %v593 = vrot.slane %v571, %v592
        %v595 = vunpack.c.l.s4 1966171168
        %v596 = vunpack.c.0.s8 %v595
        %v597 = vlaneseq
        %v598 = vshrl.u32 %v597, 7
        %v599 = vsub.s32 %v596, %v598
        %v600 = vrot.slane %v572, %v599
        %v601 = vcombine.high %v579, %v579
        %v602 = vcombine.high %v586, %v586
        %v603 = vcombine.high %v593, %v593
        %v604 = vcombine.high %v600, %v600
        %v605 = vlaneseq
        %v606 = vshrl.u32 %v605, 7
        %v607 = vcombine.high %v549, %v549
        %v609 = vunpack.c.l.s4 1966171168
        %v610 = vunpack.c.0.s8 %v609
        %v611 = vlaneseq
        %v612 = vshrl.u32 %v611, 7
        %v613 = vsub.s32 %v610, %v612
        %v614 = vrot.slane %v549, %v613
        %v616 = vunpack.c.l.s4 1966171168
        %v617 = vunpack.c.0.s8 %v616
        %v618 = vlaneseq
        %v619 = vshrl.u32 %v618, 7
        %v620 = vsub.s32 %v617, %v619
        %v621 = vrot.slane %v607, %v620
        %v622 = vcombine.high %v614, %v614
        %v623 = vcombine.high %v621, %v621
        %v625 = vunpack.c.l.s4 1966171168
        %v626 = vunpack.c.0.s8 %v625
        %v627 = vlaneseq
        %v628 = vshrl.u32 %v627, 7
        %v629 = vsub.s32 %v626, %v628
        %v630 = vrot.slane %v614, %v629
        %v632 = vunpack.c.l.s4 1966171168
        %v633 = vunpack.c.0.s8 %v632
        %v634 = vlaneseq
        %v635 = vshrl.u32 %v634, 7
        %v636 = vsub.s32 %v633, %v635
        %v637 = vrot.slane %v621, %v636
        %v639 = vunpack.c.l.s4 1966171168
        %v640 = vunpack.c.0.s8 %v639
        %v641 = vlaneseq
        %v642 = vshrl.u32 %v641, 7
        %v643 = vsub.s32 %v640, %v642
        %v644 = vrot.slane %v622, %v643
        %v646 = vunpack.c.l.s4 1966171168
        %v647 = vunpack.c.0.s8 %v646
        %v648 = vlaneseq
        %v649 = vshrl.u32 %v648, 7
        %v650 = vsub.s32 %v647, %v649
        %v651 = vrot.slane %v623, %v650
        %v652 = vcombine.high %v630, %v630
        %v653 = vcombine.high %v637, %v637
        %v654 = vcombine.high %v644, %v644
        %v655 = vcombine.high %v651, %v651
        %v656 = vlaneseq
        %v657 = vshrl.u32 %v656, 7
        %v658 = vsub.s32 0, %v657
        %v659 = vrot.slane %v630, %v658
        %v660 = vlaneseq
        %v661 = vshrl.u32 %v660, 7
        %v662 = vsub.s32 0, %v661
        %v663 = vrot.slane %v644, %v662
        %v664 = vlaneseq
        %v665 = vshrl.u32 %v664, 7
        %v666 = vsub.s32 0, %v665
        %v667 = vrot.slane %v652, %v666
        %v668 = vlaneseq
        %v669 = vshrl.u32 %v668, 7
        %v670 = vsub.s32 0, %v669
        %v671 = vrot.slane %v654, %v670
        %v672 = vlaneseq
        %v673 = vshrl.u32 %v672, 7
        %v674 = vsub.s32 0, %v673
        %v675 = vrot.slane %v637, %v674
        %v676 = vlaneseq
        %v677 = vshrl.u32 %v676, 7
        %v678 = vsub.s32 0, %v677
        %v679 = vrot.slane %v651, %v678
        %v680 = vlaneseq
        %v681 = vshrl.u32 %v680, 7
        %v682 = vsub.s32 0, %v681
        %v683 = vrot.slane %v653, %v682
        %v684 = vlaneseq
        %v685 = vshrl.u32 %v684, 7
        %v686 = vsub.s32 0, %v685
        %v687 = vrot.slane %v655, %v686
        %vm688 = vcmp.lt.s32.totalorder %v606, %v659
        %vm689 = vcmp.lt.s32.totalorder %v606, %v663
        %vm690 = vcmp.lt.s32.totalorder %v606, %v667
        %vm691 = vcmp.lt.s32.totalorder %v606, %v671
        %vm692 = vcmp.lt.s32.totalorder %v606, %v675
        %vm693 = vcmp.lt.s32.totalorder %v606, %v679
        %vm694 = vcmp.lt.s32.totalorder %v606, %v683
        %vm695 = vcmp.lt.s32.totalorder %v606, %v687
        %v696 = vsel %vm688, 1, 0
        %v697 = vsel %vm689, 1, 0
        %v698 = vsel %vm690, 1, 0
        %v699 = vsel %vm691, 1, 0
        %v700 = vsel %vm692, 1, 0
        %v701 = vsel %vm693, 1, 0
        %v702 = vsel %vm694, 1, 0
        %v703 = vsel %vm695, 1, 0
        %v704 = vcvt.s32.f32 %v696
        %v705 = vcvt.s32.f32 %v697
        %v706 = vcvt.s32.f32 %v698
        %v707 = vcvt.s32.f32 %v699
        %v708 = vcvt.s32.f32 %v700
        %v709 = vcvt.s32.f32 %v701
        %v710 = vcvt.s32.f32 %v702
        %v711 = vcvt.s32.f32 %v703
        %v712 = vld [vmem:[%s482] sm:$0xff]
        %v713 = vld [vmem:[%s482 + $0x8] sm:$0xff]
        %v714 = vld [vmem:[%s482 + $0x10] sm:$0xff]
        %v715 = vld [vmem:[%s482 + $0x18] sm:$0xff]
        %v716 = vld [vmem:[%s482 + $0x20] sm:$0xff]
        %v717 = vld [vmem:[%s482 + $0x28] sm:$0xff]
        %v718 = vld [vmem:[%s482 + $0x30] sm:$0xff]
        %v719 = vld [vmem:[%s482 + $0x38] sm:$0xff]
        %v720 = vld [vmem:[#allocation5] sm:$0xff]
        %v721 = vld [vmem:[#allocation5 + $0x8] sm:$0xff]
        %v722 = vld [vmem:[#allocation5 + $0x10] sm:$0xff]
        %v723 = vld [vmem:[#allocation5 + $0x18] sm:$0xff]
        %v724 = vld [vmem:[#allocation5 + $0x20] sm:$0xff]
        %v725 = vld [vmem:[#allocation5 + $0x28] sm:$0xff]
        %v726 = vld [vmem:[#allocation5 + $0x30] sm:$0xff]
        %v727 = vld [vmem:[#allocation5 + $0x38] sm:$0xff]
        %v728 = vld [vmem:[#allocation5 + $0x40] sm:$0xff]
        %v729 = vld [vmem:[#allocation5 + $0x48] sm:$0xff]
        %v730 = vld [vmem:[#allocation5 + $0x50] sm:$0xff]
        %v731 = vld [vmem:[#allocation5 + $0x58] sm:$0xff]
        %v732 = vld [vmem:[#allocation5 + $0x60] sm:$0xff]
        %v733 = vld [vmem:[#allocation5 + $0x68] sm:$0xff]
        %v734 = vld [vmem:[#allocation5 + $0x70] sm:$0xff]
        %v735 = vld [vmem:[#allocation5 + $0x78] sm:$0xff]
        %v736 = vld [vmem:[%s3] sm:$0x1]
        %v737 = vld [vmem:[%s4] sm:$0x1]
        %v738 = vld [vmem:[%s5] sm:$0x1]
        %v739 = vld [vmem:[%s6] sm:$0x1]
        %v741 = vlaneseq
        %v742 = vshrl.u32 %v741, 7
        %v743 = vsub.s32 0, %v742
        %v744 = vrot.slane %v736, %v743
        %746 = vmatprep.subr.mxu0 0.0
        %747 = vmatpush1.msra.mxu0 %v720
        %748 = vmatprep.subr.mxu0 0.0
        %749 = vmatpush1.msra.mxu0 %v721
        %750 = vmatprep.subr.mxu0 0.0
        %751 = vmatpush1.msra.mxu0 %v722
        %752 = vmatprep.subr.mxu0 0.0
        %753 = vmatpush1.msra.mxu0 %v723
        %754 = vmatprep.subr.mxu0 0.0
        %755 = vmatpush1.msra.mxu0 %v724
        %756 = vmatprep.subr.mxu0 0.0
        %757 = vmatpush1.msra.mxu0 %v725
        %758 = vmatprep.subr.mxu0 0.0
        %759 = vmatpush1.msra.mxu0 %v726
        %760 = vmatprep.subr.mxu0 0.0
        %761 = vmatpush1.msra.mxu0 %v727
        %762 = vmatprep.subr.mxu0 0.0
        %763 = vmatpush1.msra.mxu0 %v728
        %764 = vmatprep.subr.mxu0 0.0
        %765 = vmatpush1.msra.mxu0 %v729
        %766 = vmatprep.subr.mxu0 0.0
        %767 = vmatpush1.msra.mxu0 %v730
        %768 = vmatprep.subr.mxu0 0.0
        %769 = vmatpush1.msra.mxu0 %v731
        %770 = vmatprep.subr.mxu0 0.0
        %771 = vmatpush1.msra.mxu0 %v732
        %772 = vmatprep.subr.mxu0 0.0
        %773 = vmatpush1.msra.mxu0 %v733
        %774 = vmatprep.subr.mxu0 0.0
        %775 = vmatpush1.msra.mxu0 %v734
        %776 = vmatprep.subr.mxu0 0.0
        %777 = vmatpush1.msra.mxu0 %v735
        %778 = vmatprep.subr.mxu0 0.0
        %779 = vmatpush1.msra.mxu0 0.0
        %780 = vmatprep.subr.mxu0 0.0
        %781 = vmatpush1.msra.mxu0 0.0
        %782 = vmatprep.subr.mxu0 0.0
        %783 = vmatpush1.msra.mxu0 0.0
        %784 = vmatprep.subr.mxu0 0.0
        %785 = vmatpush1.msra.mxu0 0.0
        %786 = vmatprep.subr.mxu0 0.0
        %787 = vmatpush1.msra.mxu0 0.0
        %788 = vmatprep.subr.mxu0 0.0
        %789 = vmatpush1.msra.mxu0 0.0
        %790 = vmatprep.subr.mxu0 0.0
        %791 = vmatpush1.msra.mxu0 0.0
        %792 = vmatprep.subr.mxu0 0.0
        %793 = vmatpush1.msra.mxu0 0.0
        %794 = vmatprep.subr.mxu0 0.0
        %795 = vmatpush1.msra.mxu0 0.0
        %796 = vmatprep.subr.mxu0 0.0
        %797 = vmatpush1.msra.mxu0 0.0
        %798 = vmatprep.subr.mxu0 0.0
        %799 = vmatpush1.msra.mxu0 0.0
        %800 = vmatprep.subr.mxu0 0.0
        %801 = vmatpush1.msra.mxu0 0.0
        %802 = vmatprep.subr.mxu0 0.0
        %803 = vmatpush1.msra.mxu0 0.0
        %804 = vmatprep.subr.mxu0 0.0
        %805 = vmatpush1.msra.mxu0 0.0
        %806 = vmatprep.subr.mxu0 0.0
        %807 = vmatpush1.msra.mxu0 0.0
        %808 = vmatprep.subr.mxu0 0.0
        %809 = vmatpush1.msra.mxu0 0.0
        %810 = vmatprep.mubr.f32.mxu0 0.0
        %811 = vmatmul.mubr.f32.gmra.mrb[0].mxu0 %v712
        %v812 = vpop.f32.mrb[0].mxu0
        %v813 = vadd.f32 %v744, %v812
        %v814 = vpop.f32.mrb[0].mxu0
        %815 = vmatprep.mubr.f32.mxu0 0.0
        %816 = vmatmul.mubr.f32.gmra.mrb[0].mxu0 %v713
        %v817 = vpop.f32.mrb[0].mxu0
        %v818 = vadd.f32 %v744, %v817
        %v819 = vpop.f32.mrb[0].mxu0
        %820 = vmatprep.mubr.f32.mxu0 0.0
        %821 = vmatmul.mubr.f32.gmra.mrb[0].mxu0 %v714
        %v822 = vpop.f32.mrb[0].mxu0
        %v823 = vadd.f32 %v744, %v822
        %v824 = vpop.f32.mrb[0].mxu0
        %825 = vmatprep.mubr.f32.mxu0 0.0
        %826 = vmatmul.mubr.f32.gmra.mrb[0].mxu0 %v715
        %v827 = vpop.f32.mrb[0].mxu0
        %v828 = vadd.f32 %v744, %v827
        %v829 = vpop.f32.mrb[0].mxu0
        %830 = vmatprep.mubr.f32.mxu0 0.0
        %831 = vmatmul.mubr.f32.gmra.mrb[0].mxu0 %v716
        %v832 = vpop.f32.mrb[0].mxu0
        %v833 = vadd.f32 %v744, %v832
        %v834 = vpop.f32.mrb[0].mxu0
        %835 = vmatprep.mubr.f32.mxu0 0.0
        %836 = vmatmul.mubr.f32.gmra.mrb[0].mxu0 %v717
        %v837 = vpop.f32.mrb[0].mxu0
        %v838 = vadd.f32 %v744, %v837
        %v839 = vpop.f32.mrb[0].mxu0
        %840 = vmatprep.mubr.f32.mxu0 0.0
        %841 = vmatmul.mubr.f32.gmra.mrb[0].mxu0 %v718
        %v842 = vpop.f32.mrb[0].mxu0
        %v843 = vadd.f32 %v744, %v842
        %v844 = vpop.f32.mrb[0].mxu0
        %845 = vmatprep.mubr.f32.mxu0 0.0
        %846 = vmatmul.mubr.f32.gmra.mrb[0].mxu0 %v719
        %v847 = vpop.f32.mrb[0].mxu0
        %v848 = vadd.f32 %v744, %v847
        %v849 = vpop.f32.mrb[0].mxu0
        %850 = vdwg.mxu0
        %852 = vset.pattern.permute.xlu0 0
        %853 = vperm.xlu0 %852, %v704
        %v854 = vpop.permute.xlu0 %853
        %857 = vset.pattern.permute.xlu0 0
        %858 = vperm.xlu0 %857, %v705
        %v859 = vpop.permute.xlu0 %858
        %862 = vset.pattern.permute.xlu0 0
        %863 = vperm.xlu0 %862, %v706
        %v864 = vpop.permute.xlu0 %863
        %867 = vset.pattern.permute.xlu0 0
        %868 = vperm.xlu0 %867, %v707
        %v869 = vpop.permute.xlu0 %868
        %872 = vset.pattern.permute.xlu0 0
        %873 = vperm.xlu0 %872, %v708
        %v874 = vpop.permute.xlu0 %873
        %877 = vset.pattern.permute.xlu0 0
        %878 = vperm.xlu0 %877, %v709
        %v879 = vpop.permute.xlu0 %878
        %882 = vset.pattern.permute.xlu0 0
        %883 = vperm.xlu0 %882, %v710
        %v884 = vpop.permute.xlu0 %883
        %887 = vset.pattern.permute.xlu0 0
        %888 = vperm.xlu0 %887, %v711
        %v889 = vpop.permute.xlu0 %888
        %v891 = vmul.f32 %v813, %v854
        %v892 = vmul.f32 %v818, %v859
        %v893 = vmul.f32 %v823, %v864
        %v894 = vmul.f32 %v828, %v869
        %v895 = vmul.f32 %v833, %v874
        %v896 = vmul.f32 %v838, %v879
        %v897 = vmul.f32 %v843, %v884
        %v898 = vmul.f32 %v848, %v889
        %v899 = vrot.slane %v891, 4
        %v900 = vadd.f32 %v891, %v899
        %v901 = vrot.slane %v900, 2
        %v902 = vadd.f32 %v900, %v901
        %v903 = vrot.slane %v902, 1
        %v904 = vadd.f32 %v902, %v903
        %v905 = vrot.slane %v892, 4
        %v906 = vadd.f32 %v892, %v905
        %v907 = vrot.slane %v906, 2
        %v908 = vadd.f32 %v906, %v907
        %v909 = vrot.slane %v908, 1
        %v910 = vadd.f32 %v908, %v909
        %v911 = vrot.slane %v893, 4
        %v912 = vadd.f32 %v893, %v911
        %v913 = vrot.slane %v912, 2
        %v914 = vadd.f32 %v912, %v913
        %v915 = vrot.slane %v914, 1
        %v916 = vadd.f32 %v914, %v915
        %v917 = vrot.slane %v894, 4
        %v918 = vadd.f32 %v894, %v917
        %v919 = vrot.slane %v918, 2
        %v920 = vadd.f32 %v918, %v919
        %v921 = vrot.slane %v920, 1
        %v922 = vadd.f32 %v920, %v921
        %v923 = vrot.slane %v895, 4
        %v924 = vadd.f32 %v895, %v923
        %v925 = vrot.slane %v924, 2
        %v926 = vadd.f32 %v924, %v925
        %v927 = vrot.slane %v926, 1
        %v928 = vadd.f32 %v926, %v927
        %v929 = vrot.slane %v896, 4
        %v930 = vadd.f32 %v896, %v929
        %v931 = vrot.slane %v930, 2
        %v932 = vadd.f32 %v930, %v931
        %v933 = vrot.slane %v932, 1
        %v934 = vadd.f32 %v932, %v933
        %v935 = vrot.slane %v897, 4
        %v936 = vadd.f32 %v897, %v935
        %v937 = vrot.slane %v936, 2
        %v938 = vadd.f32 %v936, %v937
        %v939 = vrot.slane %v938, 1
        %v940 = vadd.f32 %v938, %v939
        %v941 = vrot.slane %v898, 4
        %v942 = vadd.f32 %v898, %v941
        %v943 = vrot.slane %v942, 2
        %v944 = vadd.f32 %v942, %v943
        %v945 = vrot.slane %v944, 1
        %v946 = vadd.f32 %v944, %v945
        %947 = vset.pattern.permute.xlu0 0
        %948 = vperm.xlu0 %947, %v579
        %v949 = vpop.permute.xlu0 %948
        %v951 = vlaneseq
        %v952 = vshrl.u32 %v951, 7
        %v953 = vsub.s32 0, %v952
        %v954 = vrot.slane %v949, %v953
        %955 = vset.pattern.permute.xlu0 0
        %956 = vperm.xlu0 %955, %v593
        %v957 = vpop.permute.xlu0 %956
        %v959 = vlaneseq
        %v960 = vshrl.u32 %v959, 7
        %v961 = vsub.s32 0, %v960
        %v962 = vrot.slane %v957, %v961
        %963 = vset.pattern.permute.xlu0 0
        %964 = vperm.xlu0 %963, %v601
        %v965 = vpop.permute.xlu0 %964
        %v967 = vlaneseq
        %v968 = vshrl.u32 %v967, 7
        %v969 = vsub.s32 0, %v968
        %v970 = vrot.slane %v965, %v969
        %971 = vset.pattern.permute.xlu0 0
        %972 = vperm.xlu0 %971, %v603
        %v973 = vpop.permute.xlu0 %972
        %v975 = vlaneseq
        %v976 = vshrl.u32 %v975, 7
        %v977 = vsub.s32 0, %v976
        %v978 = vrot.slane %v973, %v977
        %979 = vset.pattern.permute.xlu0 0
        %980 = vperm.xlu0 %979, %v586
        %v981 = vpop.permute.xlu0 %980
        %v983 = vlaneseq
        %v984 = vshrl.u32 %v983, 7
        %v985 = vsub.s32 0, %v984
        %v986 = vrot.slane %v981, %v985
        %987 = vset.pattern.permute.xlu0 0
        %988 = vperm.xlu0 %987, %v600
        %v989 = vpop.permute.xlu0 %988
        %v991 = vlaneseq
        %v992 = vshrl.u32 %v991, 7
        %v993 = vsub.s32 0, %v992
        %v994 = vrot.slane %v989, %v993
        %995 = vset.pattern.permute.xlu0 0
        %996 = vperm.xlu0 %995, %v602
        %v997 = vpop.permute.xlu0 %996
        %v999 = vlaneseq
        %v1000 = vshrl.u32 %v999, 7
        %v1001 = vsub.s32 0, %v1000
        %v1002 = vrot.slane %v997, %v1001
        %1003 = vset.pattern.permute.xlu0 0
        %1004 = vperm.xlu0 %1003, %v604
        %v1005 = vpop.permute.xlu0 %1004
        %v1007 = vlaneseq
        %v1008 = vshrl.u32 %v1007, 7
        %v1009 = vsub.s32 0, %v1008
        %v1010 = vrot.slane %v1005, %v1009
        %v1011 = vmul.f32 %v904, %v954
        %v1012 = vmul.f32 %v910, %v962
        %v1013 = vmul.f32 %v916, %v970
        %v1014 = vmul.f32 %v922, %v978
        %v1015 = vmul.f32 %v928, %v986
        %v1016 = vmul.f32 %v934, %v994
        %v1017 = vmul.f32 %v940, %v1002
        %v1018 = vmul.f32 %v946, %v1010
        %v1019 = vmul.f32 %v1011, %v739
        %v1020 = vmul.f32 %v1012, %v739
        %v1021 = vmul.f32 %v1013, %v739
        %v1022 = vmul.f32 %v1014, %v739
        %v1023 = vmul.f32 %v1015, %v739
        %v1024 = vmul.f32 %v1016, %v739
        %v1025 = vmul.f32 %v1017, %v739
        %v1026 = vmul.f32 %v1018, %v739
        %v1027 = vlaneseq
        %v1028 = vshrl.u32 %v1027, 7
        %v1029 = vsub.s32 0, %v1028
        %v1030 = vrot.slane %v1019, %v1029
        %v1031 = vlaneseq
        %v1032 = vshrl.u32 %v1031, 7
        %v1033 = vsub.s32 0, %v1032
        %v1034 = vrot.slane %v1020, %v1033
        %v1035 = vlaneseq
        %v1036 = vshrl.u32 %v1035, 7
        %v1037 = vsub.s32 0, %v1036
        %v1038 = vrot.slane %v1021, %v1037
        %v1039 = vlaneseq
        %v1040 = vshrl.u32 %v1039, 7
        %v1041 = vsub.s32 0, %v1040
        %v1042 = vrot.slane %v1022, %v1041
        %v1043 = vlaneseq
        %v1044 = vshrl.u32 %v1043, 7
        %v1045 = vsub.s32 0, %v1044
        %v1046 = vrot.slane %v1023, %v1045
        %v1047 = vlaneseq
        %v1048 = vshrl.u32 %v1047, 7
        %v1049 = vsub.s32 0, %v1048
        %v1050 = vrot.slane %v1024, %v1049
        %v1051 = vlaneseq
        %v1052 = vshrl.u32 %v1051, 7
        %v1053 = vsub.s32 0, %v1052
        %v1054 = vrot.slane %v1025, %v1053
        %v1055 = vlaneseq
        %v1056 = vshrl.u32 %v1055, 7
        %v1057 = vsub.s32 0, %v1056
        %v1058 = vrot.slane %v1026, %v1057
        %v1059 = vsub.f32 %v813, %v1030
        %v1060 = vsub.f32 %v818, %v1034
        %v1061 = vsub.f32 %v823, %v1038
        %v1062 = vsub.f32 %v828, %v1042
        %v1063 = vsub.f32 %v833, %v1046
        %v1064 = vsub.f32 %v838, %v1050
        %v1065 = vsub.f32 %v843, %v1054
        %v1066 = vsub.f32 %v848, %v1058
        %v1067 = vmul.f32 %v1059, %v1059
        %v1068 = vmul.f32 %v1060, %v1060
        %v1069 = vmul.f32 %v1061, %v1061
        %v1070 = vmul.f32 %v1062, %v1062
        %v1071 = vmul.f32 %v1063, %v1063
        %v1072 = vmul.f32 %v1064, %v1064
        %v1073 = vmul.f32 %v1065, %v1065
        %v1074 = vmul.f32 %v1066, %v1066
        %v1075 = vmul.f32 %v1067, %v854
        %v1076 = vmul.f32 %v1068, %v859
        %v1077 = vmul.f32 %v1069, %v864
        %v1078 = vmul.f32 %v1070, %v869
        %v1079 = vmul.f32 %v1071, %v874
        %v1080 = vmul.f32 %v1072, %v879
        %v1081 = vmul.f32 %v1073, %v884
        %v1082 = vmul.f32 %v1074, %v889
        %v1083 = vrot.slane %v1075, 4
        %v1084 = vadd.f32 %v1075, %v1083
        %v1085 = vrot.slane %v1084, 2
        %v1086 = vadd.f32 %v1084, %v1085
        %v1087 = vrot.slane %v1086, 1
        %v1088 = vadd.f32 %v1086, %v1087
        %v1089 = vrot.slane %v1076, 4
        %v1090 = vadd.f32 %v1076, %v1089
        %v1091 = vrot.slane %v1090, 2
        %v1092 = vadd.f32 %v1090, %v1091
        %v1093 = vrot.slane %v1092, 1
        %v1094 = vadd.f32 %v1092, %v1093
        %v1095 = vrot.slane %v1077, 4
        %v1096 = vadd.f32 %v1077, %v1095
        %v1097 = vrot.slane %v1096, 2
        %v1098 = vadd.f32 %v1096, %v1097
        %v1099 = vrot.slane %v1098, 1
        %v1100 = vadd.f32 %v1098, %v1099
        %v1101 = vrot.slane %v1078, 4
        %v1102 = vadd.f32 %v1078, %v1101
        %v1103 = vrot.slane %v1102, 2
        %v1104 = vadd.f32 %v1102, %v1103
        %v1105 = vrot.slane %v1104, 1
        %v1106 = vadd.f32 %v1104, %v1105
        %v1107 = vrot.slane %v1079, 4
        %v1108 = vadd.f32 %v1079, %v1107
        %v1109 = vrot.slane %v1108, 2
        %v1110 = vadd.f32 %v1108, %v1109
        %v1111 = vrot.slane %v1110, 1
        %v1112 = vadd.f32 %v1110, %v1111
        %v1113 = vrot.slane %v1080, 4
        %v1114 = vadd.f32 %v1080, %v1113
        %v1115 = vrot.slane %v1114, 2
        %v1116 = vadd.f32 %v1114, %v1115
        %v1117 = vrot.slane %v1116, 1
        %v1118 = vadd.f32 %v1116, %v1117
        %v1119 = vrot.slane %v1081, 4
        %v1120 = vadd.f32 %v1081, %v1119
        %v1121 = vrot.slane %v1120, 2
        %v1122 = vadd.f32 %v1120, %v1121
        %v1123 = vrot.slane %v1122, 1
        %v1124 = vadd.f32 %v1122, %v1123
        %v1125 = vrot.slane %v1082, 4
        %v1126 = vadd.f32 %v1082, %v1125
        %v1127 = vrot.slane %v1126, 2
        %v1128 = vadd.f32 %v1126, %v1127
        %v1129 = vrot.slane %v1128, 1
        %v1130 = vadd.f32 %v1128, %v1129
        %v1131 = vmul.f32 %v1088, %v954
        %v1132 = vmul.f32 %v1094, %v962
        %v1133 = vmul.f32 %v1100, %v970
        %v1134 = vmul.f32 %v1106, %v978
        %v1135 = vmul.f32 %v1112, %v986
        %v1136 = vmul.f32 %v1118, %v994
        %v1137 = vmul.f32 %v1124, %v1002
        %v1138 = vmul.f32 %v1130, %v1010
        %v1139 = vadd.f32 %v1131, 1e-06
        %v1140 = vadd.f32 %v1132, 1e-06
        %v1141 = vadd.f32 %v1133, 1e-06
        %v1142 = vadd.f32 %v1134, 1e-06
        %v1143 = vadd.f32 %v1135, 1e-06
        %v1144 = vadd.f32 %v1136, 1e-06
        %v1145 = vadd.f32 %v1137, 1e-06
        %v1146 = vadd.f32 %v1138, 1e-06
        %v1147 = vrsqrt.pop %v1139
        %v1148 = vrsqrt.pop %v1140
        %v1149 = vrsqrt.pop %v1141
        %v1150 = vrsqrt.pop %v1142
        %v1151 = vrsqrt.pop %v1143
        %v1152 = vrsqrt.pop %v1144
        %v1153 = vrsqrt.pop %v1145
        %v1154 = vrsqrt.pop %v1146
        %v1155 = vmul.f32 %v737, %v1147
        %v1156 = vmul.f32 %v737, %v1148
        %v1157 = vmul.f32 %v737, %v1149
        %v1158 = vmul.f32 %v737, %v1150
        %v1159 = vmul.f32 %v737, %v1151
        %v1160 = vmul.f32 %v737, %v1152
        %v1161 = vmul.f32 %v737, %v1153
        %v1162 = vmul.f32 %v737, %v1154
        %v1171 = vlaneseq
        %v1172 = vshrl.u32 %v1171, 7
        %v1173 = vsub.s32 0, %v1172
        %v1174 = vrot.slane %v1155, %v1173
        %v1175 = vlaneseq
        %v1176 = vshrl.u32 %v1175, 7
        %v1177 = vsub.s32 0, %v1176
        %v1178 = vrot.slane %v1156, %v1177
        %v1179 = vlaneseq
        %v1180 = vshrl.u32 %v1179, 7
        %v1181 = vsub.s32 0, %v1180
        %v1182 = vrot.slane %v1157, %v1181
        %v1183 = vlaneseq
        %v1184 = vshrl.u32 %v1183, 7
        %v1185 = vsub.s32 0, %v1184
        %v1186 = vrot.slane %v1158, %v1185
        %v1187 = vlaneseq
        %v1188 = vshrl.u32 %v1187, 7
        %v1189 = vsub.s32 0, %v1188
        %v1190 = vrot.slane %v1159, %v1189
        %v1191 = vlaneseq
        %v1192 = vshrl.u32 %v1191, 7
        %v1193 = vsub.s32 0, %v1192
        %v1194 = vrot.slane %v1160, %v1193
        %v1195 = vlaneseq
        %v1196 = vshrl.u32 %v1195, 7
        %v1197 = vsub.s32 0, %v1196
        %v1198 = vrot.slane %v1161, %v1197
        %v1199 = vlaneseq
        %v1200 = vshrl.u32 %v1199, 7
        %v1201 = vsub.s32 0, %v1200
        %v1202 = vrot.slane %v1162, %v1201
        %v1211 = vmul.f32 %v1059, %v1174
        %v1212 = vmul.f32 %v1060, %v1178
        %v1213 = vmul.f32 %v1061, %v1182
        %v1214 = vmul.f32 %v1062, %v1186
        %v1215 = vmul.f32 %v1063, %v1190
        %v1216 = vmul.f32 %v1064, %v1194
        %v1217 = vmul.f32 %v1065, %v1198
        %v1218 = vmul.f32 %v1066, %v1202
        %v1220 = vlaneseq
        %v1221 = vshrl.u32 %v1220, 7
        %v1222 = vsub.s32 0, %v1221
        %v1223 = vrot.slane %v738, %v1222
        %v1225 = vadd.f32 %v1211, %v1223
        %v1226 = vadd.f32 %v1212, %v1223
        %v1227 = vadd.f32 %v1213, %v1223
        %v1228 = vadd.f32 %v1214, %v1223
        %v1229 = vadd.f32 %v1215, %v1223
        %v1230 = vadd.f32 %v1216, %v1223
        %v1231 = vadd.f32 %v1217, %v1223
        %v1232 = vadd.f32 %v1218, %v1223
        %v1233 = vmax.f32 %v1225, 0.0
        %v1234 = vmax.f32 %v1226, 0.0
        %v1235 = vmax.f32 %v1227, 0.0
        %v1236 = vmax.f32 %v1228, 0.0
        %v1237 = vmax.f32 %v1229, 0.0
        %v1238 = vmax.f32 %v1230, 0.0
        %v1239 = vmax.f32 %v1231, 0.0
        %v1240 = vmax.f32 %v1232, 0.0
        %v1241 = vld [vmem:[#allocation7] sm:$0xff]
        %v1242 = vld [vmem:[#allocation7 + $0x8] sm:$0xff]
        %v1243 = vld [vmem:[#allocation7 + $0x10] sm:$0xff]
        %v1244 = vld [vmem:[#allocation7 + $0x18] sm:$0xff]
        %v1245 = vld [vmem:[#allocation7 + $0x20] sm:$0xff]
        %v1246 = vld [vmem:[#allocation7 + $0x28] sm:$0xff]
        %v1247 = vld [vmem:[#allocation7 + $0x30] sm:$0xff]
        %v1248 = vld [vmem:[#allocation7 + $0x38] sm:$0xff]
        %v1249 = vld [vmem:[#allocation7 + $0x40] sm:$0xff]
        %v1250 = vld [vmem:[#allocation7 + $0x48] sm:$0xff]
        %v1251 = vld [vmem:[#allocation7 + $0x50] sm:$0xff]
        %v1252 = vld [vmem:[#allocation7 + $0x58] sm:$0xff]
        %v1253 = vld [vmem:[#allocation7 + $0x60] sm:$0xff]
        %v1254 = vld [vmem:[#allocation7 + $0x68] sm:$0xff]
        %v1255 = vld [vmem:[#allocation7 + $0x70] sm:$0xff]
        %v1256 = vld [vmem:[#allocation7 + $0x78] sm:$0xff]
        %v1257 = vld [vmem:[%s8] sm:$0x1]
        %v1258 = vld [vmem:[%s9] sm:$0x1]
        %v1259 = vld [vmem:[%s10] sm:$0x1]
        %v1260 = vld [vmem:[%s11] sm:$0x1]
        %v1262 = vlaneseq
        %v1263 = vshrl.u32 %v1262, 7
        %v1264 = vsub.s32 0, %v1263
        %v1265 = vrot.slane %v1257, %v1264
        %1267 = vmatprep.subr.mxu0 0.0
        %1268 = vmatpush1.msra.mxu0 %v1241
        %1269 = vmatprep.subr.mxu0 0.0
        %1270 = vmatpush1.msra.mxu0 %v1242
        %1271 = vmatprep.subr.mxu0 0.0
        %1272 = vmatpush1.msra.mxu0 %v1243
        %1273 = vmatprep.subr.mxu0 0.0
        %1274 = vmatpush1.msra.mxu0 %v1244
        %1275 = vmatprep.subr.mxu0 0.0
        %1276 = vmatpush1.msra.mxu0 %v1245
        %1277 = vmatprep.subr.mxu0 0.0
        %1278 = vmatpush1.msra.mxu0 %v1246
        %1279 = vmatprep.subr.mxu0 0.0
        %1280 = vmatpush1.msra.mxu0 %v1247
        %1281 = vmatprep.subr.mxu0 0.0
        %1282 = vmatpush1.msra.mxu0 %v1248
        %1283 = vmatprep.subr.mxu0 0.0
        %1284 = vmatpush1.msra.mxu0 %v1249
        %1285 = vmatprep.subr.mxu0 0.0
        %1286 = vmatpush1.msra.mxu0 %v1250
        %1287 = vmatprep.subr.mxu0 0.0
        %1288 = vmatpush1.msra.mxu0 %v1251
        %1289 = vmatprep.subr.mxu0 0.0
        %1290 = vmatpush1.msra.mxu0 %v1252
        %1291 = vmatprep.subr.mxu0 0.0
        %1292 = vmatpush1.msra.mxu0 %v1253
        %1293 = vmatprep.subr.mxu0 0.0
        %1294 = vmatpush1.msra.mxu0 %v1254
        %1295 = vmatprep.subr.mxu0 0.0
        %1296 = vmatpush1.msra.mxu0 %v1255
        %1297 = vmatprep.subr.mxu0 0.0
        %1298 = vmatpush1.msra.mxu0 %v1256
        %1299 = vmatprep.subr.mxu0 0.0
        %1300 = vmatpush1.msra.mxu0 0.0
        %1301 = vmatprep.subr.mxu0 0.0
        %1302 = vmatpush1.msra.mxu0 0.0
        %1303 = vmatprep.subr.mxu0 0.0
        %1304 = vmatpush1.msra.mxu0 0.0
        %1305 = vmatprep.subr.mxu0 0.0
        %1306 = vmatpush1.msra.mxu0 0.0
        %1307 = vmatprep.subr.mxu0 0.0
        %1308 = vmatpush1.msra.mxu0 0.0
        %1309 = vmatprep.subr.mxu0 0.0
        %1310 = vmatpush1.msra.mxu0 0.0
        %1311 = vmatprep.subr.mxu0 0.0
        %1312 = vmatpush1.msra.mxu0 0.0
        %1313 = vmatprep.subr.mxu0 0.0
        %1314 = vmatpush1.msra.mxu0 0.0
        %1315 = vmatprep.subr.mxu0 0.0
        %1316 = vmatpush1.msra.mxu0 0.0
        %1317 = vmatprep.subr.mxu0 0.0
        %1318 = vmatpush1.msra.mxu0 0.0
        %1319 = vmatprep.subr.mxu0 0.0
        %1320 = vmatpush1.msra.mxu0 0.0
        %1321 = vmatprep.subr.mxu0 0.0
        %1322 = vmatpush1.msra.mxu0 0.0
        %1323 = vmatprep.subr.mxu0 0.0
        %1324 = vmatpush1.msra.mxu0 0.0
        %1325 = vmatprep.subr.mxu0 0.0
        %1326 = vmatpush1.msra.mxu0 0.0
        %1327 = vmatprep.subr.mxu0 0.0
        %1328 = vmatpush1.msra.mxu0 0.0
        %1329 = vmatprep.subr.mxu0 0.0
        %1330 = vmatpush1.msra.mxu0 0.0
        %1331 = vmatprep.mubr.f32.mxu0 0.0
        %1332 = vmatmul.mubr.f32.gmra.mrb[0].mxu0 %v1233
        %v1333 = vpop.f32.mrb[0].mxu0
        %v1334 = vadd.f32 %v1265, %v1333
        %v1335 = vpop.f32.mrb[0].mxu0
        %1336 = vmatprep.mubr.f32.mxu0 0.0
        %1337 = vmatmul.mubr.f32.gmra.mrb[0].mxu0 %v1234
        %v1338 = vpop.f32.mrb[0].mxu0
        %v1339 = vadd.f32 %v1265, %v1338
        %v1340 = vpop.f32.mrb[0].mxu0
        %1341 = vmatprep.mubr.f32.mxu0 0.0
        %1342 = vmatmul.mubr.f32.gmra.mrb[0].mxu0 %v1235
        %v1343 = vpop.f32.mrb[0].mxu0
        %v1344 = vadd.f32 %v1265, %v1343
        %v1345 = vpop.f32.mrb[0].mxu0
        %1346 = vmatprep.mubr.f32.mxu0 0.0
        %1347 = vmatmul.mubr.f32.gmra.mrb[0].mxu0 %v1236
        %v1348 = vpop.f32.mrb[0].mxu0
        %v1349 = vadd.f32 %v1265, %v1348
        %v1350 = vpop.f32.mrb[0].mxu0
        %1351 = vmatprep.mubr.f32.mxu0 0.0
        %1352 = vmatmul.mubr.f32.gmra.mrb[0].mxu0 %v1237
        %v1353 = vpop.f32.mrb[0].mxu0
        %v1354 = vadd.f32 %v1265, %v1353
        %v1355 = vpop.f32.mrb[0].mxu0
        %1356 = vmatprep.mubr.f32.mxu0 0.0
        %1357 = vmatmul.mubr.f32.gmra.mrb[0].mxu0 %v1238
        %v1358 = vpop.f32.mrb[0].mxu0
        %v1359 = vadd.f32 %v1265, %v1358
        %v1360 = vpop.f32.mrb[0].mxu0
        %1361 = vmatprep.mubr.f32.mxu0 0.0
        %1362 = vmatmul.mubr.f32.gmra.mrb[0].mxu0 %v1239
        %v1363 = vpop.f32.mrb[0].mxu0
        %v1364 = vadd.f32 %v1265, %v1363
        %v1365 = vpop.f32.mrb[0].mxu0
        %1366 = vmatprep.mubr.f32.mxu0 0.0
        %1367 = vmatmul.mubr.f32.gmra.mrb[0].mxu0 %v1240
        %v1368 = vpop.f32.mrb[0].mxu0
        %v1369 = vadd.f32 %v1265, %v1368
        %v1370 = vpop.f32.mrb[0].mxu0
        %1371 = vdwg.mxu0
        %v1372 = vmul.f32 %v1334, %v854
        %v1373 = vmul.f32 %v1339, %v859
        %v1374 = vmul.f32 %v1344, %v864
        %v1375 = vmul.f32 %v1349, %v869
        %v1376 = vmul.f32 %v1354, %v874
        %v1377 = vmul.f32 %v1359, %v879
        %v1378 = vmul.f32 %v1364, %v884
        %v1379 = vmul.f32 %v1369, %v889
        %v1380 = vrot.slane %v1372, 4
        %v1381 = vadd.f32 %v1372, %v1380
        %v1382 = vrot.slane %v1381, 2
        %v1383 = vadd.f32 %v1381, %v1382
        %v1384 = vrot.slane %v1383, 1
        %v1385 = vadd.f32 %v1383, %v1384
        %v1386 = vrot.slane %v1373, 4
        %v1387 = vadd.f32 %v1373, %v1386
        %v1388 = vrot.slane %v1387, 2
        %v1389 = vadd.f32 %v1387, %v1388
        %v1390 = vrot.slane %v1389, 1
        %v1391 = vadd.f32 %v1389, %v1390
        %v1392 = vrot.slane %v1374, 4
        %v1393 = vadd.f32 %v1374, %v1392
        %v1394 = vrot.slane %v1393, 2
        %v1395 = vadd.f32 %v1393, %v1394
        %v1396 = vrot.slane %v1395, 1
        %v1397 = vadd.f32 %v1395, %v1396
        %v1398 = vrot.slane %v1375, 4
        %v1399 = vadd.f32 %v1375, %v1398
        %v1400 = vrot.slane %v1399, 2
        %v1401 = vadd.f32 %v1399, %v1400
        %v1402 = vrot.slane %v1401, 1
        %v1403 = vadd.f32 %v1401, %v1402
        %v1404 = vrot.slane %v1376, 4
        %v1405 = vadd.f32 %v1376, %v1404
        %v1406 = vrot.slane %v1405, 2
        %v1407 = vadd.f32 %v1405, %v1406
        %v1408 = vrot.slane %v1407, 1
        %v1409 = vadd.f32 %v1407, %v1408
        %v1410 = vrot.slane %v1377, 4
        %v1411 = vadd.f32 %v1377, %v1410
        %v1412 = vrot.slane %v1411, 2
        %v1413 = vadd.f32 %v1411, %v1412
        %v1414 = vrot.slane %v1413, 1
        %v1415 = vadd.f32 %v1413, %v1414
        %v1416 = vrot.slane %v1378, 4
        %v1417 = vadd.f32 %v1378, %v1416
        %v1418 = vrot.slane %v1417, 2
        %v1419 = vadd.f32 %v1417, %v1418
        %v1420 = vrot.slane %v1419, 1
        %v1421 = vadd.f32 %v1419, %v1420
        %v1422 = vrot.slane %v1379, 4
        %v1423 = vadd.f32 %v1379, %v1422
        %v1424 = vrot.slane %v1423, 2
        %v1425 = vadd.f32 %v1423, %v1424
        %v1426 = vrot.slane %v1425, 1
        %v1427 = vadd.f32 %v1425, %v1426
        %v1428 = vmul.f32 %v1385, %v954
        %v1429 = vmul.f32 %v1391, %v962
        %v1430 = vmul.f32 %v1397, %v970
        %v1431 = vmul.f32 %v1403, %v978
        %v1432 = vmul.f32 %v1409, %v986
        %v1433 = vmul.f32 %v1415, %v994
        %v1434 = vmul.f32 %v1421, %v1002
        %v1435 = vmul.f32 %v1427, %v1010
        %v1436 = vmul.f32 %v1428, %v1260
        %v1437 = vmul.f32 %v1429, %v1260
        %v1438 = vmul.f32 %v1430, %v1260
        %v1439 = vmul.f32 %v1431, %v1260
        %v1440 = vmul.f32 %v1432, %v1260
        %v1441 = vmul.f32 %v1433, %v1260
        %v1442 = vmul.f32 %v1434, %v1260
        %v1443 = vmul.f32 %v1435, %v1260
        %v1444 = vlaneseq
        %v1445 = vshrl.u32 %v1444, 7
        %v1446 = vsub.s32 0, %v1445
        %v1447 = vrot.slane %v1436, %v1446
        %v1448 = vlaneseq
        %v1449 = vshrl.u32 %v1448, 7
        %v1450 = vsub.s32 0, %v1449
        %v1451 = vrot.slane %v1437, %v1450
        %v1452 = vlaneseq
        %v1453 = vshrl.u32 %v1452, 7
        %v1454 = vsub.s32 0, %v1453
        %v1455 = vrot.slane %v1438, %v1454
        %v1456 = vlaneseq
        %v1457 = vshrl.u32 %v1456, 7
        %v1458 = vsub.s32 0, %v1457
        %v1459 = vrot.slane %v1439, %v1458
        %v1460 = vlaneseq
        %v1461 = vshrl.u32 %v1460, 7
        %v1462 = vsub.s32 0, %v1461
        %v1463 = vrot.slane %v1440, %v1462
        %v1464 = vlaneseq
        %v1465 = vshrl.u32 %v1464, 7
        %v1466 = vsub.s32 0, %v1465
        %v1467 = vrot.slane %v1441, %v1466
        %v1468 = vlaneseq
        %v1469 = vshrl.u32 %v1468, 7
        %v1470 = vsub.s32 0, %v1469
        %v1471 = vrot.slane %v1442, %v1470
        %v1472 = vlaneseq
        %v1473 = vshrl.u32 %v1472, 7
        %v1474 = vsub.s32 0, %v1473
        %v1475 = vrot.slane %v1443, %v1474
        %v1476 = vsub.f32 %v1334, %v1447
        %v1477 = vsub.f32 %v1339, %v1451
        %v1478 = vsub.f32 %v1344, %v1455
        %v1479 = vsub.f32 %v1349, %v1459
        %v1480 = vsub.f32 %v1354, %v1463
        %v1481 = vsub.f32 %v1359, %v1467
        %v1482 = vsub.f32 %v1364, %v1471
        %v1483 = vsub.f32 %v1369, %v1475
        %v1484 = vmul.f32 %v1476, %v1476
        %v1485 = vmul.f32 %v1477, %v1477
        %v1486 = vmul.f32 %v1478, %v1478
        %v1487 = vmul.f32 %v1479, %v1479
        %v1488 = vmul.f32 %v1480, %v1480
        %v1489 = vmul.f32 %v1481, %v1481
        %v1490 = vmul.f32 %v1482, %v1482
        %v1491 = vmul.f32 %v1483, %v1483
        %v1492 = vmul.f32 %v1484, %v854
        %v1493 = vmul.f32 %v1485, %v859
        %v1494 = vmul.f32 %v1486, %v864
        %v1495 = vmul.f32 %v1487, %v869
        %v1496 = vmul.f32 %v1488, %v874
        %v1497 = vmul.f32 %v1489, %v879
        %v1498 = vmul.f32 %v1490, %v884
        %v1499 = vmul.f32 %v1491, %v889
        %v1500 = vrot.slane %v1492, 4
        %v1501 = vadd.f32 %v1492, %v1500
        %v1502 = vrot.slane %v1501, 2
        %v1503 = vadd.f32 %v1501, %v1502
        %v1504 = vrot.slane %v1503, 1
        %v1505 = vadd.f32 %v1503, %v1504
        %v1506 = vrot.slane %v1493, 4
        %v1507 = vadd.f32 %v1493, %v1506
        %v1508 = vrot.slane %v1507, 2
        %v1509 = vadd.f32 %v1507, %v1508
        %v1510 = vrot.slane %v1509, 1
        %v1511 = vadd.f32 %v1509, %v1510
        %v1512 = vrot.slane %v1494, 4
        %v1513 = vadd.f32 %v1494, %v1512
        %v1514 = vrot.slane %v1513, 2
        %v1515 = vadd.f32 %v1513, %v1514
        %v1516 = vrot.slane %v1515, 1
        %v1517 = vadd.f32 %v1515, %v1516
        %v1518 = vrot.slane %v1495, 4
        %v1519 = vadd.f32 %v1495, %v1518
        %v1520 = vrot.slane %v1519, 2
        %v1521 = vadd.f32 %v1519, %v1520
        %v1522 = vrot.slane %v1521, 1
        %v1523 = vadd.f32 %v1521, %v1522
        %v1524 = vrot.slane %v1496, 4
        %v1525 = vadd.f32 %v1496, %v1524
        %v1526 = vrot.slane %v1525, 2
        %v1527 = vadd.f32 %v1525, %v1526
        %v1528 = vrot.slane %v1527, 1
        %v1529 = vadd.f32 %v1527, %v1528
        %v1530 = vrot.slane %v1497, 4
        %v1531 = vadd.f32 %v1497, %v1530
        %v1532 = vrot.slane %v1531, 2
        %v1533 = vadd.f32 %v1531, %v1532
        %v1534 = vrot.slane %v1533, 1
        %v1535 = vadd.f32 %v1533, %v1534
        %v1536 = vrot.slane %v1498, 4
        %v1537 = vadd.f32 %v1498, %v1536
        %v1538 = vrot.slane %v1537, 2
        %v1539 = vadd.f32 %v1537, %v1538
        %v1540 = vrot.slane %v1539, 1
        %v1541 = vadd.f32 %v1539, %v1540
        %v1542 = vrot.slane %v1499, 4
        %v1543 = vadd.f32 %v1499, %v1542
        %v1544 = vrot.slane %v1543, 2
        %v1545 = vadd.f32 %v1543, %v1544
        %v1546 = vrot.slane %v1545, 1
        %v1547 = vadd.f32 %v1545, %v1546
        %v1548 = vmul.f32 %v1505, %v954
        %v1549 = vmul.f32 %v1511, %v962
        %v1550 = vmul.f32 %v1517, %v970
        %v1551 = vmul.f32 %v1523, %v978
        %v1552 = vmul.f32 %v1529, %v986
        %v1553 = vmul.f32 %v1535, %v994
        %v1554 = vmul.f32 %v1541, %v1002
        %v1555 = vmul.f32 %v1547, %v1010
        %v1556 = vadd.f32 %v1548, 1e-06
        %v1557 = vadd.f32 %v1549, 1e-06
        %v1558 = vadd.f32 %v1550, 1e-06
        %v1559 = vadd.f32 %v1551, 1e-06
        %v1560 = vadd.f32 %v1552, 1e-06
        %v1561 = vadd.f32 %v1553, 1e-06
        %v1562 = vadd.f32 %v1554, 1e-06
        %v1563 = vadd.f32 %v1555, 1e-06
        %v1564 = vrsqrt.pop %v1556
        %v1565 = vrsqrt.pop %v1557
        %v1566 = vrsqrt.pop %v1558
        %v1567 = vrsqrt.pop %v1559
        %v1568 = vrsqrt.pop %v1560
        %v1569 = vrsqrt.pop %v1561
        %v1570 = vrsqrt.pop %v1562
        %v1571 = vrsqrt.pop %v1563
        %v1572 = vmul.f32 %v1258, %v1564
        %v1573 = vmul.f32 %v1258, %v1565
        %v1574 = vmul.f32 %v1258, %v1566
        %v1575 = vmul.f32 %v1258, %v1567
        %v1576 = vmul.f32 %v1258, %v1568
        %v1577 = vmul.f32 %v1258, %v1569
        %v1578 = vmul.f32 %v1258, %v1570
        %v1579 = vmul.f32 %v1258, %v1571
        %v1588 = vlaneseq
        %v1589 = vshrl.u32 %v1588, 7
        %v1590 = vsub.s32 0, %v1589
        %v1591 = vrot.slane %v1572, %v1590
        %v1592 = vlaneseq
        %v1593 = vshrl.u32 %v1592, 7
        %v1594 = vsub.s32 0, %v1593
        %v1595 = vrot.slane %v1573, %v1594
        %v1596 = vlaneseq
        %v1597 = vshrl.u32 %v1596, 7
        %v1598 = vsub.s32 0, %v1597
        %v1599 = vrot.slane %v1574, %v1598
        %v1600 = vlaneseq
        %v1601 = vshrl.u32 %v1600, 7
        %v1602 = vsub.s32 0, %v1601
        %v1603 = vrot.slane %v1575, %v1602
        %v1604 = vlaneseq
        %v1605 = vshrl.u32 %v1604, 7
        %v1606 = vsub.s32 0, %v1605
        %v1607 = vrot.slane %v1576, %v1606
        %v1608 = vlaneseq
        %v1609 = vshrl.u32 %v1608, 7
        %v1610 = vsub.s32 0, %v1609
        %v1611 = vrot.slane %v1577, %v1610
        %v1612 = vlaneseq
        %v1613 = vshrl.u32 %v1612, 7
        %v1614 = vsub.s32 0, %v1613
        %v1615 = vrot.slane %v1578, %v1614
        %v1616 = vlaneseq
        %v1617 = vshrl.u32 %v1616, 7
        %v1618 = vsub.s32 0, %v1617
        %v1619 = vrot.slane %v1579, %v1618
        %v1628 = vmul.f32 %v1476, %v1591
        %v1629 = vmul.f32 %v1477, %v1595
        %v1630 = vmul.f32 %v1478, %v1599
        %v1631 = vmul.f32 %v1479, %v1603
        %v1632 = vmul.f32 %v1480, %v1607
        %v1633 = vmul.f32 %v1481, %v1611
        %v1634 = vmul.f32 %v1482, %v1615
        %v1635 = vmul.f32 %v1483, %v1619
        %v1637 = vlaneseq
        %v1638 = vshrl.u32 %v1637, 7
        %v1639 = vsub.s32 0, %v1638
        %v1640 = vrot.slane %v1259, %v1639
        %v1642 = vadd.f32 %v1628, %v1640
        %v1643 = vadd.f32 %v1629, %v1640
        %v1644 = vadd.f32 %v1630, %v1640
        %v1645 = vadd.f32 %v1631, %v1640
        %v1646 = vadd.f32 %v1632, %v1640
        %v1647 = vadd.f32 %v1633, %v1640
        %v1648 = vadd.f32 %v1634, %v1640
        %v1649 = vadd.f32 %v1635, %v1640
        %v1650 = vmax.f32 %v1642, 0.0
        %v1651 = vmax.f32 %v1643, 0.0
        %v1652 = vmax.f32 %v1644, 0.0
        %v1653 = vmax.f32 %v1645, 0.0
        %v1654 = vmax.f32 %v1646, 0.0
        %v1655 = vmax.f32 %v1647, 0.0
        %v1656 = vmax.f32 %v1648, 0.0
        %v1657 = vmax.f32 %v1649, 0.0
        %v1658 = vld [vmem:[#allocation8] sm:$0xff]
        %v1659 = vld [vmem:[#allocation8 + $0x8] sm:$0xff]
        %v1660 = vld [vmem:[#allocation8 + $0x10] sm:$0xff]
        %v1661 = vld [vmem:[#allocation8 + $0x18] sm:$0xff]
        %v1662 = vld [vmem:[#allocation8 + $0x20] sm:$0xff]
        %v1663 = vld [vmem:[#allocation8 + $0x28] sm:$0xff]
        %v1664 = vld [vmem:[#allocation8 + $0x30] sm:$0xff]
        %v1665 = vld [vmem:[#allocation8 + $0x38] sm:$0xff]
        %v1666 = vld [vmem:[#allocation8 + $0x40] sm:$0xff]
        %v1667 = vld [vmem:[#allocation8 + $0x48] sm:$0xff]
        %v1668 = vld [vmem:[#allocation8 + $0x50] sm:$0xff]
        %v1669 = vld [vmem:[#allocation8 + $0x58] sm:$0xff]
        %v1670 = vld [vmem:[#allocation8 + $0x60] sm:$0xff]
        %v1671 = vld [vmem:[#allocation8 + $0x68] sm:$0xff]
        %v1672 = vld [vmem:[#allocation8 + $0x70] sm:$0xff]
        %v1673 = vld [vmem:[#allocation8 + $0x78] sm:$0xff]
        %v1674 = vld [vmem:[%s13] sm:$0x1]
        %v1676 = vlaneseq
        %v1677 = vshrl.u32 %v1676, 7
        %v1678 = vsub.s32 0, %v1677
        %v1679 = vrot.slane %v1674, %v1678
        %1681 = vmatprep.subr.mxu0 0.0
        %1682 = vmatpush1.msra.mxu0 %v1658
        %1683 = vmatprep.subr.mxu0 0.0
        %1684 = vmatpush1.msra.mxu0 %v1659
        %1685 = vmatprep.subr.mxu0 0.0
        %1686 = vmatpush1.msra.mxu0 %v1660
        %1687 = vmatprep.subr.mxu0 0.0
        %1688 = vmatpush1.msra.mxu0 %v1661
        %1689 = vmatprep.subr.mxu0 0.0
        %1690 = vmatpush1.msra.mxu0 %v1662
        %1691 = vmatprep.subr.mxu0 0.0
        %1692 = vmatpush1.msra.mxu0 %v1663
        %1693 = vmatprep.subr.mxu0 0.0
        %1694 = vmatpush1.msra.mxu0 %v1664
        %1695 = vmatprep.subr.mxu0 0.0
        %1696 = vmatpush1.msra.mxu0 %v1665
        %1697 = vmatprep.subr.mxu0 0.0
        %1698 = vmatpush1.msra.mxu0 %v1666
        %1699 = vmatprep.subr.mxu0 0.0
        %1700 = vmatpush1.msra.mxu0 %v1667
        %1701 = vmatprep.subr.mxu0 0.0
        %1702 = vmatpush1.msra.mxu0 %v1668
        %1703 = vmatprep.subr.mxu0 0.0
        %1704 = vmatpush1.msra.mxu0 %v1669
        %1705 = vmatprep.subr.mxu0 0.0
        %1706 = vmatpush1.msra.mxu0 %v1670
        %1707 = vmatprep.subr.mxu0 0.0
        %1708 = vmatpush1.msra.mxu0 %v1671
        %1709 = vmatprep.subr.mxu0 0.0
        %1710 = vmatpush1.msra.mxu0 %v1672
        %1711 = vmatprep.subr.mxu0 0.0
        %1712 = vmatpush1.msra.mxu0 %v1673
        %1713 = vmatprep.subr.mxu0 0.0
        %1714 = vmatpush1.msra.mxu0 0.0
        %1715 = vmatprep.subr.mxu0 0.0
        %1716 = vmatpush1.msra.mxu0 0.0
        %1717 = vmatprep.subr.mxu0 0.0
        %1718 = vmatpush1.msra.mxu0 0.0
        %1719 = vmatprep.subr.mxu0 0.0
        %1720 = vmatpush1.msra.mxu0 0.0
        %1721 = vmatprep.subr.mxu0 0.0
        %1722 = vmatpush1.msra.mxu0 0.0
        %1723 = vmatprep.subr.mxu0 0.0
        %1724 = vmatpush1.msra.mxu0 0.0
        %1725 = vmatprep.subr.mxu0 0.0
        %1726 = vmatpush1.msra.mxu0 0.0
        %1727 = vmatprep.subr.mxu0 0.0
        %1728 = vmatpush1.msra.mxu0 0.0
        %1729 = vmatprep.subr.mxu0 0.0
        %1730 = vmatpush1.msra.mxu0 0.0
        %1731 = vmatprep.subr.mxu0 0.0
        %1732 = vmatpush1.msra.mxu0 0.0
        %1733 = vmatprep.subr.mxu0 0.0
        %1734 = vmatpush1.msra.mxu0 0.0
        %1735 = vmatprep.subr.mxu0 0.0
        %1736 = vmatpush1.msra.mxu0 0.0
        %1737 = vmatprep.subr.mxu0 0.0
        %1738 = vmatpush1.msra.mxu0 0.0
        %1739 = vmatprep.subr.mxu0 0.0
        %1740 = vmatpush1.msra.mxu0 0.0
        %1741 = vmatprep.subr.mxu0 0.0
        %1742 = vmatpush1.msra.mxu0 0.0
        %1743 = vmatprep.subr.mxu0 0.0
        %1744 = vmatpush1.msra.mxu0 0.0
        %1745 = vmatprep.mubr.f32.mxu0 0.0
        %1746 = vmatmul.mubr.f32.gmra.mrb[0].mxu0 %v1650
        %v1747 = vpop.f32.mrb[0].mxu0
        %v1748 = vadd.f32 %v1679, %v1747
        %v1749 = vpop.f32.mrb[0].mxu0
        %1750 = vmatprep.mubr.f32.mxu0 0.0
        %1751 = vmatmul.mubr.f32.gmra.mrb[0].mxu0 %v1651
        %v1752 = vpop.f32.mrb[0].mxu0
        %v1753 = vadd.f32 %v1679, %v1752
        %v1754 = vpop.f32.mrb[0].mxu0
        %1755 = vmatprep.mubr.f32.mxu0 0.0
        %1756 = vmatmul.mubr.f32.gmra.mrb[0].mxu0 %v1652
        %v1757 = vpop.f32.mrb[0].mxu0
        %v1758 = vadd.f32 %v1679, %v1757
        %v1759 = vpop.f32.mrb[0].mxu0
        %1760 = vmatprep.mubr.f32.mxu0 0.0
        %1761 = vmatmul.mubr.f32.gmra.mrb[0].mxu0 %v1653
        %v1762 = vpop.f32.mrb[0].mxu0
        %v1763 = vadd.f32 %v1679, %v1762
        %v1764 = vpop.f32.mrb[0].mxu0
        %1765 = vmatprep.mubr.f32.mxu0 0.0
        %1766 = vmatmul.mubr.f32.gmra.mrb[0].mxu0 %v1654
        %v1767 = vpop.f32.mrb[0].mxu0
        %v1768 = vadd.f32 %v1679, %v1767
        %v1769 = vpop.f32.mrb[0].mxu0
        %1770 = vmatprep.mubr.f32.mxu0 0.0
        %1771 = vmatmul.mubr.f32.gmra.mrb[0].mxu0 %v1655
        %v1772 = vpop.f32.mrb[0].mxu0
        %v1773 = vadd.f32 %v1679, %v1772
        %v1774 = vpop.f32.mrb[0].mxu0
        %1775 = vmatprep.mubr.f32.mxu0 0.0
        %1776 = vmatmul.mubr.f32.gmra.mrb[0].mxu0 %v1656
        %v1777 = vpop.f32.mrb[0].mxu0
        %v1778 = vadd.f32 %v1679, %v1777
        %v1779 = vpop.f32.mrb[0].mxu0
        %1780 = vmatprep.mubr.f32.mxu0 0.0
        %1781 = vmatmul.mubr.f32.gmra.mrb[0].mxu0 %v1657
        %v1782 = vpop.f32.mrb[0].mxu0
        %v1783 = vadd.f32 %v1679, %v1782
        %v1784 = vpop.f32.mrb[0].mxu0
        %1785 = vdwg.mxu0
        %1786 = vst [vmem:[%s542] sm:$0xff] %v1748
        %1787 = vst [vmem:[%s542 + $0x8] sm:$0xff] %v1753
        %1788 = vst [vmem:[%s542 + $0x10] sm:$0xff] %v1758
        %1789 = vst [vmem:[%s542 + $0x18] sm:$0xff] %v1763
        %1790 = vst [vmem:[%s542 + $0x20] sm:$0xff] %v1768
        %1791 = vst [vmem:[%s542 + $0x28] sm:$0xff] %v1773
        %1792 = vst [vmem:[%s542 + $0x30] sm:$0xff] %v1778
        %1793 = vst [vmem:[%s542 + $0x38] sm:$0xff] %v1783
        %s1794 = sand.u32 %s345, 1
        %s1795 = scalar_lea.sflag [#allocation4], %s1794
        %s1796 = sand.u32 %s345, 1
        %s1797 = smul.addr %s1796, 64
        %s1798 = scalar_lea.vmem [#allocation10], %s1797
        // Predicated region
        $region93: #{tpu_custom_call.1} parent=75 // pred_check
          %p1799 = pneg %p355
        $region94: #{tpu_custom_call.1} parent=75 // pred_check_branch
          %1801 = sbr.rel (%p1799) target = $region96
        $region95: #{tpu_custom_call.1} parent=75 // pred_region
          %s1802 = smul.u32 8, %s33
          %s1804 = ssub.s32 1024, 1024
          %1805 = vsyncadd %s1795, %s1804
          %s1806 = smul.addr %s1802, 128
          %s1807 = scalar_lea.hbm %s14, %s1806
          %s1808 = sshll.u32 %s1798, 4
          %s1809 = int_to_ptr.vmem [resolvable:$true] %s1808
          %1814 = dma.vmem_to_hbm [thread:$0]  %s1809, 1024, %s1807, %s1795, 128, 128, 8
        $region96: #{tpu_custom_call.1} parent=75 // pred_fallthru
          _
      $region76: #{tpu_custom_call.1} parent=5 // pred_fallthru
        _
      %p1815 = scmp.le.s32.totalorder 2, %s28
      // Predicated region
      $region97: #{tpu_custom_call.1} parent=5 // pred_check
        %p1816 = pneg %p1815
      $region98: #{tpu_custom_call.1} parent=5 // pred_check_branch
        %1818 = sbr.rel (%p1816) target = $region100
      $region99: #{tpu_custom_call.1} parent=5 // pred_region
        %s1819 = ssub.s32 %s28, 2
        // Predicated region
        $region101: #{tpu_custom_call.1} parent=99 // pred_check
          %p1820 = pneg %p361
        $region102: #{tpu_custom_call.1} parent=99 // pred_check_branch
          %1822 = sbr.rel (%p1820) target = $region104
        $region103: #{tpu_custom_call.1} parent=99 // pred_region
          %s1823 = sand.u32 %s346, 1
          %s1824 = scalar_lea.sflag [#allocation4], %s1823
          %s1825 = sand.u32 %s346, 1
          %s1826 = smul.addr %s1825, 64
          %s1827 = scalar_lea.vmem [#allocation10], %s1826
          %1828 = dma.done %s1824, 1024
        $region104: #{tpu_custom_call.1} parent=99 // pred_fallthru
          _
      $region100: #{tpu_custom_call.1} parent=5 // pred_fallthru
        _
    $region6: #{tpu_custom_call.1} parent=1 // loop_footer
      %s32 = sadd.s32 1, %s28
    $region7: #{tpu_custom_call.1} parent=1 // loop_footer_branch
      %27 = sbr.rel target = $region3
    $region8: #{tpu_custom_call.1} parent=1 // loop_exit
      _
    %1829 = vsyncpa [#allocation3], 1
    %s1830 = scalar_lea.sflag [#allocation3], 1
    %1831 = vsyncpa %s1830, 1
    %1832 = vsyncpa [#allocation6], 1
    %1833 = vsyncpa [#allocation9], 1
    %1834 = vsyncpa [#allocation4], 1
    %s1835 = scalar_lea.sflag [#allocation4], 1
    %1836 = vsyncpa %s1835, 1

</llo_original>
